<compile_context>
chip_gen: v7x
topology: tpu7x:2x2x1
jax: 0.10.0
libtpu: 0.0.40
codegen_flags: <defaults>
</compile_context>

<pallas_src>
import functools
import math

import jax
import jax.numpy as jnp
import numpy as np
from jax.experimental import pallas as pl
from jax.experimental.pallas import tpu as pltpu


def _layer_norm(z, g, b, eps=1e-5):
    # two-pass (mean, then centered variance): robust when |mean| >> std
    mu = jnp.mean(z, axis=-1, keepdims=True)
    zc = z - mu
    var = jnp.mean(zc * zc, axis=-1, keepdims=True)
    return zc * jax.lax.rsqrt(var + eps) * g + b


def taggregate_kernel(x_ref, cls_ref, pos_ref, wqkv_ref, wout_ref,
                      w1_ref, w2_ref, pk_ref, lnf_ref, o_ref, xs, *, nhead):
    l = pl.program_id(1)

    bt, T, D = x_ref.shape                        # batch tile, frames, embed
    S = T + 1
    M = bt * S
    hd = D // nhead
    F = w1_ref.shape[2]
    scale = 1.0 / math.sqrt(hd)

    # ---- fused CLS prepend + positional embedding (once per batch tile) ----
    @pl.when(l == 0)
    def _():
        cls = jnp.broadcast_to(cls_ref[...], (bt, 1, D))
        x0 = jnp.concatenate([cls, x_ref[...]], axis=1) + pos_ref[...]
        xs[...] = x0.reshape(M, D).astype(jnp.float32)

    x = xs[...]                                   # (M, D) f32, VMEM resident

    # packed per-layer 1-D params: a single small DMA per layer
    pk = pk_ref[0]                                # (8, PAD) f32
    bqkv = pk[0:1, :3 * D]
    bout = pk[1:2, :D]
    ln1g, ln1b = pk[2:3, :D], pk[3:4, :D]
    b1 = pk[4:5, :F]
    b2 = pk[5:6, :D]
    ln2g, ln2b = pk[6:7, :D], pk[7:8, :D]

    # ---- fused QKV projection on the flattened (M, D) slab ----
    xb = x.astype(jnp.bfloat16)
    qkv = jnp.dot(xb, wqkv_ref[0],
                  preferred_element_type=jnp.float32) + bqkv        # (M, 3D)
    qkvb = qkv.reshape(bt, S, 3 * D).astype(jnp.bfloat16)

    # ---- multi-head self-attention (bf16 MXU inputs, f32 accum/softmax) ----
    ctx_heads = []
    for h in range(nhead):                        # static unroll over heads
        qh = qkvb[:, :, h * hd:(h + 1) * hd]                     # (bt, S, hd)
        kh = qkvb[:, :, D + h * hd:D + (h + 1) * hd]
        vh = qkvb[:, :, 2 * D + h * hd:2 * D + (h + 1) * hd]
        s = jnp.einsum('bqd,bkd->bqk', qh, kh,
                       preferred_element_type=jnp.float32) * scale
        s = s - jnp.max(s, axis=-1, keepdims=True)
        p = jnp.exp(s)
        p = p * pl.reciprocal(jnp.sum(p, axis=-1, keepdims=True), approx=True)
        ctx_heads.append(jnp.einsum('bqk,bkd->bqd', p.astype(jnp.bfloat16),
                                    vh, preferred_element_type=jnp.float32))

    # recombine heads once, then ONE (M,D)x(D,D) output projection (K = D)
    ctx = jnp.concatenate(ctx_heads, axis=-1).reshape(M, D)         # (M, D)
    attn = jnp.dot(ctx.astype(jnp.bfloat16), wout_ref[0],
                   preferred_element_type=jnp.float32) + bout

    # ---- residual + LayerNorm 1 (post-norm) ----
    x1 = _layer_norm(x + attn, ln1g, ln1b)

    # ---- FFN (Linear -> ReLU -> Linear) + residual + LayerNorm 2 ----
    h1 = jnp.dot(x1.astype(jnp.bfloat16), w1_ref[0],
                 preferred_element_type=jnp.float32) + b1
    h1 = jnp.maximum(h1, 0.0)
    y = jnp.dot(h1.astype(jnp.bfloat16), w2_ref[0],
                preferred_element_type=jnp.float32) + b2
    x2 = _layer_norm(x1 + y, ln2g, ln2b)

    xs[...] = x2

    # ---- final encoder LayerNorm on the CLS rows only (lane-dense store) ----
    @pl.when(l == pl.num_programs(1) - 1)
    def _():
        lnf = lnf_ref[...]                        # (2, D) f32
        cls_rows = x2.reshape(bt, S, D)[:, 0, :]  # (bt, D)
        cls_out = _layer_norm(cls_rows, lnf[0:1, :], lnf[1:2, :])
        dp = o_ref.shape[-1]
        if dp > D:   # static: pad to a 128-lane multiple -> unmasked store
            cls_out = jnp.concatenate(
                [cls_out, jnp.zeros((bt, dp - D), cls_out.dtype)], axis=-1)
        o_ref[0] = cls_out.astype(o_ref.dtype)


def taggregate_forward(x, params, *, nhead=8, b_tile=None):
    """x: (B, clip_length, D) -> (B, D).  CLS prepend + pos-embed fused in-kernel."""
    B, T, D = x.shape
    S = T + 1
    L = params['wqkv'].shape[0]
    F = params['w1'].shape[1]
    assert D % nhead == 0, "embed_dim must be divisible by nhead"

    if b_tile is None:
        # Target M = b_tile * S ~ 128 rows per grid step: fills the MXU M dim
        # and divides per-layer weight DMA by b_tile.  (On v7x one may cap
        # b_tile so the 'parallel' batch axis stays >= 2 wide for both TCs.)
        b_tile = max(1, min(B, 128 // S))
    nb = -(-B // b_tile)
    b_pad = nb * b_tile
    if b_pad != B:
        x = jnp.pad(x, ((0, b_pad - B), (0, 0), (0, 0)))

    dp = ((D + 127) // 128) * 128                 # lane-dense output width
    pad = ((max(3 * D, F) + 127) // 128) * 128    # packed small-vector width

    def row(v):                                   # (L, n) -> (L, 1, pad)
        return jnp.pad(v, ((0, 0), (0, pad - v.shape[-1])))[:, None, :]

    packed = jnp.concatenate([
        row(params['bqkv']),                      # fused q/k/v bias (3D,)
        row(params['bout']),
        row(params['ln1g']), row(params['ln1b']),
        row(params['b1']), row(params['b2']),
        row(params['ln2g']), row(params['ln2b']),
    ], axis=1).astype(jnp.float32)                # (L, 8, pad)
    NP = packed.shape[1]

    lnf = jnp.concatenate([params['lnfg'], params['lnfb']],
                          axis=0).astype(jnp.float32)              # (2, D)

    # Pre-transposed bf16 weight transport (halves HBM->VMEM traffic); all
    # matmuls accumulate in f32 via preferred_element_type.
    wqkv = jnp.transpose(params['wqkv'], (0, 2, 1)).astype(jnp.bfloat16)  # (L,D,3D)
    wout = jnp.transpose(params['wout'], (0, 2, 1)).astype(jnp.bfloat16)  # (L,D,D)
    w1 = jnp.transpose(params['w1'], (0, 2, 1)).astype(jnp.bfloat16)      # (L,D,F)
    w2 = jnp.transpose(params['w2'], (0, 2, 1)).astype(jnp.bfloat16)      # (L,F,D)

    kern = functools.partial(taggregate_kernel, nhead=nhead)

    grid_spec = pltpu.PrefetchScalarGridSpec(
        num_scalar_prefetch=0,
        grid=(nb, L),    # batch tiles parallel, layers sequential
        in_specs=[
            pl.BlockSpec((b_tile, T, D), lambda b, l: (b, 0, 0)),   # raw frames
            pl.BlockSpec((1, 1, D), lambda b, l: (0, 0, 0)),        # cls token
            pl.BlockSpec((1, S, D), lambda b, l: (0, 0, 0)),        # pos embed
            pl.BlockSpec((1, D, 3 * D), lambda b, l: (l, 0, 0)),    # fused Wqkv^T (bf16)
            pl.BlockSpec((1, D, D), lambda b, l: (l, 0, 0)),        # Wout^T (bf16)
            pl.BlockSpec((1, D, F), lambda b, l: (l, 0, 0)),        # FFN W1^T (bf16)
            pl.BlockSpec((1, F, D), lambda b, l: (l, 0, 0)),        # FFN W2^T (bf16)
            pl.BlockSpec((1, NP, pad), lambda b, l: (l, 0, 0)),     # packed vectors
            pl.BlockSpec((2, D), lambda b, l: (0, 0)),              # final LN g/b
        ],
        out_specs=pl.BlockSpec((1, b_tile, dp), lambda b, l: (b, 0, 0)),
        scratch_shapes=[pltpu.VMEM((b_tile * S, D), jnp.float32)],
    )

    out = pl.pallas_call(
        kern,
        out_shape=jax.ShapeDtypeStruct((nb, b_tile, dp), x.dtype),
        grid_spec=grid_spec,
        compiler_params=pltpu.CompilerParams(
            dimension_semantics=("parallel", "arbitrary")),
    )(x, params['cls_token'], params['pos_embed'],
      wqkv, wout, w1, w2, packed, lnf)
    return out.reshape(b_pad, dp)[:B, :D]


def make_params(key, *, clip_length, D, L, F):
    """Deterministic synthetic params with TAggregate.__init__ shapes.

    PyTorch's init zeroes the biases / LN betas; here they are small nonzero
    values so the kernel's bias and LayerNorm affine paths are exercised.
    """
    ks = jax.random.split(key, 16)

    def tn(k, shape, std=0.02):   # trunc_normal_: normal().fmod_(2).mul_(std)
        return (jnp.fmod(jax.random.normal(k, shape), 2.0) * std).astype(jnp.float32)

    def tnq(k, shape, std=0.02):  # bf16-representable (kernel moves these in bf16)
        return tn(k, shape, std).astype(jnp.bfloat16).astype(jnp.float32)

    return dict(
        cls_token=tn(ks[0], (1, 1, D)),
        pos_embed=tn(ks[1], (1, clip_length + 1, D)),
        wqkv=tnq(ks[2], (L, 3 * D, D)),
        bqkv=tn(ks[3], (L, 3 * D)),
        wout=tnq(ks[4], (L, D, D)),
        bout=tn(ks[5], (L, D)),
        ln1g=1.0 + tn(ks[6], (L, D)),
        ln1b=tn(ks[7], (L, D)),
        w1=tnq(ks[8], (L, F, D)),
        b1=tn(ks[9], (L, F)),
        w2=tnq(ks[10], (L, D, F)),
        b2=tn(ks[11], (L, D)),
        ln2g=1.0 + tn(ks[12], (L, D)),
        ln2b=tn(ks[13], (L, D)),
        lnfg=1.0 + tn(ks[14], (1, D)),
        lnfb=tn(ks[15], (1, D)),
    )


def reference_forward(x, params, *, nhead=8):
    """Pure-JAX f32 reference mirroring PyTorch TransformerEncoder (eval) math."""
    B, T, D = x.shape
    hd = D // nhead
    cls = jnp.broadcast_to(params['cls_token'], (B, 1, D))
    h = jnp.concatenate([cls, x], axis=1) + params['pos_embed']
    L = params['wqkv'].shape[0]

    def ln(z, g, b):
        mu = z.mean(-1, keepdims=True)
        var = ((z - mu) ** 2).mean(-1, keepdims=True)
        return (z - mu) / jnp.sqrt(var + 1e-5) * g + b

    for l in range(L):
        qkv = h @ params['wqkv'][l].T + params['bqkv'][l]
        q, k, v = jnp.split(qkv, 3, axis=-1)
        S = q.shape[1]
        qh = q.reshape(B, S, nhead, hd).transpose(0, 2, 1, 3)
        kh = k.reshape(B, S, nhead, hd).transpose(0, 2, 1, 3)
        vh = v.reshape(B, S, nhead, hd).transpose(0, 2, 1, 3)
        s = jnp.einsum('bhqd,bhkd->bhqk', qh, kh) / math.sqrt(hd)
        p = jax.nn.softmax(s, axis=-1)
        a = jnp.einsum('bhqk,bhkd->bhqd', p, vh).transpose(0, 2, 1, 3).reshape(B, S, D)
        a = a @ params['wout'][l].T + params['bout'][l]
        h = ln(h + a, params['ln1g'][l], params['ln1b'][l])
        f = jax.nn.relu(h @ params['w1'][l].T + params['b1'][l])
        f = f @ params['w2'][l].T + params['b2'][l]
        h = ln(h + f, params['ln2g'][l], params['ln2b'][l])
    h = ln(h, params['lnfg'][0], params['lnfb'][0])
    return h[:, 0, :]


if __name__ == "__main__":
    # Small shapes consistent with the module: B=2, clip_length=8, embed_dim=64,
    # nhead=8, n_layers=2, dim_feedforward=128.
    B, CLIP_LEN, D, NHEAD, NLAYERS, FFN = 2, 8, 64, 8, 2, 128

    key = jax.random.PRNGKey(0)
    kx, kp = jax.random.split(key)
    x = jax.random.normal(kx, (B, CLIP_LEN, D), dtype=jnp.float32)
    params = make_params(kp, clip_length=CLIP_LEN, D=D, L=NLAYERS, F=FFN)

    out = jax.block_until_ready(taggregate_forward(x, params, nhead=NHEAD))
    ref = jax.block_until_ready(reference_forward(x, params, nhead=NHEAD))

    # Tolerance accounts for bf16 MXU operands (f32 accumulation) and the
    # approximate-reciprocal softmax versus the pure-f32 reference.
    np.testing.assert_allclose(np.asarray(out), np.asarray(ref),
                               rtol=1e-2, atol=1e-2)
    assert out.shape == (B, D)
    print("KERNEL_OK")
</pallas_src>

<mosaic_0001>
module attributes {stable_mosaic.version = 11 : i64} {
  func.func @taggregate_kernel(%arg0: i32, %arg1: i32, %arg2: memref<2x8x64xf32, #tpu.memory_space<vmem>>, %arg3: memref<1x1x64xf32, #tpu.memory_space<vmem>>, %arg4: memref<1x9x64xf32, #tpu.memory_space<vmem>>, %arg5: memref<1x64x192xbf16, #tpu.memory_space<vmem>>, %arg6: memref<1x64x64xbf16, #tpu.memory_space<vmem>>, %arg7: memref<1x64x128xbf16, #tpu.memory_space<vmem>>, %arg8: memref<1x128x64xbf16, #tpu.memory_space<vmem>>, %arg9: memref<1x8x256xf32, #tpu.memory_space<vmem>>, %arg10: memref<2x64xf32, #tpu.memory_space<vmem>>, %arg11: memref<1x2x128xf32, #tpu.memory_space<vmem>>, %arg12: memref<18x64xf32, #tpu.memory_space<vmem>>) attributes {dimension_semantics = [#tpu.dimension_semantics<parallel>, #tpu.dimension_semantics<arbitrary>], iteration_bounds = array<i64: 1, 2>, scalar_prefetch = 0 : i64, scratch_operands = 1 : i64, tpu.core_type = #tpu.core_type<tc>, window_params = [{transform_indices = @transform_0, window_bounds = array<i64: 2, 8, 64>}, {pipeline_mode = #tpu.pipeline_mode<synchronous>, transform_indices = @transform_1, window_bounds = array<i64: 1, 1, 64>}, {pipeline_mode = #tpu.pipeline_mode<synchronous>, transform_indices = @transform_2, window_bounds = array<i64: 1, 9, 64>}, {transform_indices = @transform_3, window_bounds = array<i64: 1, 64, 192>}, {transform_indices = @transform_4, window_bounds = array<i64: 1, 64, 64>}, {transform_indices = @transform_5, window_bounds = array<i64: 1, 64, 128>}, {transform_indices = @transform_6, window_bounds = array<i64: 1, 128, 64>}, {transform_indices = @transform_7, window_bounds = array<i64: 1, 8, 256>}, {pipeline_mode = #tpu.pipeline_mode<synchronous>, transform_indices = @transform_8, window_bounds = array<i64: 2, 64>}, {transform_indices = @transform_9, window_bounds = array<i64: 1, 2, 128>}]} {
    %c0_i32 = arith.constant 0 : i32
    %0 = arith.cmpi eq, %arg1, %c0_i32 : i32
    %1 = arith.extui %0 : i1 to i32
    %c0_i32_0 = arith.constant 0 : i32
    %2 = arith.cmpi ne, %1, %c0_i32_0 : i32
    scf.if %2 {
      %c0_74 = arith.constant 0 : index
      %c0_75 = arith.constant 0 : index
      %c0_76 = arith.constant 0 : index
      %234 = vector.load %arg3[%c0_74, %c0_75, %c0_76] : memref<1x1x64xf32, #tpu.memory_space<vmem>>, vector<1x1x64xf32>
      %235 = vector.shape_cast %234 : vector<1x1x64xf32> to vector<1x1x64xf32>
      %236 = vector.broadcast %235 : vector<1x1x64xf32> to vector<2x1x64xf32>
      %c0_77 = arith.constant 0 : index
      %c0_78 = arith.constant 0 : index
      %c0_79 = arith.constant 0 : index
      %237 = vector.load %arg2[%c0_77, %c0_78, %c0_79] : memref<2x8x64xf32, #tpu.memory_space<vmem>>, vector<2x8x64xf32>
      %238 = tpu.concatenate %236, %237 in 1 : vector<2x1x64xf32>, vector<2x8x64xf32> -> vector<2x9x64xf32>
      %c0_80 = arith.constant 0 : index
      %c0_81 = arith.constant 0 : index
      %c0_82 = arith.constant 0 : index
      %239 = vector.load %arg4[%c0_80, %c0_81, %c0_82] : memref<1x9x64xf32, #tpu.memory_space<vmem>>, vector<1x9x64xf32>
      %240 = vector.broadcast %239 : vector<1x9x64xf32> to vector<2x9x64xf32>
      %241 = arith.addf %238, %240 : vector<2x9x64xf32>
      %242 = vector.shape_cast %241 : vector<2x9x64xf32> to vector<18x64xf32>
      %c0_83 = arith.constant 0 : index
      %c0_84 = arith.constant 0 : index
      %243 = vector.load %arg12[%c0_83, %c0_84] : memref<18x64xf32, #tpu.memory_space<vmem>>, vector<18x64xf32>
      tpu.vector_store %arg12[%c0_83, %c0_84], %242 {strides = array<i32>} : memref<18x64xf32, #tpu.memory_space<vmem>>, vector<18x64xf32>,
    } else {
    }
    %c0 = arith.constant 0 : index
    %c0_1 = arith.constant 0 : index
    %3 = vector.load %arg12[%c0, %c0_1] : memref<18x64xf32, #tpu.memory_space<vmem>>, vector<18x64xf32>
    %c0_2 = arith.constant 0 : index
    %c0_3 = arith.constant 0 : index
    %c0_4 = arith.constant 0 : index
    %4 = vector.load %arg9[%c0_2, %c0_3, %c0_4] : memref<1x8x256xf32, #tpu.memory_space<vmem>>, vector<1x8x256xf32>
    %5 = vector.shape_cast %4 : vector<1x8x256xf32> to vector<8x256xf32>
    %6 = vector.extract_strided_slice %5 {offsets = [0, 0], sizes = [1, 192], strides = [1, 1]} : vector<8x256xf32> to vector<1x192xf32>
    %7 = vector.extract_strided_slice %5 {offsets = [1, 0], sizes = [1, 64], strides = [1, 1]} : vector<8x256xf32> to vector<1x64xf32>
    %8 = vector.extract_strided_slice %5 {offsets = [2, 0], sizes = [1, 64], strides = [1, 1]} : vector<8x256xf32> to vector<1x64xf32>
    %9 = vector.extract_strided_slice %5 {offsets = [3, 0], sizes = [1, 64], strides = [1, 1]} : vector<8x256xf32> to vector<1x64xf32>
    %10 = vector.extract_strided_slice %5 {offsets = [4, 0], sizes = [1, 128], strides = [1, 1]} : vector<8x256xf32> to vector<1x128xf32>
    %11 = vector.extract_strided_slice %5 {offsets = [5, 0], sizes = [1, 64], strides = [1, 1]} : vector<8x256xf32> to vector<1x64xf32>
    %12 = vector.extract_strided_slice %5 {offsets = [6, 0], sizes = [1, 64], strides = [1, 1]} : vector<8x256xf32> to vector<1x64xf32>
    %13 = vector.extract_strided_slice %5 {offsets = [7, 0], sizes = [1, 64], strides = [1, 1]} : vector<8x256xf32> to vector<1x64xf32>
    %14 = arith.truncf %3 : vector<18x64xf32> to vector<18x64xbf16>
    %c0_5 = arith.constant 0 : index
    %c0_6 = arith.constant 0 : index
    %c0_7 = arith.constant 0 : index
    %15 = vector.load %arg5[%c0_5, %c0_6, %c0_7] : memref<1x64x192xbf16, #tpu.memory_space<vmem>>, vector<1x64x192xbf16>
    %16 = vector.shape_cast %15 : vector<1x64x192xbf16> to vector<64x192xbf16>
    %cst = arith.constant dense<0.000000e+00> : vector<18x192xf32>
    %17 = tpu.matmul %14, %16, %cst {dimension_numbers = #tpu.dot_dimension_numbers<[1], [0], [0], [1], [0, 0, 1, 1], [], []>} : vector<18x64xbf16>, vector<64x192xbf16>, vector<18x192xf32> -> vector<18x192xf32>
    %18 = vector.broadcast %6 : vector<1x192xf32> to vector<18x192xf32>
    %19 = arith.addf %17, %18 : vector<18x192xf32>
    %20 = vector.shape_cast %19 : vector<18x192xf32> to vector<2x9x192xf32>
    %21 = arith.truncf %20 : vector<2x9x192xf32> to vector<2x9x192xbf16>
    %22 = vector.extract_strided_slice %21 {offsets = [0, 0, 0], sizes = [2, 9, 8], strides = [1, 1, 1]} : vector<2x9x192xbf16> to vector<2x9x8xbf16>
    %23 = vector.extract_strided_slice %21 {offsets = [0, 0, 64], sizes = [2, 9, 8], strides = [1, 1, 1]} : vector<2x9x192xbf16> to vector<2x9x8xbf16>
    %24 = vector.extract_strided_slice %21 {offsets = [0, 0, 128], sizes = [2, 9, 8], strides = [1, 1, 1]} : vector<2x9x192xbf16> to vector<2x9x8xbf16>
    "tpu.trace_start"() <{level = 10 : i32, message = "bqd,bkd->bqk"}> : () -> ()
    %cst_8 = arith.constant dense<0.000000e+00> : vector<2x9x9xf32>
    %25 = tpu.matmul %22, %23, %cst_8 {dimension_numbers = #tpu.dot_dimension_numbers<[2], [2], [1], [1], [0, 0, 0, 1, 1, 1], [0], [0]>} : vector<2x9x8xbf16>, vector<2x9x8xbf16>, vector<2x9x9xf32> -> vector<2x9x9xf32>
    "tpu.trace_stop"() : () -> ()
    %cst_9 = arith.constant 0.353553385 : f32
    %26 = vector.broadcast %cst_9 : f32 to vector<2x9x9xf32>
    %27 = arith.mulf %25, %26 : vector<2x9x9xf32>
    %cst_10 = arith.constant dense<0xFF800000> : vector<2x9xf32>
    %28 = vector.multi_reduction <maximumf>, %27, %cst_10 [2] : vector<2x9x9xf32> to vector<2x9xf32>
    %29 = vector.shape_cast %28 : vector<2x9xf32> to vector<2x9x1xf32>
    %30 = vector.broadcast %29 : vector<2x9x1xf32> to vector<2x9x9xf32>
    %31 = arith.subf %27, %30 : vector<2x9x9xf32>
    %32 = math.exp %31 : vector<2x9x9xf32>
    %cst_11 = arith.constant dense<0.000000e+00> : vector<2x9xf32>
    %33 = vector.multi_reduction <add>, %32, %cst_11 [2] : vector<2x9x9xf32> to vector<2x9xf32>
    %34 = vector.shape_cast %33 : vector<2x9xf32> to vector<2x9x1xf32>
    %35 = tpu.reciprocal %34 {approx = true} : vector<2x9x1xf32> -> vector<2x9x1xf32>
    %36 = vector.broadcast %35 : vector<2x9x1xf32> to vector<2x9x9xf32>
    %37 = arith.mulf %32, %36 : vector<2x9x9xf32>
    %38 = arith.truncf %37 : vector<2x9x9xf32> to vector<2x9x9xbf16>
    "tpu.trace_start"() <{level = 10 : i32, message = "bqk,bkd->bqd"}> : () -> ()
    %cst_12 = arith.constant dense<0.000000e+00> : vector<2x9x8xf32>
    %39 = tpu.matmul %38, %24, %cst_12 {dimension_numbers = #tpu.dot_dimension_numbers<[2], [1], [1], [2], [0, 0, 0, 1, 1, 2], [0], [0]>} : vector<2x9x9xbf16>, vector<2x9x8xbf16>, vector<2x9x8xf32> -> vector<2x9x8xf32>
    "tpu.trace_stop"() : () -> ()
    %40 = vector.extract_strided_slice %21 {offsets = [0, 0, 8], sizes = [2, 9, 8], strides = [1, 1, 1]} : vector<2x9x192xbf16> to vector<2x9x8xbf16>
    %41 = vector.extract_strided_slice %21 {offsets = [0, 0, 72], sizes = [2, 9, 8], strides = [1, 1, 1]} : vector<2x9x192xbf16> to vector<2x9x8xbf16>
    %42 = vector.extract_strided_slice %21 {offsets = [0, 0, 136], sizes = [2, 9, 8], strides = [1, 1, 1]} : vector<2x9x192xbf16> to vector<2x9x8xbf16>
    "tpu.trace_start"() <{level = 10 : i32, message = "bqd,bkd->bqk"}> : () -> ()
    %cst_13 = arith.constant dense<0.000000e+00> : vector<2x9x9xf32>
    %43 = tpu.matmul %40, %41, %cst_13 {dimension_numbers = #tpu.dot_dimension_numbers<[2], [2], [1], [1], [0, 0, 0, 1, 1, 1], [0], [0]>} : vector<2x9x8xbf16>, vector<2x9x8xbf16>, vector<2x9x9xf32> -> vector<2x9x9xf32>
    "tpu.trace_stop"() : () -> ()
    %cst_14 = arith.constant 0.353553385 : f32
    %44 = vector.broadcast %cst_14 : f32 to vector<2x9x9xf32>
    %45 = arith.mulf %43, %44 : vector<2x9x9xf32>
    %cst_15 = arith.constant dense<0xFF800000> : vector<2x9xf32>
    %46 = vector.multi_reduction <maximumf>, %45, %cst_15 [2] : vector<2x9x9xf32> to vector<2x9xf32>
    %47 = vector.shape_cast %46 : vector<2x9xf32> to vector<2x9x1xf32>
    %48 = vector.broadcast %47 : vector<2x9x1xf32> to vector<2x9x9xf32>
    %49 = arith.subf %45, %48 : vector<2x9x9xf32>
    %50 = math.exp %49 : vector<2x9x9xf32>
    %cst_16 = arith.constant dense<0.000000e+00> : vector<2x9xf32>
    %51 = vector.multi_reduction <add>, %50, %cst_16 [2] : vector<2x9x9xf32> to vector<2x9xf32>
    %52 = vector.shape_cast %51 : vector<2x9xf32> to vector<2x9x1xf32>
    %53 = tpu.reciprocal %52 {approx = true} : vector<2x9x1xf32> -> vector<2x9x1xf32>
    %54 = vector.broadcast %53 : vector<2x9x1xf32> to vector<2x9x9xf32>
    %55 = arith.mulf %50, %54 : vector<2x9x9xf32>
    %56 = arith.truncf %55 : vector<2x9x9xf32> to vector<2x9x9xbf16>
    "tpu.trace_start"() <{level = 10 : i32, message = "bqk,bkd->bqd"}> : () -> ()
    %cst_17 = arith.constant dense<0.000000e+00> : vector<2x9x8xf32>
    %57 = tpu.matmul %56, %42, %cst_17 {dimension_numbers = #tpu.dot_dimension_numbers<[2], [1], [1], [2], [0, 0, 0, 1, 1, 2], [0], [0]>} : vector<2x9x9xbf16>, vector<2x9x8xbf16>, vector<2x9x8xf32> -> vector<2x9x8xf32>
    "tpu.trace_stop"() : () -> ()
    %58 = vector.extract_strided_slice %21 {offsets = [0, 0, 16], sizes = [2, 9, 8], strides = [1, 1, 1]} : vector<2x9x192xbf16> to vector<2x9x8xbf16>
    %59 = vector.extract_strided_slice %21 {offsets = [0, 0, 80], sizes = [2, 9, 8], strides = [1, 1, 1]} : vector<2x9x192xbf16> to vector<2x9x8xbf16>
    %60 = vector.extract_strided_slice %21 {offsets = [0, 0, 144], sizes = [2, 9, 8], strides = [1, 1, 1]} : vector<2x9x192xbf16> to vector<2x9x8xbf16>
    "tpu.trace_start"() <{level = 10 : i32, message = "bqd,bkd->bqk"}> : () -> ()
    %cst_18 = arith.constant dense<0.000000e+00> : vector<2x9x9xf32>
    %61 = tpu.matmul %58, %59, %cst_18 {dimension_numbers = #tpu.dot_dimension_numbers<[2], [2], [1], [1], [0, 0, 0, 1, 1, 1], [0], [0]>} : vector<2x9x8xbf16>, vector<2x9x8xbf16>, vector<2x9x9xf32> -> vector<2x9x9xf32>
    "tpu.trace_stop"() : () -> ()
    %cst_19 = arith.constant 0.353553385 : f32
    %62 = vector.broadcast %cst_19 : f32 to vector<2x9x9xf32>
    %63 = arith.mulf %61, %62 : vector<2x9x9xf32>
    %cst_20 = arith.constant dense<0xFF800000> : vector<2x9xf32>
    %64 = vector.multi_reduction <maximumf>, %63, %cst_20 [2] : vector<2x9x9xf32> to vector<2x9xf32>
    %65 = vector.shape_cast %64 : vector<2x9xf32> to vector<2x9x1xf32>
    %66 = vector.broadcast %65 : vector<2x9x1xf32> to vector<2x9x9xf32>
    %67 = arith.subf %63, %66 : vector<2x9x9xf32>
    %68 = math.exp %67 : vector<2x9x9xf32>
    %cst_21 = arith.constant dense<0.000000e+00> : vector<2x9xf32>
    %69 = vector.multi_reduction <add>, %68, %cst_21 [2] : vector<2x9x9xf32> to vector<2x9xf32>
    %70 = vector.shape_cast %69 : vector<2x9xf32> to vector<2x9x1xf32>
    %71 = tpu.reciprocal %70 {approx = true} : vector<2x9x1xf32> -> vector<2x9x1xf32>
    %72 = vector.broadcast %71 : vector<2x9x1xf32> to vector<2x9x9xf32>
    %73 = arith.mulf %68, %72 : vector<2x9x9xf32>
    %74 = arith.truncf %73 : vector<2x9x9xf32> to vector<2x9x9xbf16>
    "tpu.trace_start"() <{level = 10 : i32, message = "bqk,bkd->bqd"}> : () -> ()
    %cst_22 = arith.constant dense<0.000000e+00> : vector<2x9x8xf32>
    %75 = tpu.matmul %74, %60, %cst_22 {dimension_numbers = #tpu.dot_dimension_numbers<[2], [1], [1], [2], [0, 0, 0, 1, 1, 2], [0], [0]>} : vector<2x9x9xbf16>, vector<2x9x8xbf16>, vector<2x9x8xf32> -> vector<2x9x8xf32>
    "tpu.trace_stop"() : () -> ()
    %76 = vector.extract_strided_slice %21 {offsets = [0, 0, 24], sizes = [2, 9, 8], strides = [1, 1, 1]} : vector<2x9x192xbf16> to vector<2x9x8xbf16>
    %77 = vector.extract_strided_slice %21 {offsets = [0, 0, 88], sizes = [2, 9, 8], strides = [1, 1, 1]} : vector<2x9x192xbf16> to vector<2x9x8xbf16>
    %78 = vector.extract_strided_slice %21 {offsets = [0, 0, 152], sizes = [2, 9, 8], strides = [1, 1, 1]} : vector<2x9x192xbf16> to vector<2x9x8xbf16>
    "tpu.trace_start"() <{level = 10 : i32, message = "bqd,bkd->bqk"}> : () -> ()
    %cst_23 = arith.constant dense<0.000000e+00> : vector<2x9x9xf32>
    %79 = tpu.matmul %76, %77, %cst_23 {dimension_numbers = #tpu.dot_dimension_numbers<[2], [2], [1], [1], [0, 0, 0, 1, 1, 1], [0], [0]>} : vector<2x9x8xbf16>, vector<2x9x8xbf16>, vector<2x9x9xf32> -> vector<2x9x9xf32>
    "tpu.trace_stop"() : () -> ()
    %cst_24 = arith.constant 0.353553385 : f32
    %80 = vector.broadcast %cst_24 : f32 to vector<2x9x9xf32>
    %81 = arith.mulf %79, %80 : vector<2x9x9xf32>
    %cst_25 = arith.constant dense<0xFF800000> : vector<2x9xf32>
    %82 = vector.multi_reduction <maximumf>, %81, %cst_25 [2] : vector<2x9x9xf32> to vector<2x9xf32>
    %83 = vector.shape_cast %82 : vector<2x9xf32> to vector<2x9x1xf32>
    %84 = vector.broadcast %83 : vector<2x9x1xf32> to vector<2x9x9xf32>
    %85 = arith.subf %81, %84 : vector<2x9x9xf32>
    %86 = math.exp %85 : vector<2x9x9xf32>
    %cst_26 = arith.constant dense<0.000000e+00> : vector<2x9xf32>
    %87 = vector.multi_reduction <add>, %86, %cst_26 [2] : vector<2x9x9xf32> to vector<2x9xf32>
    %88 = vector.shape_cast %87 : vector<2x9xf32> to vector<2x9x1xf32>
    %89 = tpu.reciprocal %88 {approx = true} : vector<2x9x1xf32> -> vector<2x9x1xf32>
    %90 = vector.broadcast %89 : vector<2x9x1xf32> to vector<2x9x9xf32>
    %91 = arith.mulf %86, %90 : vector<2x9x9xf32>
    %92 = arith.truncf %91 : vector<2x9x9xf32> to vector<2x9x9xbf16>
    "tpu.trace_start"() <{level = 10 : i32, message = "bqk,bkd->bqd"}> : () -> ()
    %cst_27 = arith.constant dense<0.000000e+00> : vector<2x9x8xf32>
    %93 = tpu.matmul %92, %78, %cst_27 {dimension_numbers = #tpu.dot_dimension_numbers<[2], [1], [1], [2], [0, 0, 0, 1, 1, 2], [0], [0]>} : vector<2x9x9xbf16>, vector<2x9x8xbf16>, vector<2x9x8xf32> -> vector<2x9x8xf32>
    "tpu.trace_stop"() : () -> ()
    %94 = vector.extract_strided_slice %21 {offsets = [0, 0, 32], sizes = [2, 9, 8], strides = [1, 1, 1]} : vector<2x9x192xbf16> to vector<2x9x8xbf16>
    %95 = vector.extract_strided_slice %21 {offsets = [0, 0, 96], sizes = [2, 9, 8], strides = [1, 1, 1]} : vector<2x9x192xbf16> to vector<2x9x8xbf16>
    %96 = vector.extract_strided_slice %21 {offsets = [0, 0, 160], sizes = [2, 9, 8], strides = [1, 1, 1]} : vector<2x9x192xbf16> to vector<2x9x8xbf16>
    "tpu.trace_start"() <{level = 10 : i32, message = "bqd,bkd->bqk"}> : () -> ()
    %cst_28 = arith.constant dense<0.000000e+00> : vector<2x9x9xf32>
    %97 = tpu.matmul %94, %95, %cst_28 {dimension_numbers = #tpu.dot_dimension_numbers<[2], [2], [1], [1], [0, 0, 0, 1, 1, 1], [0], [0]>} : vector<2x9x8xbf16>, vector<2x9x8xbf16>, vector<2x9x9xf32> -> vector<2x9x9xf32>
    "tpu.trace_stop"() : () -> ()
    %cst_29 = arith.constant 0.353553385 : f32
    %98 = vector.broadcast %cst_29 : f32 to vector<2x9x9xf32>
    %99 = arith.mulf %97, %98 : vector<2x9x9xf32>
    %cst_30 = arith.constant dense<0xFF800000> : vector<2x9xf32>
    %100 = vector.multi_reduction <maximumf>, %99, %cst_30 [2] : vector<2x9x9xf32> to vector<2x9xf32>
    %101 = vector.shape_cast %100 : vector<2x9xf32> to vector<2x9x1xf32>
    %102 = vector.broadcast %101 : vector<2x9x1xf32> to vector<2x9x9xf32>
    %103 = arith.subf %99, %102 : vector<2x9x9xf32>
    %104 = math.exp %103 : vector<2x9x9xf32>
    %cst_31 = arith.constant dense<0.000000e+00> : vector<2x9xf32>
    %105 = vector.multi_reduction <add>, %104, %cst_31 [2] : vector<2x9x9xf32> to vector<2x9xf32>
    %106 = vector.shape_cast %105 : vector<2x9xf32> to vector<2x9x1xf32>
    %107 = tpu.reciprocal %106 {approx = true} : vector<2x9x1xf32> -> vector<2x9x1xf32>
    %108 = vector.broadcast %107 : vector<2x9x1xf32> to vector<2x9x9xf32>
    %109 = arith.mulf %104, %108 : vector<2x9x9xf32>
    %110 = arith.truncf %109 : vector<2x9x9xf32> to vector<2x9x9xbf16>
    "tpu.trace_start"() <{level = 10 : i32, message = "bqk,bkd->bqd"}> : () -> ()
    %cst_32 = arith.constant dense<0.000000e+00> : vector<2x9x8xf32>
    %111 = tpu.matmul %110, %96, %cst_32 {dimension_numbers = #tpu.dot_dimension_numbers<[2], [1], [1], [2], [0, 0, 0, 1, 1, 2], [0], [0]>} : vector<2x9x9xbf16>, vector<2x9x8xbf16>, vector<2x9x8xf32> -> vector<2x9x8xf32>
    "tpu.trace_stop"() : () -> ()
    %112 = vector.extract_strided_slice %21 {offsets = [0, 0, 40], sizes = [2, 9, 8], strides = [1, 1, 1]} : vector<2x9x192xbf16> to vector<2x9x8xbf16>
    %113 = vector.extract_strided_slice %21 {offsets = [0, 0, 104], sizes = [2, 9, 8], strides = [1, 1, 1]} : vector<2x9x192xbf16> to vector<2x9x8xbf16>
    %114 = vector.extract_strided_slice %21 {offsets = [0, 0, 168], sizes = [2, 9, 8], strides = [1, 1, 1]} : vector<2x9x192xbf16> to vector<2x9x8xbf16>
    "tpu.trace_start"() <{level = 10 : i32, message = "bqd,bkd->bqk"}> : () -> ()
    %cst_33 = arith.constant dense<0.000000e+00> : vector<2x9x9xf32>
    %115 = tpu.matmul %112, %113, %cst_33 {dimension_numbers = #tpu.dot_dimension_numbers<[2], [2], [1], [1], [0, 0, 0, 1, 1, 1], [0], [0]>} : vector<2x9x8xbf16>, vector<2x9x8xbf16>, vector<2x9x9xf32> -> vector<2x9x9xf32>
    "tpu.trace_stop"() : () -> ()
    %cst_34 = arith.constant 0.353553385 : f32
    %116 = vector.broadcast %cst_34 : f32 to vector<2x9x9xf32>
    %117 = arith.mulf %115, %116 : vector<2x9x9xf32>
    %cst_35 = arith.constant dense<0xFF800000> : vector<2x9xf32>
    %118 = vector.multi_reduction <maximumf>, %117, %cst_35 [2] : vector<2x9x9xf32> to vector<2x9xf32>
    %119 = vector.shape_cast %118 : vector<2x9xf32> to vector<2x9x1xf32>
    %120 = vector.broadcast %119 : vector<2x9x1xf32> to vector<2x9x9xf32>
    %121 = arith.subf %117, %120 : vector<2x9x9xf32>
    %122 = math.exp %121 : vector<2x9x9xf32>
    %cst_36 = arith.constant dense<0.000000e+00> : vector<2x9xf32>
    %123 = vector.multi_reduction <add>, %122, %cst_36 [2] : vector<2x9x9xf32> to vector<2x9xf32>
    %124 = vector.shape_cast %123 : vector<2x9xf32> to vector<2x9x1xf32>
    %125 = tpu.reciprocal %124 {approx = true} : vector<2x9x1xf32> -> vector<2x9x1xf32>
    %126 = vector.broadcast %125 : vector<2x9x1xf32> to vector<2x9x9xf32>
    %127 = arith.mulf %122, %126 : vector<2x9x9xf32>
    %128 = arith.truncf %127 : vector<2x9x9xf32> to vector<2x9x9xbf16>
    "tpu.trace_start"() <{level = 10 : i32, message = "bqk,bkd->bqd"}> : () -> ()
    %cst_37 = arith.constant dense<0.000000e+00> : vector<2x9x8xf32>
    %129 = tpu.matmul %128, %114, %cst_37 {dimension_numbers = #tpu.dot_dimension_numbers<[2], [1], [1], [2], [0, 0, 0, 1, 1, 2], [0], [0]>} : vector<2x9x9xbf16>, vector<2x9x8xbf16>, vector<2x9x8xf32> -> vector<2x9x8xf32>
    "tpu.trace_stop"() : () -> ()
    %130 = vector.extract_strided_slice %21 {offsets = [0, 0, 48], sizes = [2, 9, 8], strides = [1, 1, 1]} : vector<2x9x192xbf16> to vector<2x9x8xbf16>
    %131 = vector.extract_strided_slice %21 {offsets = [0, 0, 112], sizes = [2, 9, 8], strides = [1, 1, 1]} : vector<2x9x192xbf16> to vector<2x9x8xbf16>
    %132 = vector.extract_strided_slice %21 {offsets = [0, 0, 176], sizes = [2, 9, 8], strides = [1, 1, 1]} : vector<2x9x192xbf16> to vector<2x9x8xbf16>
    "tpu.trace_start"() <{level = 10 : i32, message = "bqd,bkd->bqk"}> : () -> ()
    %cst_38 = arith.constant dense<0.000000e+00> : vector<2x9x9xf32>
    %133 = tpu.matmul %130, %131, %cst_38 {dimension_numbers = #tpu.dot_dimension_numbers<[2], [2], [1], [1], [0, 0, 0, 1, 1, 1], [0], [0]>} : vector<2x9x8xbf16>, vector<2x9x8xbf16>, vector<2x9x9xf32> -> vector<2x9x9xf32>
    "tpu.trace_stop"() : () -> ()
    %cst_39 = arith.constant 0.353553385 : f32
    %134 = vector.broadcast %cst_39 : f32 to vector<2x9x9xf32>
    %135 = arith.mulf %133, %134 : vector<2x9x9xf32>
    %cst_40 = arith.constant dense<0xFF800000> : vector<2x9xf32>
    %136 = vector.multi_reduction <maximumf>, %135, %cst_40 [2] : vector<2x9x9xf32> to vector<2x9xf32>
    %137 = vector.shape_cast %136 : vector<2x9xf32> to vector<2x9x1xf32>
    %138 = vector.broadcast %137 : vector<2x9x1xf32> to vector<2x9x9xf32>
    %139 = arith.subf %135, %138 : vector<2x9x9xf32>
    %140 = math.exp %139 : vector<2x9x9xf32>
    %cst_41 = arith.constant dense<0.000000e+00> : vector<2x9xf32>
    %141 = vector.multi_reduction <add>, %140, %cst_41 [2] : vector<2x9x9xf32> to vector<2x9xf32>
    %142 = vector.shape_cast %141 : vector<2x9xf32> to vector<2x9x1xf32>
    %143 = tpu.reciprocal %142 {approx = true} : vector<2x9x1xf32> -> vector<2x9x1xf32>
    %144 = vector.broadcast %143 : vector<2x9x1xf32> to vector<2x9x9xf32>
    %145 = arith.mulf %140, %144 : vector<2x9x9xf32>
    %146 = arith.truncf %145 : vector<2x9x9xf32> to vector<2x9x9xbf16>
    "tpu.trace_start"() <{level = 10 : i32, message = "bqk,bkd->bqd"}> : () -> ()
    %cst_42 = arith.constant dense<0.000000e+00> : vector<2x9x8xf32>
    %147 = tpu.matmul %146, %132, %cst_42 {dimension_numbers = #tpu.dot_dimension_numbers<[2], [1], [1], [2], [0, 0, 0, 1, 1, 2], [0], [0]>} : vector<2x9x9xbf16>, vector<2x9x8xbf16>, vector<2x9x8xf32> -> vector<2x9x8xf32>
    "tpu.trace_stop"() : () -> ()
    %148 = vector.extract_strided_slice %21 {offsets = [0, 0, 56], sizes = [2, 9, 8], strides = [1, 1, 1]} : vector<2x9x192xbf16> to vector<2x9x8xbf16>
    %149 = vector.extract_strided_slice %21 {offsets = [0, 0, 120], sizes = [2, 9, 8], strides = [1, 1, 1]} : vector<2x9x192xbf16> to vector<2x9x8xbf16>
    %150 = vector.extract_strided_slice %21 {offsets = [0, 0, 184], sizes = [2, 9, 8], strides = [1, 1, 1]} : vector<2x9x192xbf16> to vector<2x9x8xbf16>
    "tpu.trace_start"() <{level = 10 : i32, message = "bqd,bkd->bqk"}> : () -> ()
    %cst_43 = arith.constant dense<0.000000e+00> : vector<2x9x9xf32>
    %151 = tpu.matmul %148, %149, %cst_43 {dimension_numbers = #tpu.dot_dimension_numbers<[2], [2], [1], [1], [0, 0, 0, 1, 1, 1], [0], [0]>} : vector<2x9x8xbf16>, vector<2x9x8xbf16>, vector<2x9x9xf32> -> vector<2x9x9xf32>
    "tpu.trace_stop"() : () -> ()
    %cst_44 = arith.constant 0.353553385 : f32
    %152 = vector.broadcast %cst_44 : f32 to vector<2x9x9xf32>
    %153 = arith.mulf %151, %152 : vector<2x9x9xf32>
    %cst_45 = arith.constant dense<0xFF800000> : vector<2x9xf32>
    %154 = vector.multi_reduction <maximumf>, %153, %cst_45 [2] : vector<2x9x9xf32> to vector<2x9xf32>
    %155 = vector.shape_cast %154 : vector<2x9xf32> to vector<2x9x1xf32>
    %156 = vector.broadcast %155 : vector<2x9x1xf32> to vector<2x9x9xf32>
    %157 = arith.subf %153, %156 : vector<2x9x9xf32>
    %158 = math.exp %157 : vector<2x9x9xf32>
    %cst_46 = arith.constant dense<0.000000e+00> : vector<2x9xf32>
    %159 = vector.multi_reduction <add>, %158, %cst_46 [2] : vector<2x9x9xf32> to vector<2x9xf32>
    %160 = vector.shape_cast %159 : vector<2x9xf32> to vector<2x9x1xf32>
    %161 = tpu.reciprocal %160 {approx = true} : vector<2x9x1xf32> -> vector<2x9x1xf32>
    %162 = vector.broadcast %161 : vector<2x9x1xf32> to vector<2x9x9xf32>
    %163 = arith.mulf %158, %162 : vector<2x9x9xf32>
    %164 = arith.truncf %163 : vector<2x9x9xf32> to vector<2x9x9xbf16>
    "tpu.trace_start"() <{level = 10 : i32, message = "bqk,bkd->bqd"}> : () -> ()
    %cst_47 = arith.constant dense<0.000000e+00> : vector<2x9x8xf32>
    %165 = tpu.matmul %164, %150, %cst_47 {dimension_numbers = #tpu.dot_dimension_numbers<[2], [1], [1], [2], [0, 0, 0, 1, 1, 2], [0], [0]>} : vector<2x9x9xbf16>, vector<2x9x8xbf16>, vector<2x9x8xf32> -> vector<2x9x8xf32>
    "tpu.trace_stop"() : () -> ()
    %166 = tpu.concatenate %39, %57, %75, %93, %111, %129, %147, %165 in 2 : vector<2x9x8xf32>, vector<2x9x8xf32>, vector<2x9x8xf32>, vector<2x9x8xf32>, vector<2x9x8xf32>, vector<2x9x8xf32>, vector<2x9x8xf32>, vector<2x9x8xf32> -> vector<2x9x64xf32>
    %167 = vector.shape_cast %166 : vector<2x9x64xf32> to vector<18x64xf32>
    %168 = arith.truncf %167 : vector<18x64xf32> to vector<18x64xbf16>
    %c0_48 = arith.constant 0 : index
    %c0_49 = arith.constant 0 : index
    %c0_50 = arith.constant 0 : index
    %169 = vector.load %arg6[%c0_48, %c0_49, %c0_50] : memref<1x64x64xbf16, #tpu.memory_space<vmem>>, vector<1x64x64xbf16>
    %170 = vector.shape_cast %169 : vector<1x64x64xbf16> to vector<64x64xbf16>
    %cst_51 = arith.constant dense<0.000000e+00> : vector<18x64xf32>
    %171 = tpu.matmul %168, %170, %cst_51 {dimension_numbers = #tpu.dot_dimension_numbers<[1], [0], [0], [1], [0, 0, 1, 1], [], []>} : vector<18x64xbf16>, vector<64x64xbf16>, vector<18x64xf32> -> vector<18x64xf32>
    %172 = vector.broadcast %7 : vector<1x64xf32> to vector<18x64xf32>
    %173 = arith.addf %171, %172 : vector<18x64xf32>
    %174 = arith.addf %3, %173 : vector<18x64xf32>
    %cst_52 = arith.constant dense<0.000000e+00> : vector<18xf32>
    %175 = vector.multi_reduction <add>, %174, %cst_52 [1] : vector<18x64xf32> to vector<18xf32>
    %176 = vector.shape_cast %175 : vector<18xf32> to vector<18x1xf32>
    %cst_53 = arith.constant 6.400000e+01 : f32
    %177 = vector.broadcast %cst_53 : f32 to vector<18x1xf32>
    %178 = arith.divf %176, %177 : vector<18x1xf32>
    %179 = vector.broadcast %178 : vector<18x1xf32> to vector<18x64xf32>
    %180 = arith.subf %174, %179 : vector<18x64xf32>
    %181 = arith.mulf %180, %180 : vector<18x64xf32>
    %cst_54 = arith.constant dense<0.000000e+00> : vector<18xf32>
    %182 = vector.multi_reduction <add>, %181, %cst_54 [1] : vector<18x64xf32> to vector<18xf32>
    %183 = vector.shape_cast %182 : vector<18xf32> to vector<18x1xf32>
    %cst_55 = arith.constant 6.400000e+01 : f32
    %184 = vector.broadcast %cst_55 : f32 to vector<18x1xf32>
    %185 = arith.divf %183, %184 : vector<18x1xf32>
    %cst_56 = arith.constant 9.99999974E-6 : f32
    %186 = vector.broadcast %cst_56 : f32 to vector<18x1xf32>
    %187 = arith.addf %185, %186 : vector<18x1xf32>
    %188 = math.rsqrt %187 : vector<18x1xf32>
    %189 = vector.broadcast %188 : vector<18x1xf32> to vector<18x64xf32>
    %190 = arith.mulf %180, %189 : vector<18x64xf32>
    %191 = vector.broadcast %8 : vector<1x64xf32> to vector<18x64xf32>
    %192 = arith.mulf %190, %191 : vector<18x64xf32>
    %193 = vector.broadcast %9 : vector<1x64xf32> to vector<18x64xf32>
    %194 = arith.addf %192, %193 : vector<18x64xf32>
    %195 = arith.truncf %194 : vector<18x64xf32> to vector<18x64xbf16>
    %c0_57 = arith.constant 0 : index
    %c0_58 = arith.constant 0 : index
    %c0_59 = arith.constant 0 : index
    %196 = vector.load %arg7[%c0_57, %c0_58, %c0_59] : memref<1x64x128xbf16, #tpu.memory_space<vmem>>, vector<1x64x128xbf16>
    %197 = vector.shape_cast %196 : vector<1x64x128xbf16> to vector<64x128xbf16>
    %cst_60 = arith.constant dense<0.000000e+00> : vector<18x128xf32>
    %198 = tpu.matmul %195, %197, %cst_60 {dimension_numbers = #tpu.dot_dimension_numbers<[1], [0], [0], [1], [0, 0, 1, 1], [], []>} : vector<18x64xbf16>, vector<64x128xbf16>, vector<18x128xf32> -> vector<18x128xf32>
    %199 = vector.broadcast %10 : vector<1x128xf32> to vector<18x128xf32>
    %200 = arith.addf %198, %199 : vector<18x128xf32>
    %cst_61 = arith.constant 0.000000e+00 : f32
    %201 = vector.broadcast %cst_61 : f32 to vector<18x128xf32>
    %202 = arith.maximumf %200, %201 : vector<18x128xf32>
    %203 = arith.truncf %202 : vector<18x128xf32> to vector<18x128xbf16>
    %c0_62 = arith.constant 0 : index
    %c0_63 = arith.constant 0 : index
    %c0_64 = arith.constant 0 : index
    %204 = vector.load %arg8[%c0_62, %c0_63, %c0_64] : memref<1x128x64xbf16, #tpu.memory_space<vmem>>, vector<1x128x64xbf16>
    %205 = vector.shape_cast %204 : vector<1x128x64xbf16> to vector<128x64xbf16>
    %cst_65 = arith.constant dense<0.000000e+00> : vector<18x64xf32>
    %206 = tpu.matmul %203, %205, %cst_65 {dimension_numbers = #tpu.dot_dimension_numbers<[1], [0], [0], [1], [0, 0, 1, 1], [], []>} : vector<18x128xbf16>, vector<128x64xbf16>, vector<18x64xf32> -> vector<18x64xf32>
    %207 = vector.broadcast %11 : vector<1x64xf32> to vector<18x64xf32>
    %208 = arith.addf %206, %207 : vector<18x64xf32>
    %209 = arith.addf %194, %208 : vector<18x64xf32>
    %cst_66 = arith.constant dense<0.000000e+00> : vector<18xf32>
    %210 = vector.multi_reduction <add>, %209, %cst_66 [1] : vector<18x64xf32> to vector<18xf32>
    %211 = vector.shape_cast %210 : vector<18xf32> to vector<18x1xf32>
    %cst_67 = arith.constant 6.400000e+01 : f32
    %212 = vector.broadcast %cst_67 : f32 to vector<18x1xf32>
    %213 = arith.divf %211, %212 : vector<18x1xf32>
    %214 = vector.broadcast %213 : vector<18x1xf32> to vector<18x64xf32>
    %215 = arith.subf %209, %214 : vector<18x64xf32>
    %216 = arith.mulf %215, %215 : vector<18x64xf32>
    %cst_68 = arith.constant dense<0.000000e+00> : vector<18xf32>
    %217 = vector.multi_reduction <add>, %216, %cst_68 [1] : vector<18x64xf32> to vector<18xf32>
    %218 = vector.shape_cast %217 : vector<18xf32> to vector<18x1xf32>
    %cst_69 = arith.constant 6.400000e+01 : f32
    %219 = vector.broadcast %cst_69 : f32 to vector<18x1xf32>
    %220 = arith.divf %218, %219 : vector<18x1xf32>
    %cst_70 = arith.constant 9.99999974E-6 : f32
    %221 = vector.broadcast %cst_70 : f32 to vector<18x1xf32>
    %222 = arith.addf %220, %221 : vector<18x1xf32>
    %223 = math.rsqrt %222 : vector<18x1xf32>
    %224 = vector.broadcast %223 : vector<18x1xf32> to vector<18x64xf32>
    %225 = arith.mulf %215, %224 : vector<18x64xf32>
    %226 = vector.broadcast %12 : vector<1x64xf32> to vector<18x64xf32>
    %227 = arith.mulf %225, %226 : vector<18x64xf32>
    %228 = vector.broadcast %13 : vector<1x64xf32> to vector<18x64xf32>
    %229 = arith.addf %227, %228 : vector<18x64xf32>
    %c0_71 = arith.constant 0 : index
    %c0_72 = arith.constant 0 : index
    %230 = vector.load %arg12[%c0_71, %c0_72] : memref<18x64xf32, #tpu.memory_space<vmem>>, vector<18x64xf32>
    tpu.vector_store %arg12[%c0_71, %c0_72], %229 {strides = array<i32>} : memref<18x64xf32, #tpu.memory_space<vmem>>, vector<18x64xf32>,
    %c1_i32 = arith.constant 1 : i32
    %231 = arith.cmpi eq, %arg1, %c1_i32 : i32
    %232 = arith.extui %231 : i1 to i32
    %c0_i32_73 = arith.constant 0 : i32
    %233 = arith.cmpi ne, %232, %c0_i32_73 : i32
    scf.if %233 {
      %c0_74 = arith.constant 0 : index
      %c0_75 = arith.constant 0 : index
      %234 = vector.load %arg10[%c0_74, %c0_75] : memref<2x64xf32, #tpu.memory_space<vmem>>, vector<2x64xf32>
      %235 = vector.shape_cast %229 : vector<18x64xf32> to vector<2x9x64xf32>
      %236 = vector.extract_strided_slice %235 {offsets = [0, 0, 0], sizes = [2, 1, 64], strides = [1, 1, 1]} : vector<2x9x64xf32> to vector<2x1x64xf32>
      %237 = vector.shape_cast %236 : vector<2x1x64xf32> to vector<2x64xf32>
      %238 = vector.extract_strided_slice %234 {offsets = [0, 0], sizes = [1, 64], strides = [1, 1]} : vector<2x64xf32> to vector<1x64xf32>
      %239 = vector.extract_strided_slice %234 {offsets = [1, 0], sizes = [1, 64], strides = [1, 1]} : vector<2x64xf32> to vector<1x64xf32>
      %cst_76 = arith.constant dense<0.000000e+00> : vector<2xf32>
      %240 = vector.multi_reduction <add>, %237, %cst_76 [1] : vector<2x64xf32> to vector<2xf32>
      %241 = vector.shape_cast %240 : vector<2xf32> to vector<2x1xf32>
      %cst_77 = arith.constant 6.400000e+01 : f32
      %242 = vector.broadcast %cst_77 : f32 to vector<2x1xf32>
      %243 = arith.divf %241, %242 : vector<2x1xf32>
      %244 = vector.broadcast %243 : vector<2x1xf32> to vector<2x64xf32>
      %245 = arith.subf %237, %244 : vector<2x64xf32>
      %246 = arith.mulf %245, %245 : vector<2x64xf32>
      %cst_78 = arith.constant dense<0.000000e+00> : vector<2xf32>
      %247 = vector.multi_reduction <add>, %246, %cst_78 [1] : vector<2x64xf32> to vector<2xf32>
      %248 = vector.shape_cast %247 : vector<2xf32> to vector<2x1xf32>
      %cst_79 = arith.constant 6.400000e+01 : f32
      %249 = vector.broadcast %cst_79 : f32 to vector<2x1xf32>
      %250 = arith.divf %248, %249 : vector<2x1xf32>
      %cst_80 = arith.constant 9.99999974E-6 : f32
      %251 = vector.broadcast %cst_80 : f32 to vector<2x1xf32>
      %252 = arith.addf %250, %251 : vector<2x1xf32>
      %253 = math.rsqrt %252 : vector<2x1xf32>
      %254 = vector.broadcast %253 : vector<2x1xf32> to vector<2x64xf32>
      %255 = arith.mulf %245, %254 : vector<2x64xf32>
      %256 = vector.broadcast %238 : vector<1x64xf32> to vector<2x64xf32>
      %257 = arith.mulf %255, %256 : vector<2x64xf32>
      %258 = vector.broadcast %239 : vector<1x64xf32> to vector<2x64xf32>
      %259 = arith.addf %257, %258 : vector<2x64xf32>
      %cst_81 = arith.constant 0.000000e+00 : f32
      %260 = vector.broadcast %cst_81 : f32 to vector<2x64xf32>
      %261 = tpu.concatenate %259, %260 in 1 : vector<2x64xf32>, vector<2x64xf32> -> vector<2x128xf32>
      %c0_82 = arith.constant 0 : index
      %c0_83 = arith.constant 0 : index
      %c0_84 = arith.constant 0 : index
      %262 = vector.load %arg11[%c0_82, %c0_83, %c0_84] : memref<1x2x128xf32, #tpu.memory_space<vmem>>, vector<1x2x128xf32>
      %263 = vector.shape_cast %262 : vector<1x2x128xf32> to vector<2x128xf32>
      %264 = vector.shape_cast %261 : vector<2x128xf32> to vector<1x2x128xf32>
      tpu.vector_store %arg11[%c0_82, %c0_83, %c0_84], %264 {strides = array<i32>} : memref<1x2x128xf32, #tpu.memory_space<vmem>>, vector<1x2x128xf32>,
    } else {
    }
    return
  }
  func.func @transform_0(%arg0: i32, %arg1: i32) -> (i32, i32, i32) {
    %c0_i32 = arith.constant 0 : i32
    %c0_i32_0 = arith.constant 0 : i32
    %c0_i32_1 = arith.constant 0 : i32
    return %arg0, %c0_i32, %c0_i32_0 : i32, i32, i32
  }
  func.func @transform_1(%arg0: i32, %arg1: i32) -> (i32, i32, i32) {
    %c0_i32 = arith.constant 0 : i32
    %c0_i32_0 = arith.constant 0 : i32
    %c0_i32_1 = arith.constant 0 : i32
    %c0_i32_2 = arith.constant 0 : i32
    return %c0_i32, %c0_i32_0, %c0_i32_1 : i32, i32, i32
  }
  func.func @transform_2(%arg0: i32, %arg1: i32) -> (i32, i32, i32) {
    %c0_i32 = arith.constant 0 : i32
    %c0_i32_0 = arith.constant 0 : i32
    %c0_i32_1 = arith.constant 0 : i32
    %c0_i32_2 = arith.constant 0 : i32
    return %c0_i32, %c0_i32_0, %c0_i32_1 : i32, i32, i32
  }
  func.func @transform_3(%arg0: i32, %arg1: i32) -> (i32, i32, i32) {
    %c0_i32 = arith.constant 0 : i32
    %c0_i32_0 = arith.constant 0 : i32
    %c0_i32_1 = arith.constant 0 : i32
    return %arg1, %c0_i32, %c0_i32_0 : i32, i32, i32
  }
  func.func @transform_4(%arg0: i32, %arg1: i32) -> (i32, i32, i32) {
    %c0_i32 = arith.constant 0 : i32
    %c0_i32_0 = arith.constant 0 : i32
    %c0_i32_1 = arith.constant 0 : i32
    return %arg1, %c0_i32, %c0_i32_0 : i32, i32, i32
  }
  func.func @transform_5(%arg0: i32, %arg1: i32) -> (i32, i32, i32) {
    %c0_i32 = arith.constant 0 : i32
    %c0_i32_0 = arith.constant 0 : i32
    %c0_i32_1 = arith.constant 0 : i32
    return %arg1, %c0_i32, %c0_i32_0 : i32, i32, i32
  }
  func.func @transform_6(%arg0: i32, %arg1: i32) -> (i32, i32, i32) {
    %c0_i32 = arith.constant 0 : i32
    %c0_i32_0 = arith.constant 0 : i32
    %c0_i32_1 = arith.constant 0 : i32
    return %arg1, %c0_i32, %c0_i32_0 : i32, i32, i32
  }
  func.func @transform_7(%arg0: i32, %arg1: i32) -> (i32, i32, i32) {
    %c0_i32 = arith.constant 0 : i32
    %c0_i32_0 = arith.constant 0 : i32
    %c0_i32_1 = arith.constant 0 : i32
    return %arg1, %c0_i32, %c0_i32_0 : i32, i32, i32
  }
  func.func @transform_8(%arg0: i32, %arg1: i32) -> (i32, i32) {
    %c0_i32 = arith.constant 0 : i32
    %c0_i32_0 = arith.constant 0 : i32
    %c0_i32_1 = arith.constant 0 : i32
    return %c0_i32, %c0_i32_0 : i32, i32
  }
  func.func @transform_9(%arg0: i32, %arg1: i32) -> (i32, i32, i32) {
    %c0_i32 = arith.constant 0 : i32
    %c0_i32_0 = arith.constant 0 : i32
    %c0_i32_1 = arith.constant 0 : i32
    return %arg0, %c0_i32, %c0_i32_0 : i32, i32, i32
  }
}

</mosaic_0001>

<llo_original>
// kernel: tpu_custom_call.1
$region0: #{tpu_custom_call.1}
  #allocation0 [shape = 'u32[]', space=smem, size = 0x4, offset = 0x4, fixed_abs, tag = 'smem constant byte address 0x4 - core index']
  #allocation1 [shape = 'u32[144,128]{1,0:T(1,128)}', space=vmem, size = 0x12000, scoped, tag = 'internal scratch']
  #allocation2 [shape = 'f32[18,64]{1,0:T(8,128)}', space=vmem, size = 0x3000, scoped, tag = 'scratch operand']
  %s0 = inlined_call_operand.hbm [shape: f32[2,8,64], index: 0, kind: input, shape index: {}]
  %s1 = inlined_call_operand.vmem [shape: f32[1,1,64], index: 1, kind: input, shape index: {}]
  %s2 = inlined_call_operand.vmem [shape: f32[1,9,64], index: 2, kind: input, shape index: {}]
  %s3 = inlined_call_operand.vmem [shape: bf16[2,64,192], index: 3, kind: input, shape index: {}]
  %s4 = inlined_call_operand.vmem [shape: bf16[2,64,64], index: 4, kind: input, shape index: {}]
  %s5 = inlined_call_operand.hbm [shape: bf16[2,64,128], index: 5, kind: input, shape index: {}]
  %s6 = inlined_call_operand.vmem [shape: bf16[2,128,64], index: 6, kind: input, shape index: {}]
  %s7 = inlined_call_operand.vmem [shape: f32[2,8,256], index: 7, kind: input, shape index: {}]
  %s8 = inlined_call_operand.vmem [shape: f32[2,64], index: 8, kind: input, shape index: {}]
  %s9 = inlined_call_operand.hbm [shape: f32[1,2,128], index: 9, kind: output, shape index: {}]
  %s10 = sld [smem:[#allocation0]]
  $region85: #{tpu_custom_call.1} parent=0
    _
  %s12 = ssub.s32 1, %s10
  %s13 = scalar_select 0, %s12, %s10
  $region1: #{tpu_custom_call.1} parent=0
    #allocation3 [shape = 'u8[8192]{0}', space=vmem, size = 0x2000, scoped, tag = 'input window, operand 0, single buffered']
    #allocation4 [shape = 's32[2]{0}', space=sflag, size = 0x8, scoped, tag = 'scoped memory for tpu_custom_call.1']
    #allocation5 [shape = 's32[2]{0}', space=sflag, size = 0x8, scoped, tag = 'scoped memory for tpu_custom_call.1']
    #allocation6 [shape = 'u8[32768]{0}', space=vmem, size = 0x8000, scoped, tag = 'input window, operand 5']
    #allocation7 [shape = 's32[2]{0}', space=sflag, size = 0x8, scoped, tag = 'scoped memory for tpu_custom_call.1']
    #allocation8 [shape = 'u8[1024]{0}', space=vmem, size = 0x400, scoped, tag = 'output window, operand 0, single buffered']
    %14 = vsyncpa [#allocation4], 0
    %15 = vsyncpa [#allocation7], 0
    %s16 = scalar_lea.sflag [#allocation7], 1
    %17 = vsyncpa %s16, 0
    %18 = vsyncpa [#allocation5], 0
    loop: start=0, step=1, limit=4
    $region2: #{tpu_custom_call.1} parent=1 // loop_pre_header
      _
    $region3: #{tpu_custom_call.1} parent=1 // loop_header
      %s20 = sphi 0, %s24
      %p21 = scmp.ge.s32.totalorder %s20, 4
      %s27 = sphi 0, %s39
      %s28 = sphi 0, %s35
      %s29 = sphi 0, %s27
      %s30 = sphi 0, %s28
      %s31 = sphi 0, %s29
      %s32 = sphi 0, %s30
      %s42 = sphi 0, %s44
      %s45 = sphi 0, %s42
      %s46 = sphi 0, %s45
      %s62 = sphi 0, %s46
      %s66 = sphi 0, %s66
      %s68 = sphi 0, %s66
      %s69 = sphi 0, %s68
      %s83 = sphi 0, %s69
      %s87 = sphi 0, %s87
      %s89 = sphi 0, %s87
      %s90 = sphi 0, %s89
      %s104 = sphi 0, %s90
      %s110 = sphi 0, %s112
      %s113 = sphi 0, %s110
      %s114 = sphi 0, %s113
      %s130 = sphi 0, %s114
      %s136 = sphi 0, %s138
      %s139 = sphi 0, %s136
      %s140 = sphi 0, %s139
      %s156 = sphi 0, %s140
      %s162 = sphi 0, %s164
      %s165 = sphi 0, %s162
      %s166 = sphi 0, %s165
      %s182 = sphi 0, %s166
      %s188 = sphi 0, %s190
      %s191 = sphi 0, %s188
      %s192 = sphi 0, %s191
      %s208 = sphi 0, %s192
      %s214 = sphi 0, %s216
      %s217 = sphi 0, %s214
      %s218 = sphi 0, %s217
      %s234 = sphi 0, %s218
      %s238 = sphi 0, %s238
      %s240 = sphi 0, %s238
      %s241 = sphi 0, %s240
      %s255 = sphi 0, %s241
      %s261 = sphi 0, %s263
      %s264 = sphi 0, %s261
      %s265 = sphi 0, %s264
      %s281 = sphi 0, %s265
    $region4: #{tpu_custom_call.1} parent=1 // loop_header_branch
      %23 = sbr.rel (%p21) target = $region8
    $region5: #{tpu_custom_call.1} parent=1 // loop_body
      %s25 = ssub.s32 %s20, 1
      %s26 = ssub.s32 %s20, 2
      %s33 = sadd.s32 1, %s28
      %p34 = scmp.ge.s32.totalorder %s33, 2
      %s35 = scalar_select %p34, 0, %s33
      %s36 = sadd.s32 1, %s27
      %s37 = scalar_select %p34, %s36, %s27
      %p38 = scmp.ge.s32.totalorder %s37, 1
      %s39 = scalar_select %p38, 0, %s37
      %s40 = ssub.s32 %s27, %s39
      %p41 = scmp.eq.s32.totalorder %s40, 0
      %s43 = sadd.s32 %s42, 1
      %s44 = scalar_select %p41, %s42, %s43
      %p47 = pneg %p41
      %p48 = scmp.eq.s32.totalorder %s20, 1
      %p49 = por %p47, %p48
      %p50 = scmp.ne.s32.totalorder %s42, %s45
      %p51 = scmp.eq.s32.totalorder %s20, 0
      %p52 = por %p50, %p51
      %p53 = scmp.ne.s32.totalorder %s42, %s45
      %p54 = scmp.eq.s32.totalorder %s25, 1
      %p55 = por %p53, %p54
      %p56 = scmp.ne.s32.totalorder %s45, %s46
      %p57 = scmp.eq.s32.totalorder %s25, 0
      %p58 = por %p56, %p57
      %p59 = scmp.ne.s32.totalorder %s45, %s46
      %p60 = scmp.eq.s32.totalorder %s26, 1
      %p61 = por %p59, %p60
      %p63 = scmp.ne.s32.totalorder %s46, %s62
      %p64 = scmp.eq.s32.totalorder %s26, 0
      %p65 = por %p63, %p64
      %s67 = sadd.s32 %s66, 1
      %p70 = scmp.eq.s32.totalorder %s20, 1
      %p71 = scmp.ne.s32.totalorder %s66, %s68
      %p72 = scmp.eq.s32.totalorder %s20, 0
      %p73 = por %p71, %p72
      %p74 = scmp.ne.s32.totalorder %s66, %s68
      %p75 = scmp.eq.s32.totalorder %s25, 1
      %p76 = por %p74, %p75
      %p77 = scmp.ne.s32.totalorder %s68, %s69
      %p78 = scmp.eq.s32.totalorder %s25, 0
      %p79 = por %p77, %p78
      %p80 = scmp.ne.s32.totalorder %s68, %s69
      %p81 = scmp.eq.s32.totalorder %s26, 1
      %p82 = por %p80, %p81
      %p84 = scmp.ne.s32.totalorder %s69, %s83
      %p85 = scmp.eq.s32.totalorder %s26, 0
      %p86 = por %p84, %p85
      %s88 = sadd.s32 %s87, 1
      %p91 = scmp.eq.s32.totalorder %s20, 1
      %p92 = scmp.ne.s32.totalorder %s87, %s89
      %p93 = scmp.eq.s32.totalorder %s20, 0
      %p94 = por %p92, %p93
      %p95 = scmp.ne.s32.totalorder %s87, %s89
      %p96 = scmp.eq.s32.totalorder %s25, 1
      %p97 = por %p95, %p96
      %p98 = scmp.ne.s32.totalorder %s89, %s90
      %p99 = scmp.eq.s32.totalorder %s25, 0
      %p100 = por %p98, %p99
      %p101 = scmp.ne.s32.totalorder %s89, %s90
      %p102 = scmp.eq.s32.totalorder %s26, 1
      %p103 = por %p101, %p102
      %p105 = scmp.ne.s32.totalorder %s90, %s104
      %p106 = scmp.eq.s32.totalorder %s26, 0
      %p107 = por %p105, %p106
      %s108 = ssub.s32 %s28, %s35
      %p109 = scmp.eq.s32.totalorder %s108, 0
      %s111 = sadd.s32 %s110, 1
      %s112 = scalar_select %p109, %s110, %s111
      %p115 = pneg %p109
      %p116 = scmp.eq.s32.totalorder %s20, 1
      %p117 = por %p115, %p116
      %p118 = scmp.ne.s32.totalorder %s110, %s113
      %p119 = scmp.eq.s32.totalorder %s20, 0
      %p120 = por %p118, %p119
      %p121 = scmp.ne.s32.totalorder %s110, %s113
      %p122 = scmp.eq.s32.totalorder %s25, 1
      %p123 = por %p121, %p122
      %p124 = scmp.ne.s32.totalorder %s113, %s114
      %p125 = scmp.eq.s32.totalorder %s25, 0
      %p126 = por %p124, %p125
      %p127 = scmp.ne.s32.totalorder %s113, %s114
      %p128 = scmp.eq.s32.totalorder %s26, 1
      %p129 = por %p127, %p128
      %p131 = scmp.ne.s32.totalorder %s114, %s130
      %p132 = scmp.eq.s32.totalorder %s26, 0
      %p133 = por %p131, %p132
      %s134 = ssub.s32 %s28, %s35
      %p135 = scmp.eq.s32.totalorder %s134, 0
      %s137 = sadd.s32 %s136, 1
      %s138 = scalar_select %p135, %s136, %s137
      %p141 = pneg %p135
      %p142 = scmp.eq.s32.totalorder %s20, 1
      %p143 = por %p141, %p142
      %p144 = scmp.ne.s32.totalorder %s136, %s139
      %p145 = scmp.eq.s32.totalorder %s20, 0
      %p146 = por %p144, %p145
      %p147 = scmp.ne.s32.totalorder %s136, %s139
      %p148 = scmp.eq.s32.totalorder %s25, 1
      %p149 = por %p147, %p148
      %p150 = scmp.ne.s32.totalorder %s139, %s140
      %p151 = scmp.eq.s32.totalorder %s25, 0
      %p152 = por %p150, %p151
      %p153 = scmp.ne.s32.totalorder %s139, %s140
      %p154 = scmp.eq.s32.totalorder %s26, 1
      %p155 = por %p153, %p154
      %p157 = scmp.ne.s32.totalorder %s140, %s156
      %p158 = scmp.eq.s32.totalorder %s26, 0
      %p159 = por %p157, %p158
      %s160 = ssub.s32 %s28, %s35
      %p161 = scmp.eq.s32.totalorder %s160, 0
      %s163 = sadd.s32 %s162, 1
      %s164 = scalar_select %p161, %s162, %s163
      %p167 = pneg %p161
      %p168 = scmp.eq.s32.totalorder %s20, 1
      %p169 = por %p167, %p168
      %p170 = scmp.ne.s32.totalorder %s162, %s165
      %p171 = scmp.eq.s32.totalorder %s20, 0
      %p172 = por %p170, %p171
      %p173 = scmp.ne.s32.totalorder %s162, %s165
      %p174 = scmp.eq.s32.totalorder %s25, 1
      %p175 = por %p173, %p174
      %p176 = scmp.ne.s32.totalorder %s165, %s166
      %p177 = scmp.eq.s32.totalorder %s25, 0
      %p178 = por %p176, %p177
      %p179 = scmp.ne.s32.totalorder %s165, %s166
      %p180 = scmp.eq.s32.totalorder %s26, 1
      %p181 = por %p179, %p180
      %p183 = scmp.ne.s32.totalorder %s166, %s182
      %p184 = scmp.eq.s32.totalorder %s26, 0
      %p185 = por %p183, %p184
      %s186 = ssub.s32 %s28, %s35
      %p187 = scmp.eq.s32.totalorder %s186, 0
      %s189 = sadd.s32 %s188, 1
      %s190 = scalar_select %p187, %s188, %s189
      %p193 = pneg %p187
      %p194 = scmp.eq.s32.totalorder %s20, 1
      %p195 = por %p193, %p194
      %p196 = scmp.ne.s32.totalorder %s188, %s191
      %p197 = scmp.eq.s32.totalorder %s20, 0
      %p198 = por %p196, %p197
      %p199 = scmp.ne.s32.totalorder %s188, %s191
      %p200 = scmp.eq.s32.totalorder %s25, 1
      %p201 = por %p199, %p200
      %p202 = scmp.ne.s32.totalorder %s191, %s192
      %p203 = scmp.eq.s32.totalorder %s25, 0
      %p204 = por %p202, %p203
      %p205 = scmp.ne.s32.totalorder %s191, %s192
      %p206 = scmp.eq.s32.totalorder %s26, 1
      %p207 = por %p205, %p206
      %p209 = scmp.ne.s32.totalorder %s192, %s208
      %p210 = scmp.eq.s32.totalorder %s26, 0
      %p211 = por %p209, %p210
      %s212 = ssub.s32 %s28, %s35
      %p213 = scmp.eq.s32.totalorder %s212, 0
      %s215 = sadd.s32 %s214, 1
      %s216 = scalar_select %p213, %s214, %s215
      %p219 = pneg %p213
      %p220 = scmp.eq.s32.totalorder %s20, 1
      %p221 = por %p219, %p220
      %p222 = scmp.ne.s32.totalorder %s214, %s217
      %p223 = scmp.eq.s32.totalorder %s20, 0
      %p224 = por %p222, %p223
      %p225 = scmp.ne.s32.totalorder %s214, %s217
      %p226 = scmp.eq.s32.totalorder %s25, 1
      %p227 = por %p225, %p226
      %p228 = scmp.ne.s32.totalorder %s217, %s218
      %p229 = scmp.eq.s32.totalorder %s25, 0
      %p230 = por %p228, %p229
      %p231 = scmp.ne.s32.totalorder %s217, %s218
      %p232 = scmp.eq.s32.totalorder %s26, 1
      %p233 = por %p231, %p232
      %p235 = scmp.ne.s32.totalorder %s218, %s234
      %p236 = scmp.eq.s32.totalorder %s26, 0
      %p237 = por %p235, %p236
      %s239 = sadd.s32 %s238, 1
      %p242 = scmp.eq.s32.totalorder %s20, 1
      %p243 = scmp.ne.s32.totalorder %s238, %s240
      %p244 = scmp.eq.s32.totalorder %s20, 0
      %p245 = por %p243, %p244
      %p246 = scmp.ne.s32.totalorder %s238, %s240
      %p247 = scmp.eq.s32.totalorder %s25, 1
      %p248 = por %p246, %p247
      %p249 = scmp.ne.s32.totalorder %s240, %s241
      %p250 = scmp.eq.s32.totalorder %s25, 0
      %p251 = por %p249, %p250
      %p252 = scmp.ne.s32.totalorder %s240, %s241
      %p253 = scmp.eq.s32.totalorder %s26, 1
      %p254 = por %p252, %p253
      %p256 = scmp.ne.s32.totalorder %s241, %s255
      %p257 = scmp.eq.s32.totalorder %s26, 0
      %p258 = por %p256, %p257
      %s259 = ssub.s32 %s27, %s39
      %p260 = scmp.eq.s32.totalorder %s259, 0
      %s262 = sadd.s32 %s261, 1
      %s263 = scalar_select %p260, %s261, %s262
      %p266 = pneg %p260
      %p267 = scmp.eq.s32.totalorder %s20, 1
      %p268 = por %p266, %p267
      %p269 = scmp.ne.s32.totalorder %s261, %s264
      %p270 = scmp.eq.s32.totalorder %s20, 0
      %p271 = por %p269, %p270
      %p272 = scmp.ne.s32.totalorder %s261, %s264
      %p273 = scmp.eq.s32.totalorder %s25, 1
      %p274 = por %p272, %p273
      %p275 = scmp.ne.s32.totalorder %s264, %s265
      %p276 = scmp.eq.s32.totalorder %s25, 0
      %p277 = por %p275, %p276
      %p278 = scmp.ne.s32.totalorder %s264, %s265
      %p279 = scmp.eq.s32.totalorder %s26, 1
      %p280 = por %p278, %p279
      %p282 = scmp.ne.s32.totalorder %s265, %s281
      %p283 = scmp.eq.s32.totalorder %s26, 0
      %p284 = por %p282, %p283
      %p285 = scmp.le.s32.totalorder 1, %s20
      %p286 = scmp.lt.s32.totalorder %s20, 3
      %p287 = pnand %p285, %p286
      %p288 = pneg %p287
      // Predicated region
      $region9: #{tpu_custom_call.1} parent=5 // pred_check
        _
      $region10: #{tpu_custom_call.1} parent=5 // pred_check_branch
        %290 = sbr.rel (%p287) target = $region12
      $region11: #{tpu_custom_call.1} parent=5 // pred_region
        %s291 = ssub.s32 %s20, 1
        // Predicated region
        $region13: #{tpu_custom_call.1} parent=11 // pred_check
          %p292 = pneg %p58
        $region14: #{tpu_custom_call.1} parent=11 // pred_check_branch
          %294 = sbr.rel (%p292) target = $region16
        $region15: #{tpu_custom_call.1} parent=11 // pred_region
          %s295 = smul.u32 2, %s29
          %s297 = ssub.s32 256, 256
          %298 = vsyncadd [#allocation4], %s297
          %s299 = smul.addr %s295, 128
          %s300 = scalar_lea.hbm %s0, %s299
          %s301 = sshll.u32 [#allocation3], 4
          %s302 = int_to_ptr.vmem [resolvable:$true] %s301
          %307 = dma.hbm_to_vmem [thread:$0]  %s300, 256, %s302, [#allocation4], 128, 128, 8
        $region16: #{tpu_custom_call.1} parent=11 // pred_fallthru
          _
        // Predicated region
        $region17: #{tpu_custom_call.1} parent=11 // pred_check
          %p308 = pneg %p79
        $region18: #{tpu_custom_call.1} parent=11 // pred_check_branch
          %310 = sbr.rel (%p308) target = $region20
        $region19: #{tpu_custom_call.1} parent=11 // pred_region
          _
        $region20: #{tpu_custom_call.1} parent=11 // pred_fallthru
          _
        // Predicated region
        $region21: #{tpu_custom_call.1} parent=11 // pred_check
          %p311 = pneg %p100
        $region22: #{tpu_custom_call.1} parent=11 // pred_check_branch
          %313 = sbr.rel (%p311) target = $region24
        $region23: #{tpu_custom_call.1} parent=11 // pred_region
          _
        $region24: #{tpu_custom_call.1} parent=11 // pred_fallthru
          _
        // Predicated region
        $region25: #{tpu_custom_call.1} parent=11 // pred_check
          %p314 = pneg %p251
        $region26: #{tpu_custom_call.1} parent=11 // pred_check_branch
          %316 = sbr.rel (%p314) target = $region28
        $region27: #{tpu_custom_call.1} parent=11 // pred_region
          _
        $region28: #{tpu_custom_call.1} parent=11 // pred_fallthru
          _
      $region12: #{tpu_custom_call.1} parent=5 // pred_fallthru
        _
      %p317 = scmp.lt.s32.totalorder %s20, 2
      // Predicated region
      $region29: #{tpu_custom_call.1} parent=5 // pred_check
        %p318 = pneg %p317
      $region30: #{tpu_custom_call.1} parent=5 // pred_check_branch
        %320 = sbr.rel (%p318) target = $region32
      $region31: #{tpu_custom_call.1} parent=5 // pred_region
        // Predicated region
        $region33: #{tpu_custom_call.1} parent=31 // pred_check
          %p321 = pneg %p120
        $region34: #{tpu_custom_call.1} parent=31 // pred_check_branch
          %323 = sbr.rel (%p321) target = $region36
        $region35: #{tpu_custom_call.1} parent=31 // pred_region
          %p324 = scmp.lt.s32.totalorder %s28, 1
          %s325 = scalar_select %p324, %s28, 1
          %s326 = smul.addr %s325, 16
          %s327 = smul.addr %s326, 4
          %s328 = scalar_lea.vmem %s3, %s327
        $region36: #{tpu_custom_call.1} parent=31 // pred_fallthru
          _
        // Predicated region
        $region37: #{tpu_custom_call.1} parent=31 // pred_check
          %p329 = pneg %p146
        $region38: #{tpu_custom_call.1} parent=31 // pred_check_branch
          %331 = sbr.rel (%p329) target = $region40
        $region39: #{tpu_custom_call.1} parent=31 // pred_region
          %p332 = scmp.lt.s32.totalorder %s28, 1
          %s333 = scalar_select %p332, %s28, 1
          %s334 = smul.addr %s333, 8
          %s335 = smul.addr %s334, 4
          %s336 = scalar_lea.vmem %s4, %s335
        $region40: #{tpu_custom_call.1} parent=31 // pred_fallthru
          _
        // Predicated region
        $region41: #{tpu_custom_call.1} parent=31 // pred_check
          %p337 = pneg %p172
        $region42: #{tpu_custom_call.1} parent=31 // pred_check_branch
          %339 = sbr.rel (%p337) target = $region44
        $region43: #{tpu_custom_call.1} parent=31 // pred_region
          %s340 = sand.u32 %s162, 1
          %s341 = scalar_lea.sflag [#allocation7], %s340
          %s342 = sand.u32 %s162, 1
          %s343 = smul.addr %s342, 32
          %s344 = scalar_lea.vmem [#allocation6], %s343
          %s346 = ssub.s32 512, 512
          %347 = vsyncadd %s341, %s346
          %s348 = smul.addr %s28, 8
          %s349 = smul.addr %s348, 64
          %s350 = scalar_lea.hbm %s5, %s349
          %s351 = sshll.u32 %s344, 4
          %s352 = int_to_ptr.vmem [resolvable:$true] %s351
          %357 = dma.hbm_to_vmem [thread:$0]  %s350, 512, %s352, %s341, 64, 64, 4
        $region44: #{tpu_custom_call.1} parent=31 // pred_fallthru
          _
        // Predicated region
        $region45: #{tpu_custom_call.1} parent=31 // pred_check
          %p358 = pneg %p198
        $region46: #{tpu_custom_call.1} parent=31 // pred_check_branch
          %360 = sbr.rel (%p358) target = $region48
        $region47: #{tpu_custom_call.1} parent=31 // pred_region
          %p361 = scmp.lt.s32.totalorder %s28, 1
          %s362 = scalar_select %p361, %s28, 1
          %s363 = smul.addr %s362, 16
          %s364 = smul.addr %s363, 4
          %s365 = scalar_lea.vmem %s6, %s364
        $region48: #{tpu_custom_call.1} parent=31 // pred_fallthru
          _
        // Predicated region
        $region49: #{tpu_custom_call.1} parent=31 // pred_check
          %p366 = pneg %p224
        $region50: #{tpu_custom_call.1} parent=31 // pred_check_branch
          %368 = sbr.rel (%p366) target = $region52
        $region51: #{tpu_custom_call.1} parent=31 // pred_region
          %p369 = scmp.lt.s32.totalorder %s28, 1
          %s370 = scalar_select %p369, %s28, 1
          %s371 = smul.addr %s370, 2
          %s372 = smul.addr %s371, 8
          %s373 = scalar_lea.vmem %s7, %s372
        $region52: #{tpu_custom_call.1} parent=31 // pred_fallthru
          _
      $region32: #{tpu_custom_call.1} parent=5 // pred_fallthru
        _
      %p374 = scmp.le.s32.totalorder 1, %s20
      %p375 = scmp.lt.s32.totalorder %s20, 3
      %p376 = pnand %p374, %p375
      %p377 = pneg %p376
      // Predicated region
      $region53: #{tpu_custom_call.1} parent=5 // pred_check
        _
      $region54: #{tpu_custom_call.1} parent=5 // pred_check_branch
        %379 = sbr.rel (%p376) target = $region56
      $region55: #{tpu_custom_call.1} parent=5 // pred_region
        %s380 = ssub.s32 %s20, 1
        // Predicated region
        $region57: #{tpu_custom_call.1} parent=55 // pred_check
          %p381 = pneg %p58
        $region58: #{tpu_custom_call.1} parent=55 // pred_check_branch
          %383 = sbr.rel (%p381) target = $region60
        $region59: #{tpu_custom_call.1} parent=55 // pred_region
          %384 = dma.done [#allocation4], 256
        $region60: #{tpu_custom_call.1} parent=55 // pred_fallthru
          _
        %s385 = sand.u32 %s165, 1
        %s386 = scalar_lea.sflag [#allocation7], %s385
        %s387 = sand.u32 %s165, 1
        %s388 = smul.addr %s387, 32
        %s389 = scalar_lea.vmem [#allocation6], %s388
        // Predicated region
        $region61: #{tpu_custom_call.1} parent=55 // pred_check
          %p390 = pneg %p178
        $region62: #{tpu_custom_call.1} parent=55 // pred_check_branch
          %392 = sbr.rel (%p390) target = $region64
        $region63: #{tpu_custom_call.1} parent=55 // pred_region
          %393 = dma.done %s386, 512
        $region64: #{tpu_custom_call.1} parent=55 // pred_fallthru
          _
        %p394 = pneg %p58
        %p395 = pneg %p55
        %p396 = pneg %p79
        %p397 = pneg %p76
        %p398 = pneg %p100
        %p399 = pneg %p97
        %p400 = scmp.lt.s32.totalorder %s30, 1
        %s401 = scalar_select %p400, %s30, 1
        %s402 = smul.addr %s401, 16
        %s403 = smul.addr %s402, 4
        %s404 = scalar_lea.vmem %s3, %s403
        %p405 = pneg %p126
        %p406 = pneg %p123
        %p407 = scmp.lt.s32.totalorder %s30, 1
        %s408 = scalar_select %p407, %s30, 1
        %s409 = smul.addr %s408, 8
        %s410 = smul.addr %s409, 4
        %s411 = scalar_lea.vmem %s4, %s410
        %p412 = pneg %p152
        %p413 = pneg %p149
        %s414 = sand.u32 %s165, 1
        %s415 = scalar_lea.sflag [#allocation7], %s414
        %s416 = sand.u32 %s165, 1
        %s417 = smul.addr %s416, 32
        %s418 = scalar_lea.vmem [#allocation6], %s417
        %p419 = pneg %p178
        %p420 = pneg %p175
        %p421 = scmp.lt.s32.totalorder %s30, 1
        %s422 = scalar_select %p421, %s30, 1
        %s423 = smul.addr %s422, 16
        %s424 = smul.addr %s423, 4
        %s425 = scalar_lea.vmem %s6, %s424
        %p426 = pneg %p204
        %p427 = pneg %p201
        %p428 = scmp.lt.s32.totalorder %s30, 1
        %s429 = scalar_select %p428, %s30, 1
        %s430 = smul.addr %s429, 2
        %s431 = smul.addr %s430, 8
        %s432 = scalar_lea.vmem %s7, %s431
        %p433 = pneg %p230
        %p434 = pneg %p227
        %p435 = pneg %p251
        %p436 = pneg %p248
        %p437 = pneg %p277
        %p438 = pneg %p274
        %s439 = smul.u32 2, %s29
        %p440 = scmp.lt.s32.totalorder %s30, 1
        %s441 = scalar_select %p440, %s30, 1
        %s442 = smul.addr %s441, 16
        %s443 = smul.addr %s442, 4
        %s444 = scalar_lea.vmem %s3, %s443
        %p445 = scmp.lt.s32.totalorder %s30, 1
        %s446 = scalar_select %p445, %s30, 1
        %s447 = smul.addr %s446, 8
        %s448 = smul.addr %s447, 4
        %s449 = scalar_lea.vmem %s4, %s448
        %p450 = scmp.lt.s32.totalorder %s30, 1
        %s451 = scalar_select %p450, %s30, 1
        %s452 = smul.addr %s451, 16
        %s453 = smul.addr %s452, 4
        %s454 = scalar_lea.vmem %s6, %s453
        %p455 = scmp.lt.s32.totalorder %s30, 1
        %s456 = scalar_select %p455, %s30, 1
        %s457 = smul.addr %s456, 2
        %s458 = smul.addr %s457, 8
        %s459 = scalar_lea.vmem %s7, %s458
        %p461 = scmp.eq.s32.totalorder %s30, 0
        // Predicated region
        $region65: #{tpu_custom_call.1} parent=55 // pred_check
          %p462 = pneg %p461
        $region66: #{tpu_custom_call.1} parent=55 // pred_check_branch
          %464 = sbr.rel (%p462) target = $region68
        $region67: #{tpu_custom_call.1} parent=55 // pred_region
          %v465 = vld [vmem:[%s1] sm:$0x1]
          %v466 = vld [vmem:[#allocation3] sm:$0xff]
          %v467 = vld [vmem:[#allocation3 + $0x8] sm:$0xff]
          %v470 = vrot.slane %v466, 7
          %v471 = vrot.slane %v467, 7
          %vm474 = vcmask 1040384
          %v475 = vsel %vm474, %v465, %v470
          %v476 = vsel %vm474, %v465, %v471
          %v477 = vld [vmem:[%s2] sm:$0xff]
          %v478 = vld [vmem:[%s2 + $0x8] sm:$0x1]
          %v479 = vadd.f32 %v475, %v477
          %v480 = vadd.f32 %v470, %v478
          %v481 = vadd.f32 %v476, %v477
          %v482 = vadd.f32 %v471, %v478
          %v487 = vcombine.high %v479, %v479
          %v489 = vunpack.c.l.s4 1966171168
          %v490 = vunpack.c.0.s8 %v489
          %v491 = vlaneseq
          %v492 = vshrl.u32 %v491, 7
          %v493 = vsub.s32 %v490, %v492
          %v494 = vrot.slane %v479, %v493
          %v496 = vunpack.c.l.s4 1966171168
          %v497 = vunpack.c.0.s8 %v496
          %v498 = vlaneseq
          %v499 = vshrl.u32 %v498, 7
          %v500 = vsub.s32 %v497, %v499
          %v501 = vrot.slane %v487, %v500
          %v502 = vcombine.high %v494, %v494
          %v503 = vcombine.high %v501, %v501
          %v505 = vunpack.c.l.s4 1966171168
          %v506 = vunpack.c.0.s8 %v505
          %v507 = vlaneseq
          %v508 = vshrl.u32 %v507, 7
          %v509 = vsub.s32 %v506, %v508
          %v510 = vrot.slane %v494, %v509
          %v512 = vunpack.c.l.s4 1966171168
          %v513 = vunpack.c.0.s8 %v512
          %v514 = vlaneseq
          %v515 = vshrl.u32 %v514, 7
          %v516 = vsub.s32 %v513, %v515
          %v517 = vrot.slane %v501, %v516
          %v519 = vunpack.c.l.s4 1966171168
          %v520 = vunpack.c.0.s8 %v519
          %v521 = vlaneseq
          %v522 = vshrl.u32 %v521, 7
          %v523 = vsub.s32 %v520, %v522
          %v524 = vrot.slane %v502, %v523
          %v526 = vunpack.c.l.s4 1966171168
          %v527 = vunpack.c.0.s8 %v526
          %v528 = vlaneseq
          %v529 = vshrl.u32 %v528, 7
          %v530 = vsub.s32 %v527, %v529
          %v531 = vrot.slane %v503, %v530
          %v532 = vcombine.high %v510, %v510
          %v533 = vcombine.high %v517, %v517
          %v534 = vcombine.high %v524, %v524
          %v535 = vcombine.high %v531, %v531
          %v537 = vunpack.c.l.s4 1966171168
          %v538 = vunpack.c.0.s8 %v537
          %v539 = vlaneseq
          %v540 = vshrl.u32 %v539, 7
          %v541 = vsub.s32 %v538, %v540
          %v542 = vrot.slane %v480, %v541
          %v544 = vunpack.c.l.s4 1966171168
          %v545 = vunpack.c.0.s8 %v544
          %v546 = vlaneseq
          %v547 = vshrl.u32 %v546, 7
          %v548 = vsub.s32 %v545, %v547
          %v549 = vrot.slane %v542, %v548
          %v550 = vcombine.high %v481, %v481
          %v552 = vunpack.c.l.s4 1966171168
          %v553 = vunpack.c.0.s8 %v552
          %v554 = vlaneseq
          %v555 = vshrl.u32 %v554, 7
          %v556 = vsub.s32 %v553, %v555
          %v557 = vrot.slane %v481, %v556
          %v559 = vunpack.c.l.s4 1966171168
          %v560 = vunpack.c.0.s8 %v559
          %v561 = vlaneseq
          %v562 = vshrl.u32 %v561, 7
          %v563 = vsub.s32 %v560, %v562
          %v564 = vrot.slane %v550, %v563
          %v565 = vcombine.high %v557, %v557
          %v566 = vcombine.high %v564, %v564
          %v568 = vunpack.c.l.s4 1966171168
          %v569 = vunpack.c.0.s8 %v568
          %v570 = vlaneseq
          %v571 = vshrl.u32 %v570, 7
          %v572 = vsub.s32 %v569, %v571
          %v573 = vrot.slane %v557, %v572
          %v575 = vunpack.c.l.s4 1966171168
          %v576 = vunpack.c.0.s8 %v575
          %v577 = vlaneseq
          %v578 = vshrl.u32 %v577, 7
          %v579 = vsub.s32 %v576, %v578
          %v580 = vrot.slane %v564, %v579
          %v582 = vunpack.c.l.s4 1966171168
          %v583 = vunpack.c.0.s8 %v582
          %v584 = vlaneseq
          %v585 = vshrl.u32 %v584, 7
          %v586 = vsub.s32 %v583, %v585
          %v587 = vrot.slane %v565, %v586
          %v589 = vunpack.c.l.s4 1966171168
          %v590 = vunpack.c.0.s8 %v589
          %v591 = vlaneseq
          %v592 = vshrl.u32 %v591, 7
          %v593 = vsub.s32 %v590, %v592
          %v594 = vrot.slane %v566, %v593
          %v595 = vcombine.high %v573, %v573
          %v596 = vcombine.high %v580, %v580
          %v597 = vcombine.high %v587, %v587
          %v598 = vcombine.high %v594, %v594
          %v600 = vunpack.c.l.s4 1966171168
          %v601 = vunpack.c.0.s8 %v600
          %v602 = vlaneseq
          %v603 = vshrl.u32 %v602, 7
          %v604 = vsub.s32 %v601, %v603
          %v605 = vrot.slane %v482, %v604
          %v607 = vunpack.c.l.s4 1966171168
          %v608 = vunpack.c.0.s8 %v607
          %v609 = vlaneseq
          %v610 = vshrl.u32 %v609, 7
          %v611 = vsub.s32 %v608, %v610
          %v612 = vrot.slane %v605, %v611
          %v613 = vcombine.low %v510, %v524
          %v614 = vcombine.low %v532, %v534
          %v615 = vcombine.low %v517, %v531
          %v616 = vcombine.low %v533, %v535
          %v618 = vunpack.c.l.s4 1966171168
          %v619 = vunpack.c.0.s8 %v618
          %v620 = vlaneseq
          %v621 = vshrl.u32 %v620, 7
          %v622 = vsub.s32 %v619, %v621
          %v623 = vrot.slane %v613, %v622
          %v625 = vunpack.c.l.s4 1966171168
          %v626 = vunpack.c.0.s8 %v625
          %v627 = vlaneseq
          %v628 = vshrl.u32 %v627, 7
          %v629 = vsub.s32 %v626, %v628
          %v630 = vrot.slane %v614, %v629
          %v632 = vunpack.c.l.s4 1966171168
          %v633 = vunpack.c.0.s8 %v632
          %v634 = vlaneseq
          %v635 = vshrl.u32 %v634, 7
          %v636 = vsub.s32 %v633, %v635
          %v637 = vrot.slane %v615, %v636
          %v639 = vunpack.c.l.s4 1966171168
          %v640 = vunpack.c.0.s8 %v639
          %v641 = vlaneseq
          %v642 = vshrl.u32 %v641, 7
          %v643 = vsub.s32 %v640, %v642
          %v644 = vrot.slane %v616, %v643
          %v645 = vcombine.low %v623, %v630
          %v646 = vcombine.low %v637, %v644
          %v648 = vunpack.c.l.s4 1966171168
          %v649 = vunpack.c.0.s8 %v648
          %v650 = vlaneseq
          %v651 = vshrl.u32 %v650, 7
          %v652 = vsub.s32 %v649, %v651
          %v653 = vrot.slane %v645, %v652
          %v655 = vunpack.c.l.s4 1966171168
          %v656 = vunpack.c.0.s8 %v655
          %v657 = vlaneseq
          %v658 = vshrl.u32 %v657, 7
          %v659 = vsub.s32 %v656, %v658
          %v660 = vrot.slane %v646, %v659
          %v661 = vcombine.low %v653, %v660
          %v662 = vcombine.low %v549, %v573
          %v663 = vcombine.low %v587, %v595
          %v664 = vcombine.low %v597, %v580
          %v665 = vcombine.low %v594, %v596
          %v667 = vunpack.c.l.s4 1966171168
          %v668 = vunpack.c.0.s8 %v667
          %v669 = vlaneseq
          %v670 = vshrl.u32 %v669, 7
          %v671 = vsub.s32 %v668, %v670
          %v672 = vrot.slane %v662, %v671
          %v674 = vunpack.c.l.s4 1966171168
          %v675 = vunpack.c.0.s8 %v674
          %v676 = vlaneseq
          %v677 = vshrl.u32 %v676, 7
          %v678 = vsub.s32 %v675, %v677
          %v679 = vrot.slane %v663, %v678
          %v681 = vunpack.c.l.s4 1966171168
          %v682 = vunpack.c.0.s8 %v681
          %v683 = vlaneseq
          %v684 = vshrl.u32 %v683, 7
          %v685 = vsub.s32 %v682, %v684
          %v686 = vrot.slane %v664, %v685
          %v688 = vunpack.c.l.s4 1966171168
          %v689 = vunpack.c.0.s8 %v688
          %v690 = vlaneseq
          %v691 = vshrl.u32 %v690, 7
          %v692 = vsub.s32 %v689, %v691
          %v693 = vrot.slane %v665, %v692
          %v694 = vcombine.low %v672, %v679
          %v695 = vcombine.low %v686, %v693
          %v697 = vunpack.c.l.s4 1966171168
          %v698 = vunpack.c.0.s8 %v697
          %v699 = vlaneseq
          %v700 = vshrl.u32 %v699, 7
          %v701 = vsub.s32 %v698, %v700
          %v702 = vrot.slane %v694, %v701
          %v704 = vunpack.c.l.s4 1966171168
          %v705 = vunpack.c.0.s8 %v704
          %v706 = vlaneseq
          %v707 = vshrl.u32 %v706, 7
          %v708 = vsub.s32 %v705, %v707
          %v709 = vrot.slane %v695, %v708
          %v710 = vcombine.low %v702, %v709
          %v711 = vcombine.low %v598, %v612
          %v713 = vunpack.c.l.s4 1966171168
          %v714 = vunpack.c.0.s8 %v713
          %v715 = vlaneseq
          %v716 = vshrl.u32 %v715, 7
          %v717 = vsub.s32 %v714, %v716
          %v718 = vrot.slane %v711, %v717
          %v720 = vunpack.c.l.s4 1966171168
          %v721 = vunpack.c.0.s8 %v720
          %v722 = vlaneseq
          %v723 = vshrl.u32 %v722, 7
          %v724 = vsub.s32 %v721, %v723
          %v725 = vrot.slane %v718, %v724
          %vm729 = vcmask 523264
          %730 = vst.msk [vmem:[#allocation2] sm:$0xff] %vm729, %v661
          %731 = vst.msk [vmem:[#allocation2 + $0x8] sm:$0xff] %vm729, %v710
          %vm732 = vcmask 517120
          %733 = vst.msk [vmem:[#allocation2 + $0x10] sm:$0x3] %vm732, %v725
        $region68: #{tpu_custom_call.1} parent=55 // pred_fallthru
          _
        %v734 = vld [vmem:[#allocation2] sm:$0xff]
        %v735 = vld [vmem:[#allocation2 + $0x8] sm:$0xff]
        %v736 = vld [vmem:[#allocation2 + $0x10] sm:$0x3]
        %v737 = vld [vmem:[%s459] sm:$0xff]
        %v738 = vld [vmem:[%s459 + $0x8] sm:$0xff]
        %v739 = vpack.c.bf16 %v735, %v734
        %v740 = vpack.c.bf16 %v736, %v736
        %v741 = vld [vmem:[%s444] sm:$0xff]
        %v742 = vld [vmem:[%s444 + $0x8] sm:$0xff]
        %v743 = vld [vmem:[%s444 + $0x10] sm:$0xff]
        %v744 = vld [vmem:[%s444 + $0x18] sm:$0xff]
        %v745 = vld [vmem:[%s444 + $0x20] sm:$0xff]
        %v746 = vld [vmem:[%s444 + $0x28] sm:$0xff]
        %v747 = vld [vmem:[%s444 + $0x30] sm:$0xff]
        %v748 = vld [vmem:[%s444 + $0x38] sm:$0xff]
        %v749 = vlaneseq
        %v750 = vshrl.u32 %v749, 7
        %v751 = vsub.s32 0, %v750
        %v752 = vrot.slane %v737, %v751
        %v753 = vlaneseq
        %v754 = vshrl.u32 %v753, 7
        %v755 = vsub.s32 0, %v754
        %v756 = vrot.slane %v738, %v755
        %v765 = vunpack.c.l.b16 %v741
        %v766 = vunpack.c.h.b16 %v741
        %v767 = vunpack.c.l.b16 %v742
        %v768 = vunpack.c.h.b16 %v742
        %v769 = vunpack.c.l.b16 %v743
        %v770 = vunpack.c.h.b16 %v743
        %v771 = vunpack.c.l.b16 %v744
        %v772 = vunpack.c.h.b16 %v744
        %v773 = vunpack.c.l.b16 %v745
        %v774 = vunpack.c.h.b16 %v745
        %v775 = vunpack.c.l.b16 %v746
        %v776 = vunpack.c.h.b16 %v746
        %v777 = vunpack.c.l.b16 %v747
        %v778 = vunpack.c.h.b16 %v747
        %v779 = vunpack.c.l.b16 %v748
        %v780 = vunpack.c.h.b16 %v748
        %v781 = vpack.c.b16 %v767, %v765
        %v782 = vpack.c.b16 %v768, %v766
        %v783 = vpack.c.b16 %v771, %v769
        %v784 = vpack.c.b16 %v772, %v770
        %v785 = vpack.c.b16 %v775, %v773
        %v786 = vpack.c.b16 %v776, %v774
        %v787 = vpack.c.b16 %v779, %v777
        %v788 = vpack.c.b16 %v780, %v778
        %vm797 = vcmask 523264
        %v799 = vsel %vm797, %v739, 0
        %v802 = vsel %vm797, %v740, 0
        %804 = vmatprep.subr.bf16.mxu0 %v782
        %805 = vmatpush1.bf16.msra.mxu0 %v781
        %806 = vmatprep.subr.bf16.mxu0 %v784
        %807 = vmatpush1.bf16.msra.mxu0 %v783
        %808 = vmatprep.subr.bf16.mxu0 %v786
        %809 = vmatpush1.bf16.msra.mxu0 %v785
        %810 = vmatprep.subr.bf16.mxu0 %v788
        %811 = vmatpush1.bf16.msra.mxu0 %v787
        %812 = vmatprep.subr.bf16.mxu0 0
        %813 = vmatpush1.bf16.msra.mxu0 0
        %814 = vmatprep.subr.bf16.mxu0 0
        %815 = vmatpush1.bf16.msra.mxu0 0
        %816 = vmatprep.subr.bf16.mxu0 0
        %817 = vmatpush1.bf16.msra.mxu0 0
        %818 = vmatprep.subr.bf16.mxu0 0
        %819 = vmatpush1.bf16.msra.mxu0 0
        %820 = vmatprep.subr.bf16.mxu0 0
        %821 = vmatpush1.bf16.msra.mxu0 0
        %822 = vmatprep.subr.bf16.mxu0 0
        %823 = vmatpush1.bf16.msra.mxu0 0
        %824 = vmatprep.subr.bf16.mxu0 0
        %825 = vmatpush1.bf16.msra.mxu0 0
        %826 = vmatprep.subr.bf16.mxu0 0
        %827 = vmatpush1.bf16.msra.mxu0 0
        %828 = vmatprep.subr.bf16.mxu0 0
        %829 = vmatpush1.bf16.msra.mxu0 0
        %830 = vmatprep.subr.bf16.mxu0 0
        %831 = vmatpush1.bf16.msra.mxu0 0
        %832 = vmatprep.subr.bf16.mxu0 0
        %833 = vmatpush1.bf16.msra.mxu0 0
        %834 = vmatprep.subr.bf16.mxu0 0
        %835 = vmatpush1.bf16.msra.mxu0 0
        %836 = vmatprep.mubr.bf16.mxu0 0
        %837 = vmatmul.mubr.bf16.gmra.mrb[0].mxu0 %v799
        %v838 = vpop.f32.mrb[0].mxu0
        %v839 = vadd.f32 %v752, %v838
        %v840 = vpop.f32.mrb[0].mxu0
        %v841 = vadd.f32 %v756, %v840
        %v842 = vpop.f32.mrb[0].mxu0
        %v843 = vadd.f32 %v752, %v842
        %v844 = vpop.f32.mrb[0].mxu0
        %v845 = vadd.f32 %v756, %v844
        %846 = vmatprep.mubr.bf16.mxu0 0
        %847 = vmatmul.mubr.bf16.gmra.mrb[0].mxu0 %v802
        %v848 = vpop.f32.mrb[0].mxu0
        %v849 = vadd.f32 %v752, %v848
        %v850 = vpop.f32.mrb[0].mxu0
        %v851 = vadd.f32 %v756, %v850
        %v852 = vpop.f32.mrb[0].mxu0
        %v853 = vpop.f32.mrb[0].mxu0
        %854 = vdwg.mxu0
        %v861 = vcombine.low %v839, %v841
        %v862 = vcombine.high %v839, %v841
        %v864 = vunpack.c.l.s4 1966171168
        %v865 = vunpack.c.0.s8 %v864
        %v866 = vlaneseq
        %v867 = vshrl.u32 %v866, 7
        %v868 = vsub.s32 %v865, %v867
        %v869 = vrot.slane %v861, %v868
        %v871 = vunpack.c.l.s4 1966171168
        %v872 = vunpack.c.0.s8 %v871
        %v873 = vlaneseq
        %v874 = vshrl.u32 %v873, 7
        %v875 = vsub.s32 %v872, %v874
        %v876 = vrot.slane %v862, %v875
        %v877 = vcombine.high %v869, %v869
        %v878 = vcombine.high %v876, %v876
        %v880 = vunpack.c.l.s4 1966171168
        %v881 = vunpack.c.0.s8 %v880
        %v882 = vlaneseq
        %v883 = vshrl.u32 %v882, 7
        %v884 = vsub.s32 %v881, %v883
        %v885 = vrot.slane %v869, %v884
        %v887 = vunpack.c.l.s4 1966171168
        %v888 = vunpack.c.0.s8 %v887
        %v889 = vlaneseq
        %v890 = vshrl.u32 %v889, 7
        %v891 = vsub.s32 %v888, %v890
        %v892 = vrot.slane %v876, %v891
        %v894 = vunpack.c.l.s4 1966171168
        %v895 = vunpack.c.0.s8 %v894
        %v896 = vlaneseq
        %v897 = vshrl.u32 %v896, 7
        %v898 = vsub.s32 %v895, %v897
        %v899 = vrot.slane %v877, %v898
        %v901 = vunpack.c.l.s4 1966171168
        %v902 = vunpack.c.0.s8 %v901
        %v903 = vlaneseq
        %v904 = vshrl.u32 %v903, 7
        %v905 = vsub.s32 %v902, %v904
        %v906 = vrot.slane %v878, %v905
        %v907 = vcombine.high %v885, %v885
        %v908 = vcombine.high %v892, %v892
        %v909 = vcombine.high %v899, %v899
        %v910 = vcombine.high %v906, %v906
        %v911 = vcombine.low %v843, %v845
        %v912 = vcombine.high %v843, %v845
        %v914 = vunpack.c.l.s4 1966171168
        %v915 = vunpack.c.0.s8 %v914
        %v916 = vlaneseq
        %v917 = vshrl.u32 %v916, 7
        %v918 = vsub.s32 %v915, %v917
        %v919 = vrot.slane %v911, %v918
        %v921 = vunpack.c.l.s4 1966171168
        %v922 = vunpack.c.0.s8 %v921
        %v923 = vlaneseq
        %v924 = vshrl.u32 %v923, 7
        %v925 = vsub.s32 %v922, %v924
        %v926 = vrot.slane %v912, %v925
        %v927 = vcombine.high %v919, %v919
        %v928 = vcombine.high %v926, %v926
        %v930 = vunpack.c.l.s4 1966171168
        %v931 = vunpack.c.0.s8 %v930
        %v932 = vlaneseq
        %v933 = vshrl.u32 %v932, 7
        %v934 = vsub.s32 %v931, %v933
        %v935 = vrot.slane %v919, %v934
        %v937 = vunpack.c.l.s4 1966171168
        %v938 = vunpack.c.0.s8 %v937
        %v939 = vlaneseq
        %v940 = vshrl.u32 %v939, 7
        %v941 = vsub.s32 %v938, %v940
        %v942 = vrot.slane %v926, %v941
        %v944 = vunpack.c.l.s4 1966171168
        %v945 = vunpack.c.0.s8 %v944
        %v946 = vlaneseq
        %v947 = vshrl.u32 %v946, 7
        %v948 = vsub.s32 %v945, %v947
        %v949 = vrot.slane %v927, %v948
        %v951 = vunpack.c.l.s4 1966171168
        %v952 = vunpack.c.0.s8 %v951
        %v953 = vlaneseq
        %v954 = vshrl.u32 %v953, 7
        %v955 = vsub.s32 %v952, %v954
        %v956 = vrot.slane %v928, %v955
        %v957 = vcombine.high %v935, %v935
        %v958 = vcombine.high %v942, %v942
        %v959 = vcombine.high %v949, %v949
        %v960 = vcombine.high %v956, %v956
        %v961 = vcombine.low %v849, %v851
        %v963 = vunpack.c.l.s4 1966171168
        %v964 = vunpack.c.0.s8 %v963
        %v965 = vlaneseq
        %v966 = vshrl.u32 %v965, 7
        %v967 = vsub.s32 %v964, %v966
        %v968 = vrot.slane %v961, %v967
        %v969 = vcombine.high %v968, %v968
        %v971 = vunpack.c.l.s4 1966171168
        %v972 = vunpack.c.0.s8 %v971
        %v973 = vlaneseq
        %v974 = vshrl.u32 %v973, 7
        %v975 = vsub.s32 %v972, %v974
        %v976 = vrot.slane %v968, %v975
        %v978 = vunpack.c.l.s4 1966171168
        %v979 = vunpack.c.0.s8 %v978
        %v980 = vlaneseq
        %v981 = vshrl.u32 %v980, 7
        %v982 = vsub.s32 %v979, %v981
        %v983 = vrot.slane %v969, %v982
        %v984 = vcombine.low %v885, %v899
        %v985 = vcombine.low %v907, %v909
        %v986 = vcombine.low %v892, %v906
        %v987 = vcombine.low %v908, %v910
        %v989 = vunpack.c.l.s4 1966171168
        %v990 = vunpack.c.0.s8 %v989
        %v991 = vlaneseq
        %v992 = vshrl.u32 %v991, 7
        %v993 = vsub.s32 %v990, %v992
        %v994 = vrot.slane %v984, %v993
        %v996 = vunpack.c.l.s4 1966171168
        %v997 = vunpack.c.0.s8 %v996
        %v998 = vlaneseq
        %v999 = vshrl.u32 %v998, 7
        %v1000 = vsub.s32 %v997, %v999
        %v1001 = vrot.slane %v985, %v1000
        %v1003 = vunpack.c.l.s4 1966171168
        %v1004 = vunpack.c.0.s8 %v1003
        %v1005 = vlaneseq
        %v1006 = vshrl.u32 %v1005, 7
        %v1007 = vsub.s32 %v1004, %v1006
        %v1008 = vrot.slane %v986, %v1007
        %v1010 = vunpack.c.l.s4 1966171168
        %v1011 = vunpack.c.0.s8 %v1010
        %v1012 = vlaneseq
        %v1013 = vshrl.u32 %v1012, 7
        %v1014 = vsub.s32 %v1011, %v1013
        %v1015 = vrot.slane %v987, %v1014
        %v1016 = vcombine.low %v994, %v1001
        %v1017 = vcombine.high %v994, %v1001
        %v1018 = vcombine.low %v1008, %v1015
        %v1019 = vcombine.high %v1008, %v1015
        %v1021 = vunpack.c.l.s4 1966171168
        %v1022 = vunpack.c.0.s8 %v1021
        %v1023 = vlaneseq
        %v1024 = vshrl.u32 %v1023, 7
        %v1025 = vsub.s32 %v1022, %v1024
        %v1026 = vrot.slane %v1016, %v1025
        %v1028 = vunpack.c.l.s4 1966171168
        %v1029 = vunpack.c.0.s8 %v1028
        %v1030 = vlaneseq
        %v1031 = vshrl.u32 %v1030, 7
        %v1032 = vsub.s32 %v1029, %v1031
        %v1033 = vrot.slane %v1017, %v1032
        %v1035 = vunpack.c.l.s4 1966171168
        %v1036 = vunpack.c.0.s8 %v1035
        %v1037 = vlaneseq
        %v1038 = vshrl.u32 %v1037, 7
        %v1039 = vsub.s32 %v1036, %v1038
        %v1040 = vrot.slane %v1018, %v1039
        %v1042 = vunpack.c.l.s4 1966171168
        %v1043 = vunpack.c.0.s8 %v1042
        %v1044 = vlaneseq
        %v1045 = vshrl.u32 %v1044, 7
        %v1046 = vsub.s32 %v1043, %v1045
        %v1047 = vrot.slane %v1019, %v1046
        %v1048 = vcombine.low %v1026, %v1040
        %v1049 = vcombine.low %v1033, %v1047
        %v1051 = vunpack.c.l.s4 1966171168
        %v1052 = vunpack.c.0.s8 %v1051
        %v1053 = vlaneseq
        %v1054 = vshrl.u32 %v1053, 7
        %v1055 = vsub.s32 %v1052, %v1054
        %v1056 = vrot.slane %v935, %v1055
        %v1057 = vcombine.high %v1056, %v1056
        %v1059 = vunpack.c.l.s4 1966171168
        %v1060 = vunpack.c.0.s8 %v1059
        %v1061 = vlaneseq
        %v1062 = vshrl.u32 %v1061, 7
        %v1063 = vsub.s32 %v1060, %v1062
        %v1064 = vrot.slane %v1056, %v1063
        %v1066 = vunpack.c.l.s4 1966171168
        %v1067 = vunpack.c.0.s8 %v1066
        %v1068 = vlaneseq
        %v1069 = vshrl.u32 %v1068, 7
        %v1070 = vsub.s32 %v1067, %v1069
        %v1071 = vrot.slane %v1057, %v1070
        %v1072 = vcombine.low %v949, %v957
        %v1073 = vcombine.low %v959, %v942
        %v1074 = vcombine.low %v956, %v958
        %v1075 = vcombine.low %v960, %v976
        %v1077 = vunpack.c.l.s4 1966171168
        %v1078 = vunpack.c.0.s8 %v1077
        %v1079 = vlaneseq
        %v1080 = vshrl.u32 %v1079, 7
        %v1081 = vsub.s32 %v1078, %v1080
        %v1082 = vrot.slane %v1072, %v1081
        %v1084 = vunpack.c.l.s4 1966171168
        %v1085 = vunpack.c.0.s8 %v1084
        %v1086 = vlaneseq
        %v1087 = vshrl.u32 %v1086, 7
        %v1088 = vsub.s32 %v1085, %v1087
        %v1089 = vrot.slane %v1073, %v1088
        %v1091 = vunpack.c.l.s4 1966171168
        %v1092 = vunpack.c.0.s8 %v1091
        %v1093 = vlaneseq
        %v1094 = vshrl.u32 %v1093, 7
        %v1095 = vsub.s32 %v1092, %v1094
        %v1096 = vrot.slane %v1074, %v1095
        %v1098 = vunpack.c.l.s4 1966171168
        %v1099 = vunpack.c.0.s8 %v1098
        %v1100 = vlaneseq
        %v1101 = vshrl.u32 %v1100, 7
        %v1102 = vsub.s32 %v1099, %v1101
        %v1103 = vrot.slane %v1075, %v1102
        %v1104 = vcombine.low %v1082, %v1089
        %v1105 = vcombine.high %v1082, %v1089
        %v1106 = vcombine.low %v1096, %v1103
        %v1107 = vcombine.high %v1096, %v1103
        %v1109 = vunpack.c.l.s4 1966171168
        %v1110 = vunpack.c.0.s8 %v1109
        %v1111 = vlaneseq
        %v1112 = vshrl.u32 %v1111, 7
        %v1113 = vsub.s32 %v1110, %v1112
        %v1114 = vrot.slane %v1104, %v1113
        %v1116 = vunpack.c.l.s4 1966171168
        %v1117 = vunpack.c.0.s8 %v1116
        %v1118 = vlaneseq
        %v1119 = vshrl.u32 %v1118, 7
        %v1120 = vsub.s32 %v1117, %v1119
        %v1121 = vrot.slane %v1105, %v1120
        %v1123 = vunpack.c.l.s4 1966171168
        %v1124 = vunpack.c.0.s8 %v1123
        %v1125 = vlaneseq
        %v1126 = vshrl.u32 %v1125, 7
        %v1127 = vsub.s32 %v1124, %v1126
        %v1128 = vrot.slane %v1106, %v1127
        %v1130 = vunpack.c.l.s4 1966171168
        %v1131 = vunpack.c.0.s8 %v1130
        %v1132 = vlaneseq
        %v1133 = vshrl.u32 %v1132, 7
        %v1134 = vsub.s32 %v1131, %v1133
        %v1135 = vrot.slane %v1107, %v1134
        %v1136 = vcombine.low %v1114, %v1128
        %v1137 = vcombine.low %v1121, %v1135
        %v1139 = vunpack.c.l.s4 1966171168
        %v1140 = vunpack.c.0.s8 %v1139
        %v1141 = vlaneseq
        %v1142 = vshrl.u32 %v1141, 7
        %v1143 = vsub.s32 %v1140, %v1142
        %v1144 = vrot.slane %v983, %v1143
        %v1145 = vcombine.high %v1144, %v1144
        %v1147 = vunpack.c.l.s4 1966171168
        %v1148 = vunpack.c.0.s8 %v1147
        %v1149 = vlaneseq
        %v1150 = vshrl.u32 %v1149, 7
        %v1151 = vsub.s32 %v1148, %v1150
        %v1152 = vrot.slane %v1144, %v1151
        %v1154 = vunpack.c.l.s4 1966171168
        %v1155 = vunpack.c.0.s8 %v1154
        %v1156 = vlaneseq
        %v1157 = vshrl.u32 %v1156, 7
        %v1158 = vsub.s32 %v1155, %v1157
        %v1159 = vrot.slane %v1145, %v1158
        %v1168 = vpack.c.bf16 %v1064, %v1048
        %v1169 = vpack.c.bf16 %v1071, %v1049
        %v1170 = vpack.c.bf16 %v1152, %v1136
        %v1171 = vpack.c.bf16 %v1159, %v1137
        %1173 = vrot.lane.b32.xlu0 %v1168, 64
        %v1174 = vpop.permute.xlu0 %1173
        %vm1175 = vcmask 64512
        %v1177 = vsel %vm1175, %v1168, 0
        %v1180 = vsel %vm1175, %v1174, 0
        %1182 = vmatprep.subr.bf16.mxu0 0
        %1183 = vmatpush1.bf16.xpose.msra.mxu0 %v1180
        %1184 = vmatprep.subr.bf16.mxu0 0
        %1185 = vmatpush1.bf16.xpose.msra.mxu0 0
        %1186 = vmatprep.subr.bf16.mxu0 0
        %1187 = vmatpush1.bf16.xpose.msra.mxu0 0
        %1188 = vmatprep.subr.bf16.mxu0 0
        %1189 = vmatpush1.bf16.xpose.msra.mxu0 0
        %1190 = vmatprep.subr.bf16.mxu0 0
        %1191 = vmatpush1.bf16.xpose.msra.mxu0 0
        %1192 = vmatprep.subr.bf16.mxu0 0
        %1193 = vmatpush1.bf16.xpose.msra.mxu0 0
        %1194 = vmatprep.subr.bf16.mxu0 0
        %1195 = vmatpush1.bf16.xpose.msra.mxu0 0
        %1196 = vmatprep.subr.bf16.mxu0 0
        %1197 = vmatpush1.bf16.xpose.msra.mxu0 0
        %1198 = vmatprep.subr.bf16.mxu0 0
        %1199 = vmatpush1.bf16.xpose.msra.mxu0 0
        %1200 = vmatprep.subr.bf16.mxu0 0
        %1201 = vmatpush1.bf16.xpose.msra.mxu0 0
        %1202 = vmatprep.subr.bf16.mxu0 0
        %1203 = vmatpush1.bf16.xpose.msra.mxu0 0
        %1204 = vmatprep.subr.bf16.mxu0 0
        %1205 = vmatpush1.bf16.xpose.msra.mxu0 0
        %1206 = vmatprep.subr.bf16.mxu0 0
        %1207 = vmatpush1.bf16.xpose.msra.mxu0 0
        %1208 = vmatprep.subr.bf16.mxu0 0
        %1209 = vmatpush1.bf16.xpose.msra.mxu0 0
        %1210 = vmatprep.subr.bf16.mxu0 0
        %1211 = vmatpush1.bf16.xpose.msra.mxu0 0
        %1212 = vmatprep.subr.bf16.mxu0 0
        %1213 = vmatpush1.bf16.xpose.msra.mxu0 0
        %1214 = vmatprep.mubr.bf16.mxu0 0
        %1215 = vmatmul.mubr.bf16.gmra.mrb[0].mxu0 %v1177
        %v1216 = vpop.f32.mrb[0].mxu0
        %v1217 = vadd.f32 0.0, %v1216
        %v1218 = vpop.f32.mrb[0].mxu0
        %v1219 = vpop.f32.mrb[0].mxu0
        %v1220 = vadd.f32 0.0, %v1219
        %v1221 = vpop.f32.mrb[0].mxu0
        %1222 = vdwg.mxu0
        %1224 = vrot.lane.b32.xlu0 %v1170, 64
        %v1225 = vpop.permute.xlu0 %1224
        %v1227 = vsel %vm1175, %v1170, 0
        %v1230 = vsel %vm1175, %v1225, 0
        %1232 = vmatprep.subr.bf16.mxu0 0
        %1233 = vmatpush1.bf16.xpose.msra.mxu0 %v1230
        %1234 = vmatprep.subr.bf16.mxu0 0
        %1235 = vmatpush1.bf16.xpose.msra.mxu0 0
        %1236 = vmatprep.subr.bf16.mxu0 0
        %1237 = vmatpush1.bf16.xpose.msra.mxu0 0
        %1238 = vmatprep.subr.bf16.mxu0 0
        %1239 = vmatpush1.bf16.xpose.msra.mxu0 0
        %1240 = vmatprep.subr.bf16.mxu0 0
        %1241 = vmatpush1.bf16.xpose.msra.mxu0 0
        %1242 = vmatprep.subr.bf16.mxu0 0
        %1243 = vmatpush1.bf16.xpose.msra.mxu0 0
        %1244 = vmatprep.subr.bf16.mxu0 0
        %1245 = vmatpush1.bf16.xpose.msra.mxu0 0
        %1246 = vmatprep.subr.bf16.mxu0 0
        %1247 = vmatpush1.bf16.xpose.msra.mxu0 0
        %1248 = vmatprep.subr.bf16.mxu0 0
        %1249 = vmatpush1.bf16.xpose.msra.mxu0 0
        %1250 = vmatprep.subr.bf16.mxu0 0
        %1251 = vmatpush1.bf16.xpose.msra.mxu0 0
        %1252 = vmatprep.subr.bf16.mxu0 0
        %1253 = vmatpush1.bf16.xpose.msra.mxu0 0
        %1254 = vmatprep.subr.bf16.mxu0 0
        %1255 = vmatpush1.bf16.xpose.msra.mxu0 0
        %1256 = vmatprep.subr.bf16.mxu0 0
        %1257 = vmatpush1.bf16.xpose.msra.mxu0 0
        %1258 = vmatprep.subr.bf16.mxu0 0
        %1259 = vmatpush1.bf16.xpose.msra.mxu0 0
        %1260 = vmatprep.subr.bf16.mxu0 0
        %1261 = vmatpush1.bf16.xpose.msra.mxu0 0
        %1262 = vmatprep.subr.bf16.mxu0 0
        %1263 = vmatpush1.bf16.xpose.msra.mxu0 0
        %1264 = vmatprep.mubr.bf16.mxu0 0
        %1265 = vmatmul.mubr.bf16.gmra.mrb[0].mxu0 %v1227
        %v1266 = vpop.f32.mrb[0].mxu0
        %v1267 = vadd.f32 0.0, %v1266
        %v1268 = vpop.f32.mrb[0].mxu0
        %v1269 = vpop.f32.mrb[0].mxu0
        %v1270 = vadd.f32 0.0, %v1269
        %v1271 = vpop.f32.mrb[0].mxu0
        %1272 = vdwg.mxu0
        %v1273 = vmul.f32 %v1217, 0.35355338
        %v1274 = vmul.f32 %v1220, 0.35355338
        %v1275 = vmul.f32 %v1267, 0.35355338
        %v1276 = vmul.f32 %v1270, 0.35355338
        %vm1277 = vcmask 72704
        %v1278 = vsel %vm1277, %v1273, -inf
        %1279 = vmax.xlane.f32.xlu0 %v1278
        %v1280 = vpop.xlane.xlu0 %1279
        %vm1281 = vcmask 65536
        %v1282 = vsel %vm1281, %v1274, -inf
        %1283 = vmax.xlane.f32.xlu0 %v1282
        %v1284 = vpop.xlane.xlu0 %1283
        %v1285 = vsel %vm1277, %v1275, -inf
        %1286 = vmax.xlane.f32.xlu0 %v1285
        %v1287 = vpop.xlane.xlu0 %1286
        %v1288 = vsel %vm1281, %v1276, -inf
        %1289 = vmax.xlane.f32.xlu0 %v1288
        %v1290 = vpop.xlane.xlu0 %1289
        %v1291 = vsub.f32 %v1273, %v1280
        %v1292 = vsub.f32 %v1274, %v1284
        %v1293 = vsub.f32 %v1275, %v1287
        %v1294 = vsub.f32 %v1276, %v1290
        %v1295 = vmul.f32 %v1291, 1.442695
        %v1296 = vpow.pop %v1295
        %v1297 = vmul.f32 %v1292, 1.442695
        %v1298 = vpow.pop %v1297
        %v1299 = vmul.f32 %v1293, 1.442695
        %v1300 = vpow.pop %v1299
        %v1301 = vmul.f32 %v1294, 1.442695
        %v1302 = vpow.pop %v1301
        %v1303 = vsel %vm1277, %v1296, 0.0
        %1304 = vadd.xlane.f32.xlu0 %v1303
        %v1305 = vpop.xlane.xlu0 %1304
        %v1306 = vsel %vm1281, %v1298, 0.0
        %1307 = vadd.xlane.f32.xlu0 %v1306
        %v1308 = vpop.xlane.xlu0 %1307
        %v1309 = vsel %vm1277, %v1300, 0.0
        %1310 = vadd.xlane.f32.xlu0 %v1309
        %v1311 = vpop.xlane.xlu0 %1310
        %v1312 = vsel %vm1281, %v1302, 0.0
        %1313 = vadd.xlane.f32.xlu0 %v1312
        %v1314 = vpop.xlane.xlu0 %1313
        %v1315 = vrcp.pop %v1305
        %v1316 = vrcp.pop %v1308
        %v1317 = vrcp.pop %v1311
        %v1318 = vrcp.pop %v1314
        %v1319 = vmul.f32 %v1296, %v1315
        %v1320 = vmul.f32 %v1298, %v1316
        %v1321 = vmul.f32 %v1300, %v1317
        %v1322 = vmul.f32 %v1302, %v1318
        %v1323 = vpack.c.bf16 %v1320, %v1319
        %v1324 = vpack.c.bf16 %v1322, %v1321
        %v1326 = vsel %vm1277, %v1323, 0
        %vm1328 = vcmask 1043456
        %vm1329 = vcmask 1044480
        %v1330 = vsel %vm1328, 4294967295, 65535
        %v1331 = vsel %vm1329, %v1330, 0
        %v1333 = vand.u32 %v1169, %v1331
        %1335 = vmatprep.subr.bf16.mxu0 0
        %1336 = vmatpush1.bf16.msra.mxu0 %v1333
        %1337 = vmatprep.subr.bf16.mxu0 0
        %1338 = vmatpush1.bf16.msra.mxu0 0
        %1339 = vmatprep.subr.bf16.mxu0 0
        %1340 = vmatpush1.bf16.msra.mxu0 0
        %1341 = vmatprep.subr.bf16.mxu0 0
        %1342 = vmatpush1.bf16.msra.mxu0 0
        %1343 = vmatprep.subr.bf16.mxu0 0
        %1344 = vmatpush1.bf16.msra.mxu0 0
        %1345 = vmatprep.subr.bf16.mxu0 0
        %1346 = vmatpush1.bf16.msra.mxu0 0
        %1347 = vmatprep.subr.bf16.mxu0 0
        %1348 = vmatpush1.bf16.msra.mxu0 0
        %1349 = vmatprep.subr.bf16.mxu0 0
        %1350 = vmatpush1.bf16.msra.mxu0 0
        %1351 = vmatprep.subr.bf16.mxu0 0
        %1352 = vmatpush1.bf16.msra.mxu0 0
        %1353 = vmatprep.subr.bf16.mxu0 0
        %1354 = vmatpush1.bf16.msra.mxu0 0
        %1355 = vmatprep.subr.bf16.mxu0 0
        %1356 = vmatpush1.bf16.msra.mxu0 0
        %1357 = vmatprep.subr.bf16.mxu0 0
        %1358 = vmatpush1.bf16.msra.mxu0 0
        %1359 = vmatprep.subr.bf16.mxu0 0
        %1360 = vmatpush1.bf16.msra.mxu0 0
        %1361 = vmatprep.subr.bf16.mxu0 0
        %1362 = vmatpush1.bf16.msra.mxu0 0
        %1363 = vmatprep.subr.bf16.mxu0 0
        %1364 = vmatpush1.bf16.msra.mxu0 0
        %1365 = vmatprep.subr.bf16.mxu0 0
        %1366 = vmatpush1.bf16.msra.mxu0 0
        %1367 = vmatprep.mubr.bf16.mxu0 0
        %1368 = vmatmul.mubr.bf16.gmra.mrb[0].mxu0 %v1326
        %v1369 = vpop.f32.mrb[0].mxu0
        %v1370 = vadd.f32 0.0, %v1369
        %v1371 = vpop.f32.mrb[0].mxu0
        %v1372 = vpop.f32.mrb[0].mxu0
        %v1373 = vadd.f32 0.0, %v1372
        %v1374 = vpop.f32.mrb[0].mxu0
        %1375 = vdwg.mxu0
        %v1377 = vsel %vm1277, %v1324, 0
        %v1380 = vand.u32 %v1171, %v1331
        %1382 = vmatprep.subr.bf16.mxu0 0
        %1383 = vmatpush1.bf16.msra.mxu0 %v1380
        %1384 = vmatprep.subr.bf16.mxu0 0
        %1385 = vmatpush1.bf16.msra.mxu0 0
        %1386 = vmatprep.subr.bf16.mxu0 0
        %1387 = vmatpush1.bf16.msra.mxu0 0
        %1388 = vmatprep.subr.bf16.mxu0 0
        %1389 = vmatpush1.bf16.msra.mxu0 0
        %1390 = vmatprep.subr.bf16.mxu0 0
        %1391 = vmatpush1.bf16.msra.mxu0 0
        %1392 = vmatprep.subr.bf16.mxu0 0
        %1393 = vmatpush1.bf16.msra.mxu0 0
        %1394 = vmatprep.subr.bf16.mxu0 0
        %1395 = vmatpush1.bf16.msra.mxu0 0
        %1396 = vmatprep.subr.bf16.mxu0 0
        %1397 = vmatpush1.bf16.msra.mxu0 0
        %1398 = vmatprep.subr.bf16.mxu0 0
        %1399 = vmatpush1.bf16.msra.mxu0 0
        %1400 = vmatprep.subr.bf16.mxu0 0
        %1401 = vmatpush1.bf16.msra.mxu0 0
        %1402 = vmatprep.subr.bf16.mxu0 0
        %1403 = vmatpush1.bf16.msra.mxu0 0
        %1404 = vmatprep.subr.bf16.mxu0 0
        %1405 = vmatpush1.bf16.msra.mxu0 0
        %1406 = vmatprep.subr.bf16.mxu0 0
        %1407 = vmatpush1.bf16.msra.mxu0 0
        %1408 = vmatprep.subr.bf16.mxu0 0
        %1409 = vmatpush1.bf16.msra.mxu0 0
        %1410 = vmatprep.subr.bf16.mxu0 0
        %1411 = vmatpush1.bf16.msra.mxu0 0
        %1412 = vmatprep.subr.bf16.mxu0 0
        %1413 = vmatpush1.bf16.msra.mxu0 0
        %1414 = vmatprep.mubr.bf16.mxu0 0
        %1415 = vmatmul.mubr.bf16.gmra.mrb[0].mxu0 %v1377
        %v1416 = vpop.f32.mrb[0].mxu0
        %v1417 = vadd.f32 0.0, %v1416
        %v1418 = vpop.f32.mrb[0].mxu0
        %v1419 = vpop.f32.mrb[0].mxu0
        %v1420 = vadd.f32 0.0, %v1419
        %v1421 = vpop.f32.mrb[0].mxu0
        %1422 = vdwg.mxu0
        %1423 = vrot.lane.b32.xlu0 %v1168, 120
        %v1424 = vpop.permute.xlu0 %1423
        %1425 = vrot.lane.b32.xlu0 %v1168, 56
        %v1426 = vpop.permute.xlu0 %1425
        %v1428 = vsel %vm1175, %v1424, 0
        %v1431 = vsel %vm1175, %v1426, 0
        %1433 = vmatprep.subr.bf16.mxu0 0
        %1434 = vmatpush1.bf16.xpose.msra.mxu0 %v1431
        %1435 = vmatprep.subr.bf16.mxu0 0
        %1436 = vmatpush1.bf16.xpose.msra.mxu0 0
        %1437 = vmatprep.subr.bf16.mxu0 0
        %1438 = vmatpush1.bf16.xpose.msra.mxu0 0
        %1439 = vmatprep.subr.bf16.mxu0 0
        %1440 = vmatpush1.bf16.xpose.msra.mxu0 0
        %1441 = vmatprep.subr.bf16.mxu0 0
        %1442 = vmatpush1.bf16.xpose.msra.mxu0 0
        %1443 = vmatprep.subr.bf16.mxu0 0
        %1444 = vmatpush1.bf16.xpose.msra.mxu0 0
        %1445 = vmatprep.subr.bf16.mxu0 0
        %1446 = vmatpush1.bf16.xpose.msra.mxu0 0
        %1447 = vmatprep.subr.bf16.mxu0 0
        %1448 = vmatpush1.bf16.xpose.msra.mxu0 0
        %1449 = vmatprep.subr.bf16.mxu0 0
        %1450 = vmatpush1.bf16.xpose.msra.mxu0 0
        %1451 = vmatprep.subr.bf16.mxu0 0
        %1452 = vmatpush1.bf16.xpose.msra.mxu0 0
        %1453 = vmatprep.subr.bf16.mxu0 0
        %1454 = vmatpush1.bf16.xpose.msra.mxu0 0
        %1455 = vmatprep.subr.bf16.mxu0 0
        %1456 = vmatpush1.bf16.xpose.msra.mxu0 0
        %1457 = vmatprep.subr.bf16.mxu0 0
        %1458 = vmatpush1.bf16.xpose.msra.mxu0 0
        %1459 = vmatprep.subr.bf16.mxu0 0
        %1460 = vmatpush1.bf16.xpose.msra.mxu0 0
        %1461 = vmatprep.subr.bf16.mxu0 0
        %1462 = vmatpush1.bf16.xpose.msra.mxu0 0
        %1463 = vmatprep.subr.bf16.mxu0 0
        %1464 = vmatpush1.bf16.xpose.msra.mxu0 0
        %1465 = vmatprep.mubr.bf16.mxu0 0
        %1466 = vmatmul.mubr.bf16.gmra.mrb[0].mxu0 %v1428
        %v1467 = vpop.f32.mrb[0].mxu0
        %v1468 = vadd.f32 0.0, %v1467
        %v1469 = vpop.f32.mrb[0].mxu0
        %v1470 = vpop.f32.mrb[0].mxu0
        %v1471 = vadd.f32 0.0, %v1470
        %v1472 = vpop.f32.mrb[0].mxu0
        %1473 = vdwg.mxu0
        %1474 = vrot.lane.b32.xlu0 %v1170, 120
        %v1475 = vpop.permute.xlu0 %1474
        %1476 = vrot.lane.b32.xlu0 %v1170, 56
        %v1477 = vpop.permute.xlu0 %1476
        %v1479 = vsel %vm1175, %v1475, 0
        %v1482 = vsel %vm1175, %v1477, 0
        %1484 = vmatprep.subr.bf16.mxu0 0
        %1485 = vmatpush1.bf16.xpose.msra.mxu0 %v1482
        %1486 = vmatprep.subr.bf16.mxu0 0
        %1487 = vmatpush1.bf16.xpose.msra.mxu0 0
        %1488 = vmatprep.subr.bf16.mxu0 0
        %1489 = vmatpush1.bf16.xpose.msra.mxu0 0
        %1490 = vmatprep.subr.bf16.mxu0 0
        %1491 = vmatpush1.bf16.xpose.msra.mxu0 0
        %1492 = vmatprep.subr.bf16.mxu0 0
        %1493 = vmatpush1.bf16.xpose.msra.mxu0 0
        %1494 = vmatprep.subr.bf16.mxu0 0
        %1495 = vmatpush1.bf16.xpose.msra.mxu0 0
        %1496 = vmatprep.subr.bf16.mxu0 0
        %1497 = vmatpush1.bf16.xpose.msra.mxu0 0
        %1498 = vmatprep.subr.bf16.mxu0 0
        %1499 = vmatpush1.bf16.xpose.msra.mxu0 0
        %1500 = vmatprep.subr.bf16.mxu0 0
        %1501 = vmatpush1.bf16.xpose.msra.mxu0 0
        %1502 = vmatprep.subr.bf16.mxu0 0
        %1503 = vmatpush1.bf16.xpose.msra.mxu0 0
        %1504 = vmatprep.subr.bf16.mxu0 0
        %1505 = vmatpush1.bf16.xpose.msra.mxu0 0
        %1506 = vmatprep.subr.bf16.mxu0 0
        %1507 = vmatpush1.bf16.xpose.msra.mxu0 0
        %1508 = vmatprep.subr.bf16.mxu0 0
        %1509 = vmatpush1.bf16.xpose.msra.mxu0 0
        %1510 = vmatprep.subr.bf16.mxu0 0
        %1511 = vmatpush1.bf16.xpose.msra.mxu0 0
        %1512 = vmatprep.subr.bf16.mxu0 0
        %1513 = vmatpush1.bf16.xpose.msra.mxu0 0
        %1514 = vmatprep.subr.bf16.mxu0 0
        %1515 = vmatpush1.bf16.xpose.msra.mxu0 0
        %1516 = vmatprep.mubr.bf16.mxu0 0
        %1517 = vmatmul.mubr.bf16.gmra.mrb[0].mxu0 %v1479
        %v1518 = vpop.f32.mrb[0].mxu0
        %v1519 = vadd.f32 0.0, %v1518
        %v1520 = vpop.f32.mrb[0].mxu0
        %v1521 = vpop.f32.mrb[0].mxu0
        %v1522 = vadd.f32 0.0, %v1521
        %v1523 = vpop.f32.mrb[0].mxu0
        %1524 = vdwg.mxu0
        %v1525 = vmul.f32 %v1468, 0.35355338
        %v1526 = vmul.f32 %v1471, 0.35355338
        %v1527 = vmul.f32 %v1519, 0.35355338
        %v1528 = vmul.f32 %v1522, 0.35355338
        %v1529 = vsel %vm1277, %v1525, -inf
        %1530 = vmax.xlane.f32.xlu0 %v1529
        %v1531 = vpop.xlane.xlu0 %1530
        %v1532 = vsel %vm1281, %v1526, -inf
        %1533 = vmax.xlane.f32.xlu0 %v1532
        %v1534 = vpop.xlane.xlu0 %1533
        %v1535 = vsel %vm1277, %v1527, -inf
        %1536 = vmax.xlane.f32.xlu0 %v1535
        %v1537 = vpop.xlane.xlu0 %1536
        %v1538 = vsel %vm1281, %v1528, -inf
        %1539 = vmax.xlane.f32.xlu0 %v1538
        %v1540 = vpop.xlane.xlu0 %1539
        %v1541 = vsub.f32 %v1525, %v1531
        %v1542 = vsub.f32 %v1526, %v1534
        %v1543 = vsub.f32 %v1527, %v1537
        %v1544 = vsub.f32 %v1528, %v1540
        %v1545 = vmul.f32 %v1541, 1.442695
        %v1546 = vpow.pop %v1545
        %v1547 = vmul.f32 %v1542, 1.442695
        %v1548 = vpow.pop %v1547
        %v1549 = vmul.f32 %v1543, 1.442695
        %v1550 = vpow.pop %v1549
        %v1551 = vmul.f32 %v1544, 1.442695
        %v1552 = vpow.pop %v1551
        %v1553 = vsel %vm1277, %v1546, 0.0
        %1554 = vadd.xlane.f32.xlu0 %v1553
        %v1555 = vpop.xlane.xlu0 %1554
        %v1556 = vsel %vm1281, %v1548, 0.0
        %1557 = vadd.xlane.f32.xlu0 %v1556
        %v1558 = vpop.xlane.xlu0 %1557
        %v1559 = vsel %vm1277, %v1550, 0.0
        %1560 = vadd.xlane.f32.xlu0 %v1559
        %v1561 = vpop.xlane.xlu0 %1560
        %v1562 = vsel %vm1281, %v1552, 0.0
        %1563 = vadd.xlane.f32.xlu0 %v1562
        %v1564 = vpop.xlane.xlu0 %1563
        %v1565 = vrcp.pop %v1555
        %v1566 = vrcp.pop %v1558
        %v1567 = vrcp.pop %v1561
        %v1568 = vrcp.pop %v1564
        %v1569 = vmul.f32 %v1546, %v1565
        %v1570 = vmul.f32 %v1548, %v1566
        %v1571 = vmul.f32 %v1550, %v1567
        %v1572 = vmul.f32 %v1552, %v1568
        %v1573 = vpack.c.bf16 %v1570, %v1569
        %v1574 = vpack.c.bf16 %v1572, %v1571
        %1576 = vrot.lane.b32.xlu0 %v1169, 120
        %v1577 = vpop.permute.xlu0 %1576
        %v1579 = vsel %vm1277, %v1573, 0
        %v1582 = vand.u32 %v1577, %v1331
        %1584 = vmatprep.subr.bf16.mxu0 0
        %1585 = vmatpush1.bf16.msra.mxu0 %v1582
        %1586 = vmatprep.subr.bf16.mxu0 0
        %1587 = vmatpush1.bf16.msra.mxu0 0
        %1588 = vmatprep.subr.bf16.mxu0 0
        %1589 = vmatpush1.bf16.msra.mxu0 0
        %1590 = vmatprep.subr.bf16.mxu0 0
        %1591 = vmatpush1.bf16.msra.mxu0 0
        %1592 = vmatprep.subr.bf16.mxu0 0
        %1593 = vmatpush1.bf16.msra.mxu0 0
        %1594 = vmatprep.subr.bf16.mxu0 0
        %1595 = vmatpush1.bf16.msra.mxu0 0
        %1596 = vmatprep.subr.bf16.mxu0 0
        %1597 = vmatpush1.bf16.msra.mxu0 0
        %1598 = vmatprep.subr.bf16.mxu0 0
        %1599 = vmatpush1.bf16.msra.mxu0 0
        %1600 = vmatprep.subr.bf16.mxu0 0
        %1601 = vmatpush1.bf16.msra.mxu0 0
        %1602 = vmatprep.subr.bf16.mxu0 0
        %1603 = vmatpush1.bf16.msra.mxu0 0
        %1604 = vmatprep.subr.bf16.mxu0 0
        %1605 = vmatpush1.bf16.msra.mxu0 0
        %1606 = vmatprep.subr.bf16.mxu0 0
        %1607 = vmatpush1.bf16.msra.mxu0 0
        %1608 = vmatprep.subr.bf16.mxu0 0
        %1609 = vmatpush1.bf16.msra.mxu0 0
        %1610 = vmatprep.subr.bf16.mxu0 0
        %1611 = vmatpush1.bf16.msra.mxu0 0
        %1612 = vmatprep.subr.bf16.mxu0 0
        %1613 = vmatpush1.bf16.msra.mxu0 0
        %1614 = vmatprep.subr.bf16.mxu0 0
        %1615 = vmatpush1.bf16.msra.mxu0 0
        %1616 = vmatprep.mubr.bf16.mxu0 0
        %1617 = vmatmul.mubr.bf16.gmra.mrb[0].mxu0 %v1579
        %v1618 = vpop.f32.mrb[0].mxu0
        %v1619 = vadd.f32 0.0, %v1618
        %v1620 = vpop.f32.mrb[0].mxu0
        %v1621 = vpop.f32.mrb[0].mxu0
        %v1622 = vadd.f32 0.0, %v1621
        %v1623 = vpop.f32.mrb[0].mxu0
        %1624 = vdwg.mxu0
        %1626 = vrot.lane.b32.xlu0 %v1171, 120
        %v1627 = vpop.permute.xlu0 %1626
        %v1629 = vsel %vm1277, %v1574, 0
        %v1632 = vand.u32 %v1627, %v1331
        %1634 = vmatprep.subr.bf16.mxu0 0
        %1635 = vmatpush1.bf16.msra.mxu0 %v1632
        %1636 = vmatprep.subr.bf16.mxu0 0
        %1637 = vmatpush1.bf16.msra.mxu0 0
        %1638 = vmatprep.subr.bf16.mxu0 0
        %1639 = vmatpush1.bf16.msra.mxu0 0
        %1640 = vmatprep.subr.bf16.mxu0 0
        %1641 = vmatpush1.bf16.msra.mxu0 0
        %1642 = vmatprep.subr.bf16.mxu0 0
        %1643 = vmatpush1.bf16.msra.mxu0 0
        %1644 = vmatprep.subr.bf16.mxu0 0
        %1645 = vmatpush1.bf16.msra.mxu0 0
        %1646 = vmatprep.subr.bf16.mxu0 0
        %1647 = vmatpush1.bf16.msra.mxu0 0
        %1648 = vmatprep.subr.bf16.mxu0 0
        %1649 = vmatpush1.bf16.msra.mxu0 0
        %1650 = vmatprep.subr.bf16.mxu0 0
        %1651 = vmatpush1.bf16.msra.mxu0 0
        %1652 = vmatprep.subr.bf16.mxu0 0
        %1653 = vmatpush1.bf16.msra.mxu0 0
        %1654 = vmatprep.subr.bf16.mxu0 0
        %1655 = vmatpush1.bf16.msra.mxu0 0
        %1656 = vmatprep.subr.bf16.mxu0 0
        %1657 = vmatpush1.bf16.msra.mxu0 0
        %1658 = vmatprep.subr.bf16.mxu0 0
        %1659 = vmatpush1.bf16.msra.mxu0 0
        %1660 = vmatprep.subr.bf16.mxu0 0
        %1661 = vmatpush1.bf16.msra.mxu0 0
        %1662 = vmatprep.subr.bf16.mxu0 0
        %1663 = vmatpush1.bf16.msra.mxu0 0
        %1664 = vmatprep.subr.bf16.mxu0 0
        %1665 = vmatpush1.bf16.msra.mxu0 0
        %1666 = vmatprep.mubr.bf16.mxu0 0
        %1667 = vmatmul.mubr.bf16.gmra.mrb[0].mxu0 %v1629
        %v1668 = vpop.f32.mrb[0].mxu0
        %v1669 = vadd.f32 0.0, %v1668
        %v1670 = vpop.f32.mrb[0].mxu0
        %v1671 = vpop.f32.mrb[0].mxu0
        %v1672 = vadd.f32 0.0, %v1671
        %v1673 = vpop.f32.mrb[0].mxu0
        %1674 = vdwg.mxu0
        %1675 = vrot.lane.b32.xlu0 %v1168, 112
        %v1676 = vpop.permute.xlu0 %1675
        %1677 = vrot.lane.b32.xlu0 %v1168, 48
        %v1678 = vpop.permute.xlu0 %1677
        %v1680 = vsel %vm1175, %v1676, 0
        %v1683 = vsel %vm1175, %v1678, 0
        %1685 = vmatprep.subr.bf16.mxu0 0
        %1686 = vmatpush1.bf16.xpose.msra.mxu0 %v1683
        %1687 = vmatprep.subr.bf16.mxu0 0
        %1688 = vmatpush1.bf16.xpose.msra.mxu0 0
        %1689 = vmatprep.subr.bf16.mxu0 0
        %1690 = vmatpush1.bf16.xpose.msra.mxu0 0
        %1691 = vmatprep.subr.bf16.mxu0 0
        %1692 = vmatpush1.bf16.xpose.msra.mxu0 0
        %1693 = vmatprep.subr.bf16.mxu0 0
        %1694 = vmatpush1.bf16.xpose.msra.mxu0 0
        %1695 = vmatprep.subr.bf16.mxu0 0
        %1696 = vmatpush1.bf16.xpose.msra.mxu0 0
        %1697 = vmatprep.subr.bf16.mxu0 0
        %1698 = vmatpush1.bf16.xpose.msra.mxu0 0
        %1699 = vmatprep.subr.bf16.mxu0 0
        %1700 = vmatpush1.bf16.xpose.msra.mxu0 0
        %1701 = vmatprep.subr.bf16.mxu0 0
        %1702 = vmatpush1.bf16.xpose.msra.mxu0 0
        %1703 = vmatprep.subr.bf16.mxu0 0
        %1704 = vmatpush1.bf16.xpose.msra.mxu0 0
        %1705 = vmatprep.subr.bf16.mxu0 0
        %1706 = vmatpush1.bf16.xpose.msra.mxu0 0
        %1707 = vmatprep.subr.bf16.mxu0 0
        %1708 = vmatpush1.bf16.xpose.msra.mxu0 0
        %1709 = vmatprep.subr.bf16.mxu0 0
        %1710 = vmatpush1.bf16.xpose.msra.mxu0 0
        %1711 = vmatprep.subr.bf16.mxu0 0
        %1712 = vmatpush1.bf16.xpose.msra.mxu0 0
        %1713 = vmatprep.subr.bf16.mxu0 0
        %1714 = vmatpush1.bf16.xpose.msra.mxu0 0
        %1715 = vmatprep.subr.bf16.mxu0 0
        %1716 = vmatpush1.bf16.xpose.msra.mxu0 0
        %1717 = vmatprep.mubr.bf16.mxu0 0
        %1718 = vmatmul.mubr.bf16.gmra.mrb[0].mxu0 %v1680
        %v1719 = vpop.f32.mrb[0].mxu0
        %v1720 = vadd.f32 0.0, %v1719
        %v1721 = vpop.f32.mrb[0].mxu0
        %v1722 = vpop.f32.mrb[0].mxu0
        %v1723 = vadd.f32 0.0, %v1722
        %v1724 = vpop.f32.mrb[0].mxu0
        %1725 = vdwg.mxu0
        %1726 = vrot.lane.b32.xlu0 %v1170, 112
        %v1727 = vpop.permute.xlu0 %1726
        %1728 = vrot.lane.b32.xlu0 %v1170, 48
        %v1729 = vpop.permute.xlu0 %1728
        %v1731 = vsel %vm1175, %v1727, 0
        %v1734 = vsel %vm1175, %v1729, 0
        %1736 = vmatprep.subr.bf16.mxu0 0
        %1737 = vmatpush1.bf16.xpose.msra.mxu0 %v1734
        %1738 = vmatprep.subr.bf16.mxu0 0
        %1739 = vmatpush1.bf16.xpose.msra.mxu0 0
        %1740 = vmatprep.subr.bf16.mxu0 0
        %1741 = vmatpush1.bf16.xpose.msra.mxu0 0
        %1742 = vmatprep.subr.bf16.mxu0 0
        %1743 = vmatpush1.bf16.xpose.msra.mxu0 0
        %1744 = vmatprep.subr.bf16.mxu0 0
        %1745 = vmatpush1.bf16.xpose.msra.mxu0 0
        %1746 = vmatprep.subr.bf16.mxu0 0
        %1747 = vmatpush1.bf16.xpose.msra.mxu0 0
        %1748 = vmatprep.subr.bf16.mxu0 0
        %1749 = vmatpush1.bf16.xpose.msra.mxu0 0
        %1750 = vmatprep.subr.bf16.mxu0 0
        %1751 = vmatpush1.bf16.xpose.msra.mxu0 0
        %1752 = vmatprep.subr.bf16.mxu0 0
        %1753 = vmatpush1.bf16.xpose.msra.mxu0 0
        %1754 = vmatprep.subr.bf16.mxu0 0
        %1755 = vmatpush1.bf16.xpose.msra.mxu0 0
        %1756 = vmatprep.subr.bf16.mxu0 0
        %1757 = vmatpush1.bf16.xpose.msra.mxu0 0
        %1758 = vmatprep.subr.bf16.mxu0 0
        %1759 = vmatpush1.bf16.xpose.msra.mxu0 0
        %1760 = vmatprep.subr.bf16.mxu0 0
        %1761 = vmatpush1.bf16.xpose.msra.mxu0 0
        %1762 = vmatprep.subr.bf16.mxu0 0
        %1763 = vmatpush1.bf16.xpose.msra.mxu0 0
        %1764 = vmatprep.subr.bf16.mxu0 0
        %1765 = vmatpush1.bf16.xpose.msra.mxu0 0
        %1766 = vmatprep.subr.bf16.mxu0 0
        %1767 = vmatpush1.bf16.xpose.msra.mxu0 0
        %1768 = vmatprep.mubr.bf16.mxu0 0
        %1769 = vmatmul.mubr.bf16.gmra.mrb[0].mxu0 %v1731
        %v1770 = vpop.f32.mrb[0].mxu0
        %v1771 = vadd.f32 0.0, %v1770
        %v1772 = vpop.f32.mrb[0].mxu0
        %v1773 = vpop.f32.mrb[0].mxu0
        %v1774 = vadd.f32 0.0, %v1773
        %v1775 = vpop.f32.mrb[0].mxu0
        %1776 = vdwg.mxu0
        %v1777 = vmul.f32 %v1720, 0.35355338
        %v1778 = vmul.f32 %v1723, 0.35355338
        %v1779 = vmul.f32 %v1771, 0.35355338
        %v1780 = vmul.f32 %v1774, 0.35355338
        %v1781 = vsel %vm1277, %v1777, -inf
        %1782 = vmax.xlane.f32.xlu0 %v1781
        %v1783 = vpop.xlane.xlu0 %1782
        %v1784 = vsel %vm1281, %v1778, -inf
        %1785 = vmax.xlane.f32.xlu0 %v1784
        %v1786 = vpop.xlane.xlu0 %1785
        %v1787 = vsel %vm1277, %v1779, -inf
        %1788 = vmax.xlane.f32.xlu0 %v1787
        %v1789 = vpop.xlane.xlu0 %1788
        %v1790 = vsel %vm1281, %v1780, -inf
        %1791 = vmax.xlane.f32.xlu0 %v1790
        %v1792 = vpop.xlane.xlu0 %1791
        %v1793 = vsub.f32 %v1777, %v1783
        %v1794 = vsub.f32 %v1778, %v1786
        %v1795 = vsub.f32 %v1779, %v1789
        %v1796 = vsub.f32 %v1780, %v1792
        %v1797 = vmul.f32 %v1793, 1.442695
        %v1798 = vpow.pop %v1797
        %v1799 = vmul.f32 %v1794, 1.442695
        %v1800 = vpow.pop %v1799
        %v1801 = vmul.f32 %v1795, 1.442695
        %v1802 = vpow.pop %v1801
        %v1803 = vmul.f32 %v1796, 1.442695
        %v1804 = vpow.pop %v1803
        %v1805 = vsel %vm1277, %v1798, 0.0
        %1806 = vadd.xlane.f32.xlu0 %v1805
        %v1807 = vpop.xlane.xlu0 %1806
        %v1808 = vsel %vm1281, %v1800, 0.0
        %1809 = vadd.xlane.f32.xlu0 %v1808
        %v1810 = vpop.xlane.xlu0 %1809
        %v1811 = vsel %vm1277, %v1802, 0.0
        %1812 = vadd.xlane.f32.xlu0 %v1811
        %v1813 = vpop.xlane.xlu0 %1812
        %v1814 = vsel %vm1281, %v1804, 0.0
        %1815 = vadd.xlane.f32.xlu0 %v1814
        %v1816 = vpop.xlane.xlu0 %1815
        %v1817 = vrcp.pop %v1807
        %v1818 = vrcp.pop %v1810
        %v1819 = vrcp.pop %v1813
        %v1820 = vrcp.pop %v1816
        %v1821 = vmul.f32 %v1798, %v1817
        %v1822 = vmul.f32 %v1800, %v1818
        %v1823 = vmul.f32 %v1802, %v1819
        %v1824 = vmul.f32 %v1804, %v1820
        %v1825 = vpack.c.bf16 %v1822, %v1821
        %v1826 = vpack.c.bf16 %v1824, %v1823
        %1827 = vrot.lane.b32.xlu0 %v1169, 112
        %v1828 = vpop.permute.xlu0 %1827
        %v1830 = vsel %vm1277, %v1825, 0
        %v1833 = vand.u32 %v1828, %v1331
        %1835 = vmatprep.subr.bf16.mxu0 0
        %1836 = vmatpush1.bf16.msra.mxu0 %v1833
        %1837 = vmatprep.subr.bf16.mxu0 0
        %1838 = vmatpush1.bf16.msra.mxu0 0
        %1839 = vmatprep.subr.bf16.mxu0 0
        %1840 = vmatpush1.bf16.msra.mxu0 0
        %1841 = vmatprep.subr.bf16.mxu0 0
        %1842 = vmatpush1.bf16.msra.mxu0 0
        %1843 = vmatprep.subr.bf16.mxu0 0
        %1844 = vmatpush1.bf16.msra.mxu0 0
        %1845 = vmatprep.subr.bf16.mxu0 0
        %1846 = vmatpush1.bf16.msra.mxu0 0
        %1847 = vmatprep.subr.bf16.mxu0 0
        %1848 = vmatpush1.bf16.msra.mxu0 0
        %1849 = vmatprep.subr.bf16.mxu0 0
        %1850 = vmatpush1.bf16.msra.mxu0 0
        %1851 = vmatprep.subr.bf16.mxu0 0
        %1852 = vmatpush1.bf16.msra.mxu0 0
        %1853 = vmatprep.subr.bf16.mxu0 0
        %1854 = vmatpush1.bf16.msra.mxu0 0
        %1855 = vmatprep.subr.bf16.mxu0 0
        %1856 = vmatpush1.bf16.msra.mxu0 0
        %1857 = vmatprep.subr.bf16.mxu0 0
        %1858 = vmatpush1.bf16.msra.mxu0 0
        %1859 = vmatprep.subr.bf16.mxu0 0
        %1860 = vmatpush1.bf16.msra.mxu0 0
        %1861 = vmatprep.subr.bf16.mxu0 0
        %1862 = vmatpush1.bf16.msra.mxu0 0
        %1863 = vmatprep.subr.bf16.mxu0 0
        %1864 = vmatpush1.bf16.msra.mxu0 0
        %1865 = vmatprep.subr.bf16.mxu0 0
        %1866 = vmatpush1.bf16.msra.mxu0 0
        %1867 = vmatprep.mubr.bf16.mxu0 0
        %1868 = vmatmul.mubr.bf16.gmra.mrb[0].mxu0 %v1830
        %v1869 = vpop.f32.mrb[0].mxu0
        %v1870 = vadd.f32 0.0, %v1869
        %v1871 = vpop.f32.mrb[0].mxu0
        %v1872 = vpop.f32.mrb[0].mxu0
        %v1873 = vadd.f32 0.0, %v1872
        %v1874 = vpop.f32.mrb[0].mxu0
        %1875 = vdwg.mxu0
        %1876 = vrot.lane.b32.xlu0 %v1171, 112
        %v1877 = vpop.permute.xlu0 %1876
        %v1879 = vsel %vm1277, %v1826, 0
        %v1882 = vand.u32 %v1877, %v1331
        %1884 = vmatprep.subr.bf16.mxu0 0
        %1885 = vmatpush1.bf16.msra.mxu0 %v1882
        %1886 = vmatprep.subr.bf16.mxu0 0
        %1887 = vmatpush1.bf16.msra.mxu0 0
        %1888 = vmatprep.subr.bf16.mxu0 0
        %1889 = vmatpush1.bf16.msra.mxu0 0
        %1890 = vmatprep.subr.bf16.mxu0 0
        %1891 = vmatpush1.bf16.msra.mxu0 0
        %1892 = vmatprep.subr.bf16.mxu0 0
        %1893 = vmatpush1.bf16.msra.mxu0 0
        %1894 = vmatprep.subr.bf16.mxu0 0
        %1895 = vmatpush1.bf16.msra.mxu0 0
        %1896 = vmatprep.subr.bf16.mxu0 0
        %1897 = vmatpush1.bf16.msra.mxu0 0
        %1898 = vmatprep.subr.bf16.mxu0 0
        %1899 = vmatpush1.bf16.msra.mxu0 0
        %1900 = vmatprep.subr.bf16.mxu0 0
        %1901 = vmatpush1.bf16.msra.mxu0 0
        %1902 = vmatprep.subr.bf16.mxu0 0
        %1903 = vmatpush1.bf16.msra.mxu0 0
        %1904 = vmatprep.subr.bf16.mxu0 0
        %1905 = vmatpush1.bf16.msra.mxu0 0
        %1906 = vmatprep.subr.bf16.mxu0 0
        %1907 = vmatpush1.bf16.msra.mxu0 0
        %1908 = vmatprep.subr.bf16.mxu0 0
        %1909 = vmatpush1.bf16.msra.mxu0 0
        %1910 = vmatprep.subr.bf16.mxu0 0
        %1911 = vmatpush1.bf16.msra.mxu0 0
        %1912 = vmatprep.subr.bf16.mxu0 0
        %1913 = vmatpush1.bf16.msra.mxu0 0
        %1914 = vmatprep.subr.bf16.mxu0 0
        %1915 = vmatpush1.bf16.msra.mxu0 0
        %1916 = vmatprep.mubr.bf16.mxu0 0
        %1917 = vmatmul.mubr.bf16.gmra.mrb[0].mxu0 %v1879
        %v1918 = vpop.f32.mrb[0].mxu0
        %v1919 = vadd.f32 0.0, %v1918
        %v1920 = vpop.f32.mrb[0].mxu0
        %v1921 = vpop.f32.mrb[0].mxu0
        %v1922 = vadd.f32 0.0, %v1921
        %v1923 = vpop.f32.mrb[0].mxu0
        %1924 = vdwg.mxu0
        %1925 = vrot.lane.b32.xlu0 %v1168, 104
        %v1926 = vpop.permute.xlu0 %1925
        %1927 = vrot.lane.b32.xlu0 %v1168, 40
        %v1928 = vpop.permute.xlu0 %1927
        %v1930 = vsel %vm1175, %v1926, 0
        %v1933 = vsel %vm1175, %v1928, 0
        %1935 = vmatprep.subr.bf16.mxu0 0
        %1936 = vmatpush1.bf16.xpose.msra.mxu0 %v1933
        %1937 = vmatprep.subr.bf16.mxu0 0
        %1938 = vmatpush1.bf16.xpose.msra.mxu0 0
        %1939 = vmatprep.subr.bf16.mxu0 0
        %1940 = vmatpush1.bf16.xpose.msra.mxu0 0
        %1941 = vmatprep.subr.bf16.mxu0 0
        %1942 = vmatpush1.bf16.xpose.msra.mxu0 0
        %1943 = vmatprep.subr.bf16.mxu0 0
        %1944 = vmatpush1.bf16.xpose.msra.mxu0 0
        %1945 = vmatprep.subr.bf16.mxu0 0
        %1946 = vmatpush1.bf16.xpose.msra.mxu0 0
        %1947 = vmatprep.subr.bf16.mxu0 0
        %1948 = vmatpush1.bf16.xpose.msra.mxu0 0
        %1949 = vmatprep.subr.bf16.mxu0 0
        %1950 = vmatpush1.bf16.xpose.msra.mxu0 0
        %1951 = vmatprep.subr.bf16.mxu0 0
        %1952 = vmatpush1.bf16.xpose.msra.mxu0 0
        %1953 = vmatprep.subr.bf16.mxu0 0
        %1954 = vmatpush1.bf16.xpose.msra.mxu0 0
        %1955 = vmatprep.subr.bf16.mxu0 0
        %1956 = vmatpush1.bf16.xpose.msra.mxu0 0
        %1957 = vmatprep.subr.bf16.mxu0 0
        %1958 = vmatpush1.bf16.xpose.msra.mxu0 0
        %1959 = vmatprep.subr.bf16.mxu0 0
        %1960 = vmatpush1.bf16.xpose.msra.mxu0 0
        %1961 = vmatprep.subr.bf16.mxu0 0
        %1962 = vmatpush1.bf16.xpose.msra.mxu0 0
        %1963 = vmatprep.subr.bf16.mxu0 0
        %1964 = vmatpush1.bf16.xpose.msra.mxu0 0
        %1965 = vmatprep.subr.bf16.mxu0 0
        %1966 = vmatpush1.bf16.xpose.msra.mxu0 0
        %1967 = vmatprep.mubr.bf16.mxu0 0
        %1968 = vmatmul.mubr.bf16.gmra.mrb[0].mxu0 %v1930
        %v1969 = vpop.f32.mrb[0].mxu0
        %v1970 = vadd.f32 0.0, %v1969
        %v1971 = vpop.f32.mrb[0].mxu0
        %v1972 = vpop.f32.mrb[0].mxu0
        %v1973 = vadd.f32 0.0, %v1972
        %v1974 = vpop.f32.mrb[0].mxu0
        %1975 = vdwg.mxu0
        %1976 = vrot.lane.b32.xlu0 %v1170, 104
        %v1977 = vpop.permute.xlu0 %1976
        %1978 = vrot.lane.b32.xlu0 %v1170, 40
        %v1979 = vpop.permute.xlu0 %1978
        %v1981 = vsel %vm1175, %v1977, 0
        %v1984 = vsel %vm1175, %v1979, 0
        %1986 = vmatprep.subr.bf16.mxu0 0
        %1987 = vmatpush1.bf16.xpose.msra.mxu0 %v1984
        %1988 = vmatprep.subr.bf16.mxu0 0
        %1989 = vmatpush1.bf16.xpose.msra.mxu0 0
        %1990 = vmatprep.subr.bf16.mxu0 0
        %1991 = vmatpush1.bf16.xpose.msra.mxu0 0
        %1992 = vmatprep.subr.bf16.mxu0 0
        %1993 = vmatpush1.bf16.xpose.msra.mxu0 0
        %1994 = vmatprep.subr.bf16.mxu0 0
        %1995 = vmatpush1.bf16.xpose.msra.mxu0 0
        %1996 = vmatprep.subr.bf16.mxu0 0
        %1997 = vmatpush1.bf16.xpose.msra.mxu0 0
        %1998 = vmatprep.subr.bf16.mxu0 0
        %1999 = vmatpush1.bf16.xpose.msra.mxu0 0
        %2000 = vmatprep.subr.bf16.mxu0 0
        %2001 = vmatpush1.bf16.xpose.msra.mxu0 0
        %2002 = vmatprep.subr.bf16.mxu0 0
        %2003 = vmatpush1.bf16.xpose.msra.mxu0 0
        %2004 = vmatprep.subr.bf16.mxu0 0
        %2005 = vmatpush1.bf16.xpose.msra.mxu0 0
        %2006 = vmatprep.subr.bf16.mxu0 0
        %2007 = vmatpush1.bf16.xpose.msra.mxu0 0
        %2008 = vmatprep.subr.bf16.mxu0 0
        %2009 = vmatpush1.bf16.xpose.msra.mxu0 0
        %2010 = vmatprep.subr.bf16.mxu0 0
        %2011 = vmatpush1.bf16.xpose.msra.mxu0 0
        %2012 = vmatprep.subr.bf16.mxu0 0
        %2013 = vmatpush1.bf16.xpose.msra.mxu0 0
        %2014 = vmatprep.subr.bf16.mxu0 0
        %2015 = vmatpush1.bf16.xpose.msra.mxu0 0
        %2016 = vmatprep.subr.bf16.mxu0 0
        %2017 = vmatpush1.bf16.xpose.msra.mxu0 0
        %2018 = vmatprep.mubr.bf16.mxu0 0
        %2019 = vmatmul.mubr.bf16.gmra.mrb[0].mxu0 %v1981
        %v2020 = vpop.f32.mrb[0].mxu0
        %v2021 = vadd.f32 0.0, %v2020
        %v2022 = vpop.f32.mrb[0].mxu0
        %v2023 = vpop.f32.mrb[0].mxu0
        %v2024 = vadd.f32 0.0, %v2023
        %v2025 = vpop.f32.mrb[0].mxu0
        %2026 = vdwg.mxu0
        %v2027 = vmul.f32 %v1970, 0.35355338
        %v2028 = vmul.f32 %v1973, 0.35355338
        %v2029 = vmul.f32 %v2021, 0.35355338
        %v2030 = vmul.f32 %v2024, 0.35355338
        %v2031 = vsel %vm1277, %v2027, -inf
        %2032 = vmax.xlane.f32.xlu0 %v2031
        %v2033 = vpop.xlane.xlu0 %2032
        %v2034 = vsel %vm1281, %v2028, -inf
        %2035 = vmax.xlane.f32.xlu0 %v2034
        %v2036 = vpop.xlane.xlu0 %2035
        %v2037 = vsel %vm1277, %v2029, -inf
        %2038 = vmax.xlane.f32.xlu0 %v2037
        %v2039 = vpop.xlane.xlu0 %2038
        %v2040 = vsel %vm1281, %v2030, -inf
        %2041 = vmax.xlane.f32.xlu0 %v2040
        %v2042 = vpop.xlane.xlu0 %2041
        %v2043 = vsub.f32 %v2027, %v2033
        %v2044 = vsub.f32 %v2028, %v2036
        %v2045 = vsub.f32 %v2029, %v2039
        %v2046 = vsub.f32 %v2030, %v2042
        %v2047 = vmul.f32 %v2043, 1.442695
        %v2048 = vpow.pop %v2047
        %v2049 = vmul.f32 %v2044, 1.442695
        %v2050 = vpow.pop %v2049
        %v2051 = vmul.f32 %v2045, 1.442695
        %v2052 = vpow.pop %v2051
        %v2053 = vmul.f32 %v2046, 1.442695
        %v2054 = vpow.pop %v2053
        %v2055 = vsel %vm1277, %v2048, 0.0
        %2056 = vadd.xlane.f32.xlu0 %v2055
        %v2057 = vpop.xlane.xlu0 %2056
        %v2058 = vsel %vm1281, %v2050, 0.0
        %2059 = vadd.xlane.f32.xlu0 %v2058
        %v2060 = vpop.xlane.xlu0 %2059
        %v2061 = vsel %vm1277, %v2052, 0.0
        %2062 = vadd.xlane.f32.xlu0 %v2061
        %v2063 = vpop.xlane.xlu0 %2062
        %v2064 = vsel %vm1281, %v2054, 0.0
        %2065 = vadd.xlane.f32.xlu0 %v2064
        %v2066 = vpop.xlane.xlu0 %2065
        %v2067 = vrcp.pop %v2057
        %v2068 = vrcp.pop %v2060
        %v2069 = vrcp.pop %v2063
        %v2070 = vrcp.pop %v2066
        %v2071 = vmul.f32 %v2048, %v2067
        %v2072 = vmul.f32 %v2050, %v2068
        %v2073 = vmul.f32 %v2052, %v2069
        %v2074 = vmul.f32 %v2054, %v2070
        %v2075 = vpack.c.bf16 %v2072, %v2071
        %v2076 = vpack.c.bf16 %v2074, %v2073
        %2077 = vrot.lane.b32.xlu0 %v1169, 104
        %v2078 = vpop.permute.xlu0 %2077
        %v2080 = vsel %vm1277, %v2075, 0
        %v2083 = vand.u32 %v2078, %v1331
        %2085 = vmatprep.subr.bf16.mxu0 0
        %2086 = vmatpush1.bf16.msra.mxu0 %v2083
        %2087 = vmatprep.subr.bf16.mxu0 0
        %2088 = vmatpush1.bf16.msra.mxu0 0
        %2089 = vmatprep.subr.bf16.mxu0 0
        %2090 = vmatpush1.bf16.msra.mxu0 0
        %2091 = vmatprep.subr.bf16.mxu0 0
        %2092 = vmatpush1.bf16.msra.mxu0 0
        %2093 = vmatprep.subr.bf16.mxu0 0
        %2094 = vmatpush1.bf16.msra.mxu0 0
        %2095 = vmatprep.subr.bf16.mxu0 0
        %2096 = vmatpush1.bf16.msra.mxu0 0
        %2097 = vmatprep.subr.bf16.mxu0 0
        %2098 = vmatpush1.bf16.msra.mxu0 0
        %2099 = vmatprep.subr.bf16.mxu0 0
        %2100 = vmatpush1.bf16.msra.mxu0 0
        %2101 = vmatprep.subr.bf16.mxu0 0
        %2102 = vmatpush1.bf16.msra.mxu0 0
        %2103 = vmatprep.subr.bf16.mxu0 0
        %2104 = vmatpush1.bf16.msra.mxu0 0
        %2105 = vmatprep.subr.bf16.mxu0 0
        %2106 = vmatpush1.bf16.msra.mxu0 0
        %2107 = vmatprep.subr.bf16.mxu0 0
        %2108 = vmatpush1.bf16.msra.mxu0 0
        %2109 = vmatprep.subr.bf16.mxu0 0
        %2110 = vmatpush1.bf16.msra.mxu0 0
        %2111 = vmatprep.subr.bf16.mxu0 0
        %2112 = vmatpush1.bf16.msra.mxu0 0
        %2113 = vmatprep.subr.bf16.mxu0 0
        %2114 = vmatpush1.bf16.msra.mxu0 0
        %2115 = vmatprep.subr.bf16.mxu0 0
        %2116 = vmatpush1.bf16.msra.mxu0 0
        %2117 = vmatprep.mubr.bf16.mxu0 0
        %2118 = vmatmul.mubr.bf16.gmra.mrb[0].mxu0 %v2080
        %v2119 = vpop.f32.mrb[0].mxu0
        %v2120 = vadd.f32 0.0, %v2119
        %v2121 = vpop.f32.mrb[0].mxu0
        %v2122 = vpop.f32.mrb[0].mxu0
        %v2123 = vadd.f32 0.0, %v2122
        %v2124 = vpop.f32.mrb[0].mxu0
        %2125 = vdwg.mxu0
        %2126 = vrot.lane.b32.xlu0 %v1171, 104
        %v2127 = vpop.permute.xlu0 %2126
        %v2129 = vsel %vm1277, %v2076, 0
        %v2132 = vand.u32 %v2127, %v1331
        %2134 = vmatprep.subr.bf16.mxu0 0
        %2135 = vmatpush1.bf16.msra.mxu0 %v2132
        %2136 = vmatprep.subr.bf16.mxu0 0
        %2137 = vmatpush1.bf16.msra.mxu0 0
        %2138 = vmatprep.subr.bf16.mxu0 0
        %2139 = vmatpush1.bf16.msra.mxu0 0
        %2140 = vmatprep.subr.bf16.mxu0 0
        %2141 = vmatpush1.bf16.msra.mxu0 0
        %2142 = vmatprep.subr.bf16.mxu0 0
        %2143 = vmatpush1.bf16.msra.mxu0 0
        %2144 = vmatprep.subr.bf16.mxu0 0
        %2145 = vmatpush1.bf16.msra.mxu0 0
        %2146 = vmatprep.subr.bf16.mxu0 0
        %2147 = vmatpush1.bf16.msra.mxu0 0
        %2148 = vmatprep.subr.bf16.mxu0 0
        %2149 = vmatpush1.bf16.msra.mxu0 0
        %2150 = vmatprep.subr.bf16.mxu0 0
        %2151 = vmatpush1.bf16.msra.mxu0 0
        %2152 = vmatprep.subr.bf16.mxu0 0
        %2153 = vmatpush1.bf16.msra.mxu0 0
        %2154 = vmatprep.subr.bf16.mxu0 0
        %2155 = vmatpush1.bf16.msra.mxu0 0
        %2156 = vmatprep.subr.bf16.mxu0 0
        %2157 = vmatpush1.bf16.msra.mxu0 0
        %2158 = vmatprep.subr.bf16.mxu0 0
        %2159 = vmatpush1.bf16.msra.mxu0 0
        %2160 = vmatprep.subr.bf16.mxu0 0
        %2161 = vmatpush1.bf16.msra.mxu0 0
        %2162 = vmatprep.subr.bf16.mxu0 0
        %2163 = vmatpush1.bf16.msra.mxu0 0
        %2164 = vmatprep.subr.bf16.mxu0 0
        %2165 = vmatpush1.bf16.msra.mxu0 0
        %2166 = vmatprep.mubr.bf16.mxu0 0
        %2167 = vmatmul.mubr.bf16.gmra.mrb[0].mxu0 %v2129
        %v2168 = vpop.f32.mrb[0].mxu0
        %v2169 = vadd.f32 0.0, %v2168
        %v2170 = vpop.f32.mrb[0].mxu0
        %v2171 = vpop.f32.mrb[0].mxu0
        %v2172 = vadd.f32 0.0, %v2171
        %v2173 = vpop.f32.mrb[0].mxu0
        %2174 = vdwg.mxu0
        %2175 = vrot.lane.b32.xlu0 %v1168, 96
        %v2176 = vpop.permute.xlu0 %2175
        %2177 = vrot.lane.b32.xlu0 %v1168, 32
        %v2178 = vpop.permute.xlu0 %2177
        %v2180 = vsel %vm1175, %v2176, 0
        %v2183 = vsel %vm1175, %v2178, 0
        %2185 = vmatprep.subr.bf16.mxu0 0
        %2186 = vmatpush1.bf16.xpose.msra.mxu0 %v2183
        %2187 = vmatprep.subr.bf16.mxu0 0
        %2188 = vmatpush1.bf16.xpose.msra.mxu0 0
        %2189 = vmatprep.subr.bf16.mxu0 0
        %2190 = vmatpush1.bf16.xpose.msra.mxu0 0
        %2191 = vmatprep.subr.bf16.mxu0 0
        %2192 = vmatpush1.bf16.xpose.msra.mxu0 0
        %2193 = vmatprep.subr.bf16.mxu0 0
        %2194 = vmatpush1.bf16.xpose.msra.mxu0 0
        %2195 = vmatprep.subr.bf16.mxu0 0
        %2196 = vmatpush1.bf16.xpose.msra.mxu0 0
        %2197 = vmatprep.subr.bf16.mxu0 0
        %2198 = vmatpush1.bf16.xpose.msra.mxu0 0
        %2199 = vmatprep.subr.bf16.mxu0 0
        %2200 = vmatpush1.bf16.xpose.msra.mxu0 0
        %2201 = vmatprep.subr.bf16.mxu0 0
        %2202 = vmatpush1.bf16.xpose.msra.mxu0 0
        %2203 = vmatprep.subr.bf16.mxu0 0
        %2204 = vmatpush1.bf16.xpose.msra.mxu0 0
        %2205 = vmatprep.subr.bf16.mxu0 0
        %2206 = vmatpush1.bf16.xpose.msra.mxu0 0
        %2207 = vmatprep.subr.bf16.mxu0 0
        %2208 = vmatpush1.bf16.xpose.msra.mxu0 0
        %2209 = vmatprep.subr.bf16.mxu0 0
        %2210 = vmatpush1.bf16.xpose.msra.mxu0 0
        %2211 = vmatprep.subr.bf16.mxu0 0
        %2212 = vmatpush1.bf16.xpose.msra.mxu0 0
        %2213 = vmatprep.subr.bf16.mxu0 0
        %2214 = vmatpush1.bf16.xpose.msra.mxu0 0
        %2215 = vmatprep.subr.bf16.mxu0 0
        %2216 = vmatpush1.bf16.xpose.msra.mxu0 0
        %2217 = vmatprep.mubr.bf16.mxu0 0
        %2218 = vmatmul.mubr.bf16.gmra.mrb[0].mxu0 %v2180
        %v2219 = vpop.f32.mrb[0].mxu0
        %v2220 = vadd.f32 0.0, %v2219
        %v2221 = vpop.f32.mrb[0].mxu0
        %v2222 = vpop.f32.mrb[0].mxu0
        %v2223 = vadd.f32 0.0, %v2222
        %v2224 = vpop.f32.mrb[0].mxu0
        %2225 = vdwg.mxu0
        %2226 = vrot.lane.b32.xlu0 %v1170, 96
        %v2227 = vpop.permute.xlu0 %2226
        %2228 = vrot.lane.b32.xlu0 %v1170, 32
        %v2229 = vpop.permute.xlu0 %2228
        %v2231 = vsel %vm1175, %v2227, 0
        %v2234 = vsel %vm1175, %v2229, 0
        %2236 = vmatprep.subr.bf16.mxu0 0
        %2237 = vmatpush1.bf16.xpose.msra.mxu0 %v2234
        %2238 = vmatprep.subr.bf16.mxu0 0
        %2239 = vmatpush1.bf16.xpose.msra.mxu0 0
        %2240 = vmatprep.subr.bf16.mxu0 0
        %2241 = vmatpush1.bf16.xpose.msra.mxu0 0
        %2242 = vmatprep.subr.bf16.mxu0 0
        %2243 = vmatpush1.bf16.xpose.msra.mxu0 0
        %2244 = vmatprep.subr.bf16.mxu0 0
        %2245 = vmatpush1.bf16.xpose.msra.mxu0 0
        %2246 = vmatprep.subr.bf16.mxu0 0
        %2247 = vmatpush1.bf16.xpose.msra.mxu0 0
        %2248 = vmatprep.subr.bf16.mxu0 0
        %2249 = vmatpush1.bf16.xpose.msra.mxu0 0
        %2250 = vmatprep.subr.bf16.mxu0 0
        %2251 = vmatpush1.bf16.xpose.msra.mxu0 0
        %2252 = vmatprep.subr.bf16.mxu0 0
        %2253 = vmatpush1.bf16.xpose.msra.mxu0 0
        %2254 = vmatprep.subr.bf16.mxu0 0
        %2255 = vmatpush1.bf16.xpose.msra.mxu0 0
        %2256 = vmatprep.subr.bf16.mxu0 0
        %2257 = vmatpush1.bf16.xpose.msra.mxu0 0
        %2258 = vmatprep.subr.bf16.mxu0 0
        %2259 = vmatpush1.bf16.xpose.msra.mxu0 0
        %2260 = vmatprep.subr.bf16.mxu0 0
        %2261 = vmatpush1.bf16.xpose.msra.mxu0 0
        %2262 = vmatprep.subr.bf16.mxu0 0
        %2263 = vmatpush1.bf16.xpose.msra.mxu0 0
        %2264 = vmatprep.subr.bf16.mxu0 0
        %2265 = vmatpush1.bf16.xpose.msra.mxu0 0
        %2266 = vmatprep.subr.bf16.mxu0 0
        %2267 = vmatpush1.bf16.xpose.msra.mxu0 0
        %2268 = vmatprep.mubr.bf16.mxu0 0
        %2269 = vmatmul.mubr.bf16.gmra.mrb[0].mxu0 %v2231
        %v2270 = vpop.f32.mrb[0].mxu0
        %v2271 = vadd.f32 0.0, %v2270
        %v2272 = vpop.f32.mrb[0].mxu0
        %v2273 = vpop.f32.mrb[0].mxu0
        %v2274 = vadd.f32 0.0, %v2273
        %v2275 = vpop.f32.mrb[0].mxu0
        %2276 = vdwg.mxu0
        %v2277 = vmul.f32 %v2220, 0.35355338
        %v2278 = vmul.f32 %v2223, 0.35355338
        %v2279 = vmul.f32 %v2271, 0.35355338
        %v2280 = vmul.f32 %v2274, 0.35355338
        %v2281 = vsel %vm1277, %v2277, -inf
        %2282 = vmax.xlane.f32.xlu0 %v2281
        %v2283 = vpop.xlane.xlu0 %2282
        %v2284 = vsel %vm1281, %v2278, -inf
        %2285 = vmax.xlane.f32.xlu0 %v2284
        %v2286 = vpop.xlane.xlu0 %2285
        %v2287 = vsel %vm1277, %v2279, -inf
        %2288 = vmax.xlane.f32.xlu0 %v2287
        %v2289 = vpop.xlane.xlu0 %2288
        %v2290 = vsel %vm1281, %v2280, -inf
        %2291 = vmax.xlane.f32.xlu0 %v2290
        %v2292 = vpop.xlane.xlu0 %2291
        %v2293 = vsub.f32 %v2277, %v2283
        %v2294 = vsub.f32 %v2278, %v2286
        %v2295 = vsub.f32 %v2279, %v2289
        %v2296 = vsub.f32 %v2280, %v2292
        %v2297 = vmul.f32 %v2293, 1.442695
        %v2298 = vpow.pop %v2297
        %v2299 = vmul.f32 %v2294, 1.442695
        %v2300 = vpow.pop %v2299
        %v2301 = vmul.f32 %v2295, 1.442695
        %v2302 = vpow.pop %v2301
        %v2303 = vmul.f32 %v2296, 1.442695
        %v2304 = vpow.pop %v2303
        %v2305 = vsel %vm1277, %v2298, 0.0
        %2306 = vadd.xlane.f32.xlu0 %v2305
        %v2307 = vpop.xlane.xlu0 %2306
        %v2308 = vsel %vm1281, %v2300, 0.0
        %2309 = vadd.xlane.f32.xlu0 %v2308
        %v2310 = vpop.xlane.xlu0 %2309
        %v2311 = vsel %vm1277, %v2302, 0.0
        %2312 = vadd.xlane.f32.xlu0 %v2311
        %v2313 = vpop.xlane.xlu0 %2312
        %v2314 = vsel %vm1281, %v2304, 0.0
        %2315 = vadd.xlane.f32.xlu0 %v2314
        %v2316 = vpop.xlane.xlu0 %2315
        %v2317 = vrcp.pop %v2307
        %v2318 = vrcp.pop %v2310
        %v2319 = vrcp.pop %v2313
        %v2320 = vrcp.pop %v2316
        %v2321 = vmul.f32 %v2298, %v2317
        %v2322 = vmul.f32 %v2300, %v2318
        %v2323 = vmul.f32 %v2302, %v2319
        %v2324 = vmul.f32 %v2304, %v2320
        %v2325 = vpack.c.bf16 %v2322, %v2321
        %v2326 = vpack.c.bf16 %v2324, %v2323
        %2327 = vrot.lane.b32.xlu0 %v1169, 96
        %v2328 = vpop.permute.xlu0 %2327
        %v2330 = vsel %vm1277, %v2325, 0
        %v2333 = vand.u32 %v2328, %v1331
        %2335 = vmatprep.subr.bf16.mxu0 0
        %2336 = vmatpush1.bf16.msra.mxu0 %v2333
        %2337 = vmatprep.subr.bf16.mxu0 0
        %2338 = vmatpush1.bf16.msra.mxu0 0
        %2339 = vmatprep.subr.bf16.mxu0 0
        %2340 = vmatpush1.bf16.msra.mxu0 0
        %2341 = vmatprep.subr.bf16.mxu0 0
        %2342 = vmatpush1.bf16.msra.mxu0 0
        %2343 = vmatprep.subr.bf16.mxu0 0
        %2344 = vmatpush1.bf16.msra.mxu0 0
        %2345 = vmatprep.subr.bf16.mxu0 0
        %2346 = vmatpush1.bf16.msra.mxu0 0
        %2347 = vmatprep.subr.bf16.mxu0 0
        %2348 = vmatpush1.bf16.msra.mxu0 0
        %2349 = vmatprep.subr.bf16.mxu0 0
        %2350 = vmatpush1.bf16.msra.mxu0 0
        %2351 = vmatprep.subr.bf16.mxu0 0
        %2352 = vmatpush1.bf16.msra.mxu0 0
        %2353 = vmatprep.subr.bf16.mxu0 0
        %2354 = vmatpush1.bf16.msra.mxu0 0
        %2355 = vmatprep.subr.bf16.mxu0 0
        %2356 = vmatpush1.bf16.msra.mxu0 0
        %2357 = vmatprep.subr.bf16.mxu0 0
        %2358 = vmatpush1.bf16.msra.mxu0 0
        %2359 = vmatprep.subr.bf16.mxu0 0
        %2360 = vmatpush1.bf16.msra.mxu0 0
        %2361 = vmatprep.subr.bf16.mxu0 0
        %2362 = vmatpush1.bf16.msra.mxu0 0
        %2363 = vmatprep.subr.bf16.mxu0 0
        %2364 = vmatpush1.bf16.msra.mxu0 0
        %2365 = vmatprep.subr.bf16.mxu0 0
        %2366 = vmatpush1.bf16.msra.mxu0 0
        %2367 = vmatprep.mubr.bf16.mxu0 0
        %2368 = vmatmul.mubr.bf16.gmra.mrb[0].mxu0 %v2330
        %v2369 = vpop.f32.mrb[0].mxu0
        %v2370 = vadd.f32 0.0, %v2369
        %v2371 = vpop.f32.mrb[0].mxu0
        %v2372 = vpop.f32.mrb[0].mxu0
        %v2373 = vadd.f32 0.0, %v2372
        %v2374 = vpop.f32.mrb[0].mxu0
        %2375 = vdwg.mxu0
        %2376 = vrot.lane.b32.xlu0 %v1171, 96
        %v2377 = vpop.permute.xlu0 %2376
        %v2379 = vsel %vm1277, %v2326, 0
        %v2382 = vand.u32 %v2377, %v1331
        %2384 = vmatprep.subr.bf16.mxu0 0
        %2385 = vmatpush1.bf16.msra.mxu0 %v2382
        %2386 = vmatprep.subr.bf16.mxu0 0
        %2387 = vmatpush1.bf16.msra.mxu0 0
        %2388 = vmatprep.subr.bf16.mxu0 0
        %2389 = vmatpush1.bf16.msra.mxu0 0
        %2390 = vmatprep.subr.bf16.mxu0 0
        %2391 = vmatpush1.bf16.msra.mxu0 0
        %2392 = vmatprep.subr.bf16.mxu0 0
        %2393 = vmatpush1.bf16.msra.mxu0 0
        %2394 = vmatprep.subr.bf16.mxu0 0
        %2395 = vmatpush1.bf16.msra.mxu0 0
        %2396 = vmatprep.subr.bf16.mxu0 0
        %2397 = vmatpush1.bf16.msra.mxu0 0
        %2398 = vmatprep.subr.bf16.mxu0 0
        %2399 = vmatpush1.bf16.msra.mxu0 0
        %2400 = vmatprep.subr.bf16.mxu0 0
        %2401 = vmatpush1.bf16.msra.mxu0 0
        %2402 = vmatprep.subr.bf16.mxu0 0
        %2403 = vmatpush1.bf16.msra.mxu0 0
        %2404 = vmatprep.subr.bf16.mxu0 0
        %2405 = vmatpush1.bf16.msra.mxu0 0
        %2406 = vmatprep.subr.bf16.mxu0 0
        %2407 = vmatpush1.bf16.msra.mxu0 0
        %2408 = vmatprep.subr.bf16.mxu0 0
        %2409 = vmatpush1.bf16.msra.mxu0 0
        %2410 = vmatprep.subr.bf16.mxu0 0
        %2411 = vmatpush1.bf16.msra.mxu0 0
        %2412 = vmatprep.subr.bf16.mxu0 0
        %2413 = vmatpush1.bf16.msra.mxu0 0
        %2414 = vmatprep.subr.bf16.mxu0 0
        %2415 = vmatpush1.bf16.msra.mxu0 0
        %2416 = vmatprep.mubr.bf16.mxu0 0
        %2417 = vmatmul.mubr.bf16.gmra.mrb[0].mxu0 %v2379
        %v2418 = vpop.f32.mrb[0].mxu0
        %v2419 = vadd.f32 0.0, %v2418
        %v2420 = vpop.f32.mrb[0].mxu0
        %v2421 = vpop.f32.mrb[0].mxu0
        %v2422 = vadd.f32 0.0, %v2421
        %v2423 = vpop.f32.mrb[0].mxu0
        %2424 = vdwg.mxu0
        %2425 = vrot.lane.b32.xlu0 %v1168, 88
        %v2426 = vpop.permute.xlu0 %2425
        %2427 = vrot.lane.b32.xlu0 %v1168, 24
        %v2428 = vpop.permute.xlu0 %2427
        %v2430 = vsel %vm1175, %v2426, 0
        %v2433 = vsel %vm1175, %v2428, 0
        %2435 = vmatprep.subr.bf16.mxu0 0
        %2436 = vmatpush1.bf16.xpose.msra.mxu0 %v2433
        %2437 = vmatprep.subr.bf16.mxu0 0
        %2438 = vmatpush1.bf16.xpose.msra.mxu0 0
        %2439 = vmatprep.subr.bf16.mxu0 0
        %2440 = vmatpush1.bf16.xpose.msra.mxu0 0
        %2441 = vmatprep.subr.bf16.mxu0 0
        %2442 = vmatpush1.bf16.xpose.msra.mxu0 0
        %2443 = vmatprep.subr.bf16.mxu0 0
        %2444 = vmatpush1.bf16.xpose.msra.mxu0 0
        %2445 = vmatprep.subr.bf16.mxu0 0
        %2446 = vmatpush1.bf16.xpose.msra.mxu0 0
        %2447 = vmatprep.subr.bf16.mxu0 0
        %2448 = vmatpush1.bf16.xpose.msra.mxu0 0
        %2449 = vmatprep.subr.bf16.mxu0 0
        %2450 = vmatpush1.bf16.xpose.msra.mxu0 0
        %2451 = vmatprep.subr.bf16.mxu0 0
        %2452 = vmatpush1.bf16.xpose.msra.mxu0 0
        %2453 = vmatprep.subr.bf16.mxu0 0
        %2454 = vmatpush1.bf16.xpose.msra.mxu0 0
        %2455 = vmatprep.subr.bf16.mxu0 0
        %2456 = vmatpush1.bf16.xpose.msra.mxu0 0
        %2457 = vmatprep.subr.bf16.mxu0 0
        %2458 = vmatpush1.bf16.xpose.msra.mxu0 0
        %2459 = vmatprep.subr.bf16.mxu0 0
        %2460 = vmatpush1.bf16.xpose.msra.mxu0 0
        %2461 = vmatprep.subr.bf16.mxu0 0
        %2462 = vmatpush1.bf16.xpose.msra.mxu0 0
        %2463 = vmatprep.subr.bf16.mxu0 0
        %2464 = vmatpush1.bf16.xpose.msra.mxu0 0
        %2465 = vmatprep.subr.bf16.mxu0 0
        %2466 = vmatpush1.bf16.xpose.msra.mxu0 0
        %2467 = vmatprep.mubr.bf16.mxu0 0
        %2468 = vmatmul.mubr.bf16.gmra.mrb[0].mxu0 %v2430
        %v2469 = vpop.f32.mrb[0].mxu0
        %v2470 = vadd.f32 0.0, %v2469
        %v2471 = vpop.f32.mrb[0].mxu0
        %v2472 = vpop.f32.mrb[0].mxu0
        %v2473 = vadd.f32 0.0, %v2472
        %v2474 = vpop.f32.mrb[0].mxu0
        %2475 = vdwg.mxu0
        %2476 = vrot.lane.b32.xlu0 %v1170, 88
        %v2477 = vpop.permute.xlu0 %2476
        %2478 = vrot.lane.b32.xlu0 %v1170, 24
        %v2479 = vpop.permute.xlu0 %2478
        %v2481 = vsel %vm1175, %v2477, 0
        %v2484 = vsel %vm1175, %v2479, 0
        %2486 = vmatprep.subr.bf16.mxu0 0
        %2487 = vmatpush1.bf16.xpose.msra.mxu0 %v2484
        %2488 = vmatprep.subr.bf16.mxu0 0
        %2489 = vmatpush1.bf16.xpose.msra.mxu0 0
        %2490 = vmatprep.subr.bf16.mxu0 0
        %2491 = vmatpush1.bf16.xpose.msra.mxu0 0
        %2492 = vmatprep.subr.bf16.mxu0 0
        %2493 = vmatpush1.bf16.xpose.msra.mxu0 0
        %2494 = vmatprep.subr.bf16.mxu0 0
        %2495 = vmatpush1.bf16.xpose.msra.mxu0 0
        %2496 = vmatprep.subr.bf16.mxu0 0
        %2497 = vmatpush1.bf16.xpose.msra.mxu0 0
        %2498 = vmatprep.subr.bf16.mxu0 0
        %2499 = vmatpush1.bf16.xpose.msra.mxu0 0
        %2500 = vmatprep.subr.bf16.mxu0 0
        %2501 = vmatpush1.bf16.xpose.msra.mxu0 0
        %2502 = vmatprep.subr.bf16.mxu0 0
        %2503 = vmatpush1.bf16.xpose.msra.mxu0 0
        %2504 = vmatprep.subr.bf16.mxu0 0
        %2505 = vmatpush1.bf16.xpose.msra.mxu0 0
        %2506 = vmatprep.subr.bf16.mxu0 0
        %2507 = vmatpush1.bf16.xpose.msra.mxu0 0
        %2508 = vmatprep.subr.bf16.mxu0 0
        %2509 = vmatpush1.bf16.xpose.msra.mxu0 0
        %2510 = vmatprep.subr.bf16.mxu0 0
        %2511 = vmatpush1.bf16.xpose.msra.mxu0 0
        %2512 = vmatprep.subr.bf16.mxu0 0
        %2513 = vmatpush1.bf16.xpose.msra.mxu0 0
        %2514 = vmatprep.subr.bf16.mxu0 0
        %2515 = vmatpush1.bf16.xpose.msra.mxu0 0
        %2516 = vmatprep.subr.bf16.mxu0 0
        %2517 = vmatpush1.bf16.xpose.msra.mxu0 0
        %2518 = vmatprep.mubr.bf16.mxu0 0
        %2519 = vmatmul.mubr.bf16.gmra.mrb[0].mxu0 %v2481
        %v2520 = vpop.f32.mrb[0].mxu0
        %v2521 = vadd.f32 0.0, %v2520
        %v2522 = vpop.f32.mrb[0].mxu0
        %v2523 = vpop.f32.mrb[0].mxu0
        %v2524 = vadd.f32 0.0, %v2523
        %v2525 = vpop.f32.mrb[0].mxu0
        %2526 = vdwg.mxu0
        %v2527 = vmul.f32 %v2470, 0.35355338
        %v2528 = vmul.f32 %v2473, 0.35355338
        %v2529 = vmul.f32 %v2521, 0.35355338
        %v2530 = vmul.f32 %v2524, 0.35355338
        %v2531 = vsel %vm1277, %v2527, -inf
        %2532 = vmax.xlane.f32.xlu0 %v2531
        %v2533 = vpop.xlane.xlu0 %2532
        %v2534 = vsel %vm1281, %v2528, -inf
        %2535 = vmax.xlane.f32.xlu0 %v2534
        %v2536 = vpop.xlane.xlu0 %2535
        %v2537 = vsel %vm1277, %v2529, -inf
        %2538 = vmax.xlane.f32.xlu0 %v2537
        %v2539 = vpop.xlane.xlu0 %2538
        %v2540 = vsel %vm1281, %v2530, -inf
        %2541 = vmax.xlane.f32.xlu0 %v2540
        %v2542 = vpop.xlane.xlu0 %2541
        %v2543 = vsub.f32 %v2527, %v2533
        %v2544 = vsub.f32 %v2528, %v2536
        %v2545 = vsub.f32 %v2529, %v2539
        %v2546 = vsub.f32 %v2530, %v2542
        %v2547 = vmul.f32 %v2543, 1.442695
        %v2548 = vpow.pop %v2547
        %v2549 = vmul.f32 %v2544, 1.442695
        %v2550 = vpow.pop %v2549
        %v2551 = vmul.f32 %v2545, 1.442695
        %v2552 = vpow.pop %v2551
        %v2553 = vmul.f32 %v2546, 1.442695
        %v2554 = vpow.pop %v2553
        %v2555 = vsel %vm1277, %v2548, 0.0
        %2556 = vadd.xlane.f32.xlu0 %v2555
        %v2557 = vpop.xlane.xlu0 %2556
        %v2558 = vsel %vm1281, %v2550, 0.0
        %2559 = vadd.xlane.f32.xlu0 %v2558
        %v2560 = vpop.xlane.xlu0 %2559
        %v2561 = vsel %vm1277, %v2552, 0.0
        %2562 = vadd.xlane.f32.xlu0 %v2561
        %v2563 = vpop.xlane.xlu0 %2562
        %v2564 = vsel %vm1281, %v2554, 0.0
        %2565 = vadd.xlane.f32.xlu0 %v2564
        %v2566 = vpop.xlane.xlu0 %2565
        %v2567 = vrcp.pop %v2557
        %v2568 = vrcp.pop %v2560
        %v2569 = vrcp.pop %v2563
        %v2570 = vrcp.pop %v2566
        %v2571 = vmul.f32 %v2548, %v2567
        %v2572 = vmul.f32 %v2550, %v2568
        %v2573 = vmul.f32 %v2552, %v2569
        %v2574 = vmul.f32 %v2554, %v2570
        %v2575 = vpack.c.bf16 %v2572, %v2571
        %v2576 = vpack.c.bf16 %v2574, %v2573
        %2577 = vrot.lane.b32.xlu0 %v1169, 88
        %v2578 = vpop.permute.xlu0 %2577
        %v2580 = vsel %vm1277, %v2575, 0
        %v2583 = vand.u32 %v2578, %v1331
        %2585 = vmatprep.subr.bf16.mxu0 0
        %2586 = vmatpush1.bf16.msra.mxu0 %v2583
        %2587 = vmatprep.subr.bf16.mxu0 0
        %2588 = vmatpush1.bf16.msra.mxu0 0
        %2589 = vmatprep.subr.bf16.mxu0 0
        %2590 = vmatpush1.bf16.msra.mxu0 0
        %2591 = vmatprep.subr.bf16.mxu0 0
        %2592 = vmatpush1.bf16.msra.mxu0 0
        %2593 = vmatprep.subr.bf16.mxu0 0
        %2594 = vmatpush1.bf16.msra.mxu0 0
        %2595 = vmatprep.subr.bf16.mxu0 0
        %2596 = vmatpush1.bf16.msra.mxu0 0
        %2597 = vmatprep.subr.bf16.mxu0 0
        %2598 = vmatpush1.bf16.msra.mxu0 0
        %2599 = vmatprep.subr.bf16.mxu0 0
        %2600 = vmatpush1.bf16.msra.mxu0 0
        %2601 = vmatprep.subr.bf16.mxu0 0
        %2602 = vmatpush1.bf16.msra.mxu0 0
        %2603 = vmatprep.subr.bf16.mxu0 0
        %2604 = vmatpush1.bf16.msra.mxu0 0
        %2605 = vmatprep.subr.bf16.mxu0 0
        %2606 = vmatpush1.bf16.msra.mxu0 0
        %2607 = vmatprep.subr.bf16.mxu0 0
        %2608 = vmatpush1.bf16.msra.mxu0 0
        %2609 = vmatprep.subr.bf16.mxu0 0
        %2610 = vmatpush1.bf16.msra.mxu0 0
        %2611 = vmatprep.subr.bf16.mxu0 0
        %2612 = vmatpush1.bf16.msra.mxu0 0
        %2613 = vmatprep.subr.bf16.mxu0 0
        %2614 = vmatpush1.bf16.msra.mxu0 0
        %2615 = vmatprep.subr.bf16.mxu0 0
        %2616 = vmatpush1.bf16.msra.mxu0 0
        %2617 = vmatprep.mubr.bf16.mxu0 0
        %2618 = vmatmul.mubr.bf16.gmra.mrb[0].mxu0 %v2580
        %v2619 = vpop.f32.mrb[0].mxu0
        %v2620 = vadd.f32 0.0, %v2619
        %v2621 = vpop.f32.mrb[0].mxu0
        %v2622 = vpop.f32.mrb[0].mxu0
        %v2623 = vadd.f32 0.0, %v2622
        %v2624 = vpop.f32.mrb[0].mxu0
        %2625 = vdwg.mxu0
        %2626 = vrot.lane.b32.xlu0 %v1171, 88
        %v2627 = vpop.permute.xlu0 %2626
        %v2629 = vsel %vm1277, %v2576, 0
        %v2632 = vand.u32 %v2627, %v1331
        %2634 = vmatprep.subr.bf16.mxu0 0
        %2635 = vmatpush1.bf16.msra.mxu0 %v2632
        %2636 = vmatprep.subr.bf16.mxu0 0
        %2637 = vmatpush1.bf16.msra.mxu0 0
        %2638 = vmatprep.subr.bf16.mxu0 0
        %2639 = vmatpush1.bf16.msra.mxu0 0
        %2640 = vmatprep.subr.bf16.mxu0 0
        %2641 = vmatpush1.bf16.msra.mxu0 0
        %2642 = vmatprep.subr.bf16.mxu0 0
        %2643 = vmatpush1.bf16.msra.mxu0 0
        %2644 = vmatprep.subr.bf16.mxu0 0
        %2645 = vmatpush1.bf16.msra.mxu0 0
        %2646 = vmatprep.subr.bf16.mxu0 0
        %2647 = vmatpush1.bf16.msra.mxu0 0
        %2648 = vmatprep.subr.bf16.mxu0 0
        %2649 = vmatpush1.bf16.msra.mxu0 0
        %2650 = vmatprep.subr.bf16.mxu0 0
        %2651 = vmatpush1.bf16.msra.mxu0 0
        %2652 = vmatprep.subr.bf16.mxu0 0
        %2653 = vmatpush1.bf16.msra.mxu0 0
        %2654 = vmatprep.subr.bf16.mxu0 0
        %2655 = vmatpush1.bf16.msra.mxu0 0
        %2656 = vmatprep.subr.bf16.mxu0 0
        %2657 = vmatpush1.bf16.msra.mxu0 0
        %2658 = vmatprep.subr.bf16.mxu0 0
        %2659 = vmatpush1.bf16.msra.mxu0 0
        %2660 = vmatprep.subr.bf16.mxu0 0
        %2661 = vmatpush1.bf16.msra.mxu0 0
        %2662 = vmatprep.subr.bf16.mxu0 0
        %2663 = vmatpush1.bf16.msra.mxu0 0
        %2664 = vmatprep.subr.bf16.mxu0 0
        %2665 = vmatpush1.bf16.msra.mxu0 0
        %2666 = vmatprep.mubr.bf16.mxu0 0
        %2667 = vmatmul.mubr.bf16.gmra.mrb[0].mxu0 %v2629
        %v2668 = vpop.f32.mrb[0].mxu0
        %v2669 = vadd.f32 0.0, %v2668
        %v2670 = vpop.f32.mrb[0].mxu0
        %v2671 = vpop.f32.mrb[0].mxu0
        %v2672 = vadd.f32 0.0, %v2671
        %v2673 = vpop.f32.mrb[0].mxu0
        %2674 = vdwg.mxu0
        %2675 = vrot.lane.b32.xlu0 %v1168, 80
        %v2676 = vpop.permute.xlu0 %2675
        %2677 = vrot.lane.b32.xlu0 %v1168, 16
        %v2678 = vpop.permute.xlu0 %2677
        %v2680 = vsel %vm1175, %v2676, 0
        %v2683 = vsel %vm1175, %v2678, 0
        %2685 = vmatprep.subr.bf16.mxu0 0
        %2686 = vmatpush1.bf16.xpose.msra.mxu0 %v2683
        %2687 = vmatprep.subr.bf16.mxu0 0
        %2688 = vmatpush1.bf16.xpose.msra.mxu0 0
        %2689 = vmatprep.subr.bf16.mxu0 0
        %2690 = vmatpush1.bf16.xpose.msra.mxu0 0
        %2691 = vmatprep.subr.bf16.mxu0 0
        %2692 = vmatpush1.bf16.xpose.msra.mxu0 0
        %2693 = vmatprep.subr.bf16.mxu0 0
        %2694 = vmatpush1.bf16.xpose.msra.mxu0 0
        %2695 = vmatprep.subr.bf16.mxu0 0
        %2696 = vmatpush1.bf16.xpose.msra.mxu0 0
        %2697 = vmatprep.subr.bf16.mxu0 0
        %2698 = vmatpush1.bf16.xpose.msra.mxu0 0
        %2699 = vmatprep.subr.bf16.mxu0 0
        %2700 = vmatpush1.bf16.xpose.msra.mxu0 0
        %2701 = vmatprep.subr.bf16.mxu0 0
        %2702 = vmatpush1.bf16.xpose.msra.mxu0 0
        %2703 = vmatprep.subr.bf16.mxu0 0
        %2704 = vmatpush1.bf16.xpose.msra.mxu0 0
        %2705 = vmatprep.subr.bf16.mxu0 0
        %2706 = vmatpush1.bf16.xpose.msra.mxu0 0
        %2707 = vmatprep.subr.bf16.mxu0 0
        %2708 = vmatpush1.bf16.xpose.msra.mxu0 0
        %2709 = vmatprep.subr.bf16.mxu0 0
        %2710 = vmatpush1.bf16.xpose.msra.mxu0 0
        %2711 = vmatprep.subr.bf16.mxu0 0
        %2712 = vmatpush1.bf16.xpose.msra.mxu0 0
        %2713 = vmatprep.subr.bf16.mxu0 0
        %2714 = vmatpush1.bf16.xpose.msra.mxu0 0
        %2715 = vmatprep.subr.bf16.mxu0 0
        %2716 = vmatpush1.bf16.xpose.msra.mxu0 0
        %2717 = vmatprep.mubr.bf16.mxu0 0
        %2718 = vmatmul.mubr.bf16.gmra.mrb[0].mxu0 %v2680
        %v2719 = vpop.f32.mrb[0].mxu0
        %v2720 = vadd.f32 0.0, %v2719
        %v2721 = vpop.f32.mrb[0].mxu0
        %v2722 = vpop.f32.mrb[0].mxu0
        %v2723 = vadd.f32 0.0, %v2722
        %v2724 = vpop.f32.mrb[0].mxu0
        %2725 = vdwg.mxu0
        %2726 = vrot.lane.b32.xlu0 %v1170, 80
        %v2727 = vpop.permute.xlu0 %2726
        %2728 = vrot.lane.b32.xlu0 %v1170, 16
        %v2729 = vpop.permute.xlu0 %2728
        %v2731 = vsel %vm1175, %v2727, 0
        %v2734 = vsel %vm1175, %v2729, 0
        %2736 = vmatprep.subr.bf16.mxu0 0
        %2737 = vmatpush1.bf16.xpose.msra.mxu0 %v2734
        %2738 = vmatprep.subr.bf16.mxu0 0
        %2739 = vmatpush1.bf16.xpose.msra.mxu0 0
        %2740 = vmatprep.subr.bf16.mxu0 0
        %2741 = vmatpush1.bf16.xpose.msra.mxu0 0
        %2742 = vmatprep.subr.bf16.mxu0 0
        %2743 = vmatpush1.bf16.xpose.msra.mxu0 0
        %2744 = vmatprep.subr.bf16.mxu0 0
        %2745 = vmatpush1.bf16.xpose.msra.mxu0 0
        %2746 = vmatprep.subr.bf16.mxu0 0
        %2747 = vmatpush1.bf16.xpose.msra.mxu0 0
        %2748 = vmatprep.subr.bf16.mxu0 0
        %2749 = vmatpush1.bf16.xpose.msra.mxu0 0
        %2750 = vmatprep.subr.bf16.mxu0 0
        %2751 = vmatpush1.bf16.xpose.msra.mxu0 0
        %2752 = vmatprep.subr.bf16.mxu0 0
        %2753 = vmatpush1.bf16.xpose.msra.mxu0 0
        %2754 = vmatprep.subr.bf16.mxu0 0
        %2755 = vmatpush1.bf16.xpose.msra.mxu0 0
        %2756 = vmatprep.subr.bf16.mxu0 0
        %2757 = vmatpush1.bf16.xpose.msra.mxu0 0
        %2758 = vmatprep.subr.bf16.mxu0 0
        %2759 = vmatpush1.bf16.xpose.msra.mxu0 0
        %2760 = vmatprep.subr.bf16.mxu0 0
        %2761 = vmatpush1.bf16.xpose.msra.mxu0 0
        %2762 = vmatprep.subr.bf16.mxu0 0
        %2763 = vmatpush1.bf16.xpose.msra.mxu0 0
        %2764 = vmatprep.subr.bf16.mxu0 0
        %2765 = vmatpush1.bf16.xpose.msra.mxu0 0
        %2766 = vmatprep.subr.bf16.mxu0 0
        %2767 = vmatpush1.bf16.xpose.msra.mxu0 0
        %2768 = vmatprep.mubr.bf16.mxu0 0
        %2769 = vmatmul.mubr.bf16.gmra.mrb[0].mxu0 %v2731
        %v2770 = vpop.f32.mrb[0].mxu0
        %v2771 = vadd.f32 0.0, %v2770
        %v2772 = vpop.f32.mrb[0].mxu0
        %v2773 = vpop.f32.mrb[0].mxu0
        %v2774 = vadd.f32 0.0, %v2773
        %v2775 = vpop.f32.mrb[0].mxu0
        %2776 = vdwg.mxu0
        %v2777 = vmul.f32 %v2720, 0.35355338
        %v2778 = vmul.f32 %v2723, 0.35355338
        %v2779 = vmul.f32 %v2771, 0.35355338
        %v2780 = vmul.f32 %v2774, 0.35355338
        %v2781 = vsel %vm1277, %v2777, -inf
        %2782 = vmax.xlane.f32.xlu0 %v2781
        %v2783 = vpop.xlane.xlu0 %2782
        %v2784 = vsel %vm1281, %v2778, -inf
        %2785 = vmax.xlane.f32.xlu0 %v2784
        %v2786 = vpop.xlane.xlu0 %2785
        %v2787 = vsel %vm1277, %v2779, -inf
        %2788 = vmax.xlane.f32.xlu0 %v2787
        %v2789 = vpop.xlane.xlu0 %2788
        %v2790 = vsel %vm1281, %v2780, -inf
        %2791 = vmax.xlane.f32.xlu0 %v2790
        %v2792 = vpop.xlane.xlu0 %2791
        %v2793 = vsub.f32 %v2777, %v2783
        %v2794 = vsub.f32 %v2778, %v2786
        %v2795 = vsub.f32 %v2779, %v2789
        %v2796 = vsub.f32 %v2780, %v2792
        %v2797 = vmul.f32 %v2793, 1.442695
        %v2798 = vpow.pop %v2797
        %v2799 = vmul.f32 %v2794, 1.442695
        %v2800 = vpow.pop %v2799
        %v2801 = vmul.f32 %v2795, 1.442695
        %v2802 = vpow.pop %v2801
        %v2803 = vmul.f32 %v2796, 1.442695
        %v2804 = vpow.pop %v2803
        %v2805 = vsel %vm1277, %v2798, 0.0
        %2806 = vadd.xlane.f32.xlu0 %v2805
        %v2807 = vpop.xlane.xlu0 %2806
        %v2808 = vsel %vm1281, %v2800, 0.0
        %2809 = vadd.xlane.f32.xlu0 %v2808
        %v2810 = vpop.xlane.xlu0 %2809
        %v2811 = vsel %vm1277, %v2802, 0.0
        %2812 = vadd.xlane.f32.xlu0 %v2811
        %v2813 = vpop.xlane.xlu0 %2812
        %v2814 = vsel %vm1281, %v2804, 0.0
        %2815 = vadd.xlane.f32.xlu0 %v2814
        %v2816 = vpop.xlane.xlu0 %2815
        %v2817 = vrcp.pop %v2807
        %v2818 = vrcp.pop %v2810
        %v2819 = vrcp.pop %v2813
        %v2820 = vrcp.pop %v2816
        %v2821 = vmul.f32 %v2798, %v2817
        %v2822 = vmul.f32 %v2800, %v2818
        %v2823 = vmul.f32 %v2802, %v2819
        %v2824 = vmul.f32 %v2804, %v2820
        %v2825 = vpack.c.bf16 %v2822, %v2821
        %v2826 = vpack.c.bf16 %v2824, %v2823
        %2827 = vrot.lane.b32.xlu0 %v1169, 80
        %v2828 = vpop.permute.xlu0 %2827
        %v2830 = vsel %vm1277, %v2825, 0
        %v2833 = vand.u32 %v2828, %v1331
        %2835 = vmatprep.subr.bf16.mxu0 0
        %2836 = vmatpush1.bf16.msra.mxu0 %v2833
        %2837 = vmatprep.subr.bf16.mxu0 0
        %2838 = vmatpush1.bf16.msra.mxu0 0
        %2839 = vmatprep.subr.bf16.mxu0 0
        %2840 = vmatpush1.bf16.msra.mxu0 0
        %2841 = vmatprep.subr.bf16.mxu0 0
        %2842 = vmatpush1.bf16.msra.mxu0 0
        %2843 = vmatprep.subr.bf16.mxu0 0
        %2844 = vmatpush1.bf16.msra.mxu0 0
        %2845 = vmatprep.subr.bf16.mxu0 0
        %2846 = vmatpush1.bf16.msra.mxu0 0
        %2847 = vmatprep.subr.bf16.mxu0 0
        %2848 = vmatpush1.bf16.msra.mxu0 0
        %2849 = vmatprep.subr.bf16.mxu0 0
        %2850 = vmatpush1.bf16.msra.mxu0 0
        %2851 = vmatprep.subr.bf16.mxu0 0
        %2852 = vmatpush1.bf16.msra.mxu0 0
        %2853 = vmatprep.subr.bf16.mxu0 0
        %2854 = vmatpush1.bf16.msra.mxu0 0
        %2855 = vmatprep.subr.bf16.mxu0 0
        %2856 = vmatpush1.bf16.msra.mxu0 0
        %2857 = vmatprep.subr.bf16.mxu0 0
        %2858 = vmatpush1.bf16.msra.mxu0 0
        %2859 = vmatprep.subr.bf16.mxu0 0
        %2860 = vmatpush1.bf16.msra.mxu0 0
        %2861 = vmatprep.subr.bf16.mxu0 0
        %2862 = vmatpush1.bf16.msra.mxu0 0
        %2863 = vmatprep.subr.bf16.mxu0 0
        %2864 = vmatpush1.bf16.msra.mxu0 0
        %2865 = vmatprep.subr.bf16.mxu0 0
        %2866 = vmatpush1.bf16.msra.mxu0 0
        %2867 = vmatprep.mubr.bf16.mxu0 0
        %2868 = vmatmul.mubr.bf16.gmra.mrb[0].mxu0 %v2830
        %v2869 = vpop.f32.mrb[0].mxu0
        %v2870 = vadd.f32 0.0, %v2869
        %v2871 = vpop.f32.mrb[0].mxu0
        %v2872 = vpop.f32.mrb[0].mxu0
        %v2873 = vadd.f32 0.0, %v2872
        %v2874 = vpop.f32.mrb[0].mxu0
        %2875 = vdwg.mxu0
        %2876 = vrot.lane.b32.xlu0 %v1171, 80
        %v2877 = vpop.permute.xlu0 %2876
        %v2879 = vsel %vm1277, %v2826, 0
        %v2882 = vand.u32 %v2877, %v1331
        %2884 = vmatprep.subr.bf16.mxu0 0
        %2885 = vmatpush1.bf16.msra.mxu0 %v2882
        %2886 = vmatprep.subr.bf16.mxu0 0
        %2887 = vmatpush1.bf16.msra.mxu0 0
        %2888 = vmatprep.subr.bf16.mxu0 0
        %2889 = vmatpush1.bf16.msra.mxu0 0
        %2890 = vmatprep.subr.bf16.mxu0 0
        %2891 = vmatpush1.bf16.msra.mxu0 0
        %2892 = vmatprep.subr.bf16.mxu0 0
        %2893 = vmatpush1.bf16.msra.mxu0 0
        %2894 = vmatprep.subr.bf16.mxu0 0
        %2895 = vmatpush1.bf16.msra.mxu0 0
        %2896 = vmatprep.subr.bf16.mxu0 0
        %2897 = vmatpush1.bf16.msra.mxu0 0
        %2898 = vmatprep.subr.bf16.mxu0 0
        %2899 = vmatpush1.bf16.msra.mxu0 0
        %2900 = vmatprep.subr.bf16.mxu0 0
        %2901 = vmatpush1.bf16.msra.mxu0 0
        %2902 = vmatprep.subr.bf16.mxu0 0
        %2903 = vmatpush1.bf16.msra.mxu0 0
        %2904 = vmatprep.subr.bf16.mxu0 0
        %2905 = vmatpush1.bf16.msra.mxu0 0
        %2906 = vmatprep.subr.bf16.mxu0 0
        %2907 = vmatpush1.bf16.msra.mxu0 0
        %2908 = vmatprep.subr.bf16.mxu0 0
        %2909 = vmatpush1.bf16.msra.mxu0 0
        %2910 = vmatprep.subr.bf16.mxu0 0
        %2911 = vmatpush1.bf16.msra.mxu0 0
        %2912 = vmatprep.subr.bf16.mxu0 0
        %2913 = vmatpush1.bf16.msra.mxu0 0
        %2914 = vmatprep.subr.bf16.mxu0 0
        %2915 = vmatpush1.bf16.msra.mxu0 0
        %2916 = vmatprep.mubr.bf16.mxu0 0
        %2917 = vmatmul.mubr.bf16.gmra.mrb[0].mxu0 %v2879
        %v2918 = vpop.f32.mrb[0].mxu0
        %v2919 = vadd.f32 0.0, %v2918
        %v2920 = vpop.f32.mrb[0].mxu0
        %v2921 = vpop.f32.mrb[0].mxu0
        %v2922 = vadd.f32 0.0, %v2921
        %v2923 = vpop.f32.mrb[0].mxu0
        %2924 = vdwg.mxu0
        %2925 = vrot.lane.b32.xlu0 %v1168, 72
        %v2926 = vpop.permute.xlu0 %2925
        %2927 = vrot.lane.b32.xlu0 %v1168, 8
        %v2928 = vpop.permute.xlu0 %2927
        %v2930 = vsel %vm1175, %v2926, 0
        %v2933 = vsel %vm1175, %v2928, 0
        %2935 = vmatprep.subr.bf16.mxu0 0
        %2936 = vmatpush1.bf16.xpose.msra.mxu0 %v2933
        %2937 = vmatprep.subr.bf16.mxu0 0
        %2938 = vmatpush1.bf16.xpose.msra.mxu0 0
        %2939 = vmatprep.subr.bf16.mxu0 0
        %2940 = vmatpush1.bf16.xpose.msra.mxu0 0
        %2941 = vmatprep.subr.bf16.mxu0 0
        %2942 = vmatpush1.bf16.xpose.msra.mxu0 0
        %2943 = vmatprep.subr.bf16.mxu0 0
        %2944 = vmatpush1.bf16.xpose.msra.mxu0 0
        %2945 = vmatprep.subr.bf16.mxu0 0
        %2946 = vmatpush1.bf16.xpose.msra.mxu0 0
        %2947 = vmatprep.subr.bf16.mxu0 0
        %2948 = vmatpush1.bf16.xpose.msra.mxu0 0
        %2949 = vmatprep.subr.bf16.mxu0 0
        %2950 = vmatpush1.bf16.xpose.msra.mxu0 0
        %2951 = vmatprep.subr.bf16.mxu0 0
        %2952 = vmatpush1.bf16.xpose.msra.mxu0 0
        %2953 = vmatprep.subr.bf16.mxu0 0
        %2954 = vmatpush1.bf16.xpose.msra.mxu0 0
        %2955 = vmatprep.subr.bf16.mxu0 0
        %2956 = vmatpush1.bf16.xpose.msra.mxu0 0
        %2957 = vmatprep.subr.bf16.mxu0 0
        %2958 = vmatpush1.bf16.xpose.msra.mxu0 0
        %2959 = vmatprep.subr.bf16.mxu0 0
        %2960 = vmatpush1.bf16.xpose.msra.mxu0 0
        %2961 = vmatprep.subr.bf16.mxu0 0
        %2962 = vmatpush1.bf16.xpose.msra.mxu0 0
        %2963 = vmatprep.subr.bf16.mxu0 0
        %2964 = vmatpush1.bf16.xpose.msra.mxu0 0
        %2965 = vmatprep.subr.bf16.mxu0 0
        %2966 = vmatpush1.bf16.xpose.msra.mxu0 0
        %2967 = vmatprep.mubr.bf16.mxu0 0
        %2968 = vmatmul.mubr.bf16.gmra.mrb[0].mxu0 %v2930
        %v2969 = vpop.f32.mrb[0].mxu0
        %v2970 = vadd.f32 0.0, %v2969
        %v2971 = vpop.f32.mrb[0].mxu0
        %v2972 = vpop.f32.mrb[0].mxu0
        %v2973 = vadd.f32 0.0, %v2972
        %v2974 = vpop.f32.mrb[0].mxu0
        %2975 = vdwg.mxu0
        %2976 = vrot.lane.b32.xlu0 %v1170, 72
        %v2977 = vpop.permute.xlu0 %2976
        %2978 = vrot.lane.b32.xlu0 %v1170, 8
        %v2979 = vpop.permute.xlu0 %2978
        %v2981 = vsel %vm1175, %v2977, 0
        %v2984 = vsel %vm1175, %v2979, 0
        %2986 = vmatprep.subr.bf16.mxu0 0
        %2987 = vmatpush1.bf16.xpose.msra.mxu0 %v2984
        %2988 = vmatprep.subr.bf16.mxu0 0
        %2989 = vmatpush1.bf16.xpose.msra.mxu0 0
        %2990 = vmatprep.subr.bf16.mxu0 0
        %2991 = vmatpush1.bf16.xpose.msra.mxu0 0
        %2992 = vmatprep.subr.bf16.mxu0 0
        %2993 = vmatpush1.bf16.xpose.msra.mxu0 0
        %2994 = vmatprep.subr.bf16.mxu0 0
        %2995 = vmatpush1.bf16.xpose.msra.mxu0 0
        %2996 = vmatprep.subr.bf16.mxu0 0
        %2997 = vmatpush1.bf16.xpose.msra.mxu0 0
        %2998 = vmatprep.subr.bf16.mxu0 0
        %2999 = vmatpush1.bf16.xpose.msra.mxu0 0
        %3000 = vmatprep.subr.bf16.mxu0 0
        %3001 = vmatpush1.bf16.xpose.msra.mxu0 0
        %3002 = vmatprep.subr.bf16.mxu0 0
        %3003 = vmatpush1.bf16.xpose.msra.mxu0 0
        %3004 = vmatprep.subr.bf16.mxu0 0
        %3005 = vmatpush1.bf16.xpose.msra.mxu0 0
        %3006 = vmatprep.subr.bf16.mxu0 0
        %3007 = vmatpush1.bf16.xpose.msra.mxu0 0
        %3008 = vmatprep.subr.bf16.mxu0 0
        %3009 = vmatpush1.bf16.xpose.msra.mxu0 0
        %3010 = vmatprep.subr.bf16.mxu0 0
        %3011 = vmatpush1.bf16.xpose.msra.mxu0 0
        %3012 = vmatprep.subr.bf16.mxu0 0
        %3013 = vmatpush1.bf16.xpose.msra.mxu0 0
        %3014 = vmatprep.subr.bf16.mxu0 0
        %3015 = vmatpush1.bf16.xpose.msra.mxu0 0
        %3016 = vmatprep.subr.bf16.mxu0 0
        %3017 = vmatpush1.bf16.xpose.msra.mxu0 0
        %3018 = vmatprep.mubr.bf16.mxu0 0
        %3019 = vmatmul.mubr.bf16.gmra.mrb[0].mxu0 %v2981
        %v3020 = vpop.f32.mrb[0].mxu0
        %v3021 = vadd.f32 0.0, %v3020
        %v3022 = vpop.f32.mrb[0].mxu0
        %v3023 = vpop.f32.mrb[0].mxu0
        %v3024 = vadd.f32 0.0, %v3023
        %v3025 = vpop.f32.mrb[0].mxu0
        %3026 = vdwg.mxu0
        %v3027 = vmul.f32 %v2970, 0.35355338
        %v3028 = vmul.f32 %v2973, 0.35355338
        %v3029 = vmul.f32 %v3021, 0.35355338
        %v3030 = vmul.f32 %v3024, 0.35355338
        %v3031 = vsel %vm1277, %v3027, -inf
        %3032 = vmax.xlane.f32.xlu0 %v3031
        %v3033 = vpop.xlane.xlu0 %3032
        %v3034 = vsel %vm1281, %v3028, -inf
        %3035 = vmax.xlane.f32.xlu0 %v3034
        %v3036 = vpop.xlane.xlu0 %3035
        %v3037 = vsel %vm1277, %v3029, -inf
        %3038 = vmax.xlane.f32.xlu0 %v3037
        %v3039 = vpop.xlane.xlu0 %3038
        %v3040 = vsel %vm1281, %v3030, -inf
        %3041 = vmax.xlane.f32.xlu0 %v3040
        %v3042 = vpop.xlane.xlu0 %3041
        %v3043 = vsub.f32 %v3027, %v3033
        %v3044 = vsub.f32 %v3028, %v3036
        %v3045 = vsub.f32 %v3029, %v3039
        %v3046 = vsub.f32 %v3030, %v3042
        %v3047 = vmul.f32 %v3043, 1.442695
        %v3048 = vpow.pop %v3047
        %v3049 = vmul.f32 %v3044, 1.442695
        %v3050 = vpow.pop %v3049
        %v3051 = vmul.f32 %v3045, 1.442695
        %v3052 = vpow.pop %v3051
        %v3053 = vmul.f32 %v3046, 1.442695
        %v3054 = vpow.pop %v3053
        %v3055 = vsel %vm1277, %v3048, 0.0
        %3056 = vadd.xlane.f32.xlu0 %v3055
        %v3057 = vpop.xlane.xlu0 %3056
        %v3058 = vsel %vm1281, %v3050, 0.0
        %3059 = vadd.xlane.f32.xlu0 %v3058
        %v3060 = vpop.xlane.xlu0 %3059
        %v3061 = vsel %vm1277, %v3052, 0.0
        %3062 = vadd.xlane.f32.xlu0 %v3061
        %v3063 = vpop.xlane.xlu0 %3062
        %v3064 = vsel %vm1281, %v3054, 0.0
        %3065 = vadd.xlane.f32.xlu0 %v3064
        %v3066 = vpop.xlane.xlu0 %3065
        %v3067 = vrcp.pop %v3057
        %v3068 = vrcp.pop %v3060
        %v3069 = vrcp.pop %v3063
        %v3070 = vrcp.pop %v3066
        %v3071 = vmul.f32 %v3048, %v3067
        %v3072 = vmul.f32 %v3050, %v3068
        %v3073 = vmul.f32 %v3052, %v3069
        %v3074 = vmul.f32 %v3054, %v3070
        %v3075 = vpack.c.bf16 %v3072, %v3071
        %v3076 = vpack.c.bf16 %v3074, %v3073
        %3077 = vrot.lane.b32.xlu0 %v1169, 72
        %v3078 = vpop.permute.xlu0 %3077
        %v3080 = vsel %vm1277, %v3075, 0
        %v3083 = vand.u32 %v3078, %v1331
        %3085 = vmatprep.subr.bf16.mxu0 0
        %3086 = vmatpush1.bf16.msra.mxu0 %v3083
        %3087 = vmatprep.subr.bf16.mxu0 0
        %3088 = vmatpush1.bf16.msra.mxu0 0
        %3089 = vmatprep.subr.bf16.mxu0 0
        %3090 = vmatpush1.bf16.msra.mxu0 0
        %3091 = vmatprep.subr.bf16.mxu0 0
        %3092 = vmatpush1.bf16.msra.mxu0 0
        %3093 = vmatprep.subr.bf16.mxu0 0
        %3094 = vmatpush1.bf16.msra.mxu0 0
        %3095 = vmatprep.subr.bf16.mxu0 0
        %3096 = vmatpush1.bf16.msra.mxu0 0
        %3097 = vmatprep.subr.bf16.mxu0 0
        %3098 = vmatpush1.bf16.msra.mxu0 0
        %3099 = vmatprep.subr.bf16.mxu0 0
        %3100 = vmatpush1.bf16.msra.mxu0 0
        %3101 = vmatprep.subr.bf16.mxu0 0
        %3102 = vmatpush1.bf16.msra.mxu0 0
        %3103 = vmatprep.subr.bf16.mxu0 0
        %3104 = vmatpush1.bf16.msra.mxu0 0
        %3105 = vmatprep.subr.bf16.mxu0 0
        %3106 = vmatpush1.bf16.msra.mxu0 0
        %3107 = vmatprep.subr.bf16.mxu0 0
        %3108 = vmatpush1.bf16.msra.mxu0 0
        %3109 = vmatprep.subr.bf16.mxu0 0
        %3110 = vmatpush1.bf16.msra.mxu0 0
        %3111 = vmatprep.subr.bf16.mxu0 0
        %3112 = vmatpush1.bf16.msra.mxu0 0
        %3113 = vmatprep.subr.bf16.mxu0 0
        %3114 = vmatpush1.bf16.msra.mxu0 0
        %3115 = vmatprep.subr.bf16.mxu0 0
        %3116 = vmatpush1.bf16.msra.mxu0 0
        %3117 = vmatprep.mubr.bf16.mxu0 0
        %3118 = vmatmul.mubr.bf16.gmra.mrb[0].mxu0 %v3080
        %v3119 = vpop.f32.mrb[0].mxu0
        %v3120 = vadd.f32 0.0, %v3119
        %v3121 = vpop.f32.mrb[0].mxu0
        %v3122 = vpop.f32.mrb[0].mxu0
        %v3123 = vadd.f32 0.0, %v3122
        %v3124 = vpop.f32.mrb[0].mxu0
        %3125 = vdwg.mxu0
        %3126 = vrot.lane.b32.xlu0 %v1171, 72
        %v3127 = vpop.permute.xlu0 %3126
        %v3129 = vsel %vm1277, %v3076, 0
        %v3132 = vand.u32 %v3127, %v1331
        %3134 = vmatprep.subr.bf16.mxu0 0
        %3135 = vmatpush1.bf16.msra.mxu0 %v3132
        %3136 = vmatprep.subr.bf16.mxu0 0
        %3137 = vmatpush1.bf16.msra.mxu0 0
        %3138 = vmatprep.subr.bf16.mxu0 0
        %3139 = vmatpush1.bf16.msra.mxu0 0
        %3140 = vmatprep.subr.bf16.mxu0 0
        %3141 = vmatpush1.bf16.msra.mxu0 0
        %3142 = vmatprep.subr.bf16.mxu0 0
        %3143 = vmatpush1.bf16.msra.mxu0 0
        %3144 = vmatprep.subr.bf16.mxu0 0
        %3145 = vmatpush1.bf16.msra.mxu0 0
        %3146 = vmatprep.subr.bf16.mxu0 0
        %3147 = vmatpush1.bf16.msra.mxu0 0
        %3148 = vmatprep.subr.bf16.mxu0 0
        %3149 = vmatpush1.bf16.msra.mxu0 0
        %3150 = vmatprep.subr.bf16.mxu0 0
        %3151 = vmatpush1.bf16.msra.mxu0 0
        %3152 = vmatprep.subr.bf16.mxu0 0
        %3153 = vmatpush1.bf16.msra.mxu0 0
        %3154 = vmatprep.subr.bf16.mxu0 0
        %3155 = vmatpush1.bf16.msra.mxu0 0
        %3156 = vmatprep.subr.bf16.mxu0 0
        %3157 = vmatpush1.bf16.msra.mxu0 0
        %3158 = vmatprep.subr.bf16.mxu0 0
        %3159 = vmatpush1.bf16.msra.mxu0 0
        %3160 = vmatprep.subr.bf16.mxu0 0
        %3161 = vmatpush1.bf16.msra.mxu0 0
        %3162 = vmatprep.subr.bf16.mxu0 0
        %3163 = vmatpush1.bf16.msra.mxu0 0
        %3164 = vmatprep.subr.bf16.mxu0 0
        %3165 = vmatpush1.bf16.msra.mxu0 0
        %3166 = vmatprep.mubr.bf16.mxu0 0
        %3167 = vmatmul.mubr.bf16.gmra.mrb[0].mxu0 %v3129
        %v3168 = vpop.f32.mrb[0].mxu0
        %v3169 = vadd.f32 0.0, %v3168
        %v3170 = vpop.f32.mrb[0].mxu0
        %v3171 = vpop.f32.mrb[0].mxu0
        %v3172 = vadd.f32 0.0, %v3171
        %v3173 = vpop.f32.mrb[0].mxu0
        %3174 = vdwg.mxu0
        %3179 = vrot.lane.b32.xlu0 %v1619, 8
        %v3180 = vpop.permute.xlu0 %3179
        %3181 = vrot.lane.b32.xlu0 %v1622, 8
        %v3182 = vpop.permute.xlu0 %3181
        %3183 = vrot.lane.b32.xlu0 %v1669, 8
        %v3184 = vpop.permute.xlu0 %3183
        %3185 = vrot.lane.b32.xlu0 %v1672, 8
        %v3186 = vpop.permute.xlu0 %3185
        %3195 = vrot.lane.b32.xlu0 %v1870, 16
        %v3196 = vpop.permute.xlu0 %3195
        %3197 = vrot.lane.b32.xlu0 %v1873, 16
        %v3198 = vpop.permute.xlu0 %3197
        %3199 = vrot.lane.b32.xlu0 %v1919, 16
        %v3200 = vpop.permute.xlu0 %3199
        %3201 = vrot.lane.b32.xlu0 %v1922, 16
        %v3202 = vpop.permute.xlu0 %3201
        %3211 = vrot.lane.b32.xlu0 %v2120, 24
        %v3212 = vpop.permute.xlu0 %3211
        %3213 = vrot.lane.b32.xlu0 %v2123, 24
        %v3214 = vpop.permute.xlu0 %3213
        %3215 = vrot.lane.b32.xlu0 %v2169, 24
        %v3216 = vpop.permute.xlu0 %3215
        %3217 = vrot.lane.b32.xlu0 %v2172, 24
        %v3218 = vpop.permute.xlu0 %3217
        %3227 = vrot.lane.b32.xlu0 %v2370, 32
        %v3228 = vpop.permute.xlu0 %3227
        %3229 = vrot.lane.b32.xlu0 %v2373, 32
        %v3230 = vpop.permute.xlu0 %3229
        %3231 = vrot.lane.b32.xlu0 %v2419, 32
        %v3232 = vpop.permute.xlu0 %3231
        %3233 = vrot.lane.b32.xlu0 %v2422, 32
        %v3234 = vpop.permute.xlu0 %3233
        %3243 = vrot.lane.b32.xlu0 %v2620, 40
        %v3244 = vpop.permute.xlu0 %3243
        %3245 = vrot.lane.b32.xlu0 %v2623, 40
        %v3246 = vpop.permute.xlu0 %3245
        %3247 = vrot.lane.b32.xlu0 %v2669, 40
        %v3248 = vpop.permute.xlu0 %3247
        %3249 = vrot.lane.b32.xlu0 %v2672, 40
        %v3250 = vpop.permute.xlu0 %3249
        %3259 = vrot.lane.b32.xlu0 %v2870, 48
        %v3260 = vpop.permute.xlu0 %3259
        %3261 = vrot.lane.b32.xlu0 %v2873, 48
        %v3262 = vpop.permute.xlu0 %3261
        %3263 = vrot.lane.b32.xlu0 %v2919, 48
        %v3264 = vpop.permute.xlu0 %3263
        %3265 = vrot.lane.b32.xlu0 %v2922, 48
        %v3266 = vpop.permute.xlu0 %3265
        %3275 = vrot.lane.b32.xlu0 %v3120, 56
        %v3276 = vpop.permute.xlu0 %3275
        %3277 = vrot.lane.b32.xlu0 %v3123, 56
        %v3278 = vpop.permute.xlu0 %3277
        %3279 = vrot.lane.b32.xlu0 %v3169, 56
        %v3280 = vpop.permute.xlu0 %3279
        %3281 = vrot.lane.b32.xlu0 %v3172, 56
        %v3282 = vpop.permute.xlu0 %3281
        %v3287 = vsel %vm1175, %v1370, %v3180
        %v3288 = vsel %vm1175, %v1373, %v3182
        %v3289 = vsel %vm1175, %v1417, %v3184
        %v3290 = vsel %vm1175, %v1420, %v3186
        %vm3291 = vcmask 130048
        %v3292 = vsel %vm3291, %v3287, %v3196
        %v3293 = vsel %vm3291, %v3288, %v3198
        %v3294 = vsel %vm3291, %v3289, %v3200
        %v3295 = vsel %vm3291, %v3290, %v3202
        %vm3296 = vcmask 195584
        %v3297 = vsel %vm3296, %v3292, %v3212
        %v3298 = vsel %vm3296, %v3293, %v3214
        %v3299 = vsel %vm3296, %v3294, %v3216
        %v3300 = vsel %vm3296, %v3295, %v3218
        %vm3301 = vcmask 261120
        %v3302 = vsel %vm3301, %v3297, %v3228
        %v3303 = vsel %vm3301, %v3298, %v3230
        %v3304 = vsel %vm3301, %v3299, %v3232
        %v3305 = vsel %vm3301, %v3300, %v3234
        %vm3306 = vcmask 326656
        %v3307 = vsel %vm3306, %v3302, %v3244
        %v3308 = vsel %vm3306, %v3303, %v3246
        %v3309 = vsel %vm3306, %v3304, %v3248
        %v3310 = vsel %vm3306, %v3305, %v3250
        %vm3311 = vcmask 392192
        %v3312 = vsel %vm3311, %v3307, %v3260
        %v3313 = vsel %vm3311, %v3308, %v3262
        %v3314 = vsel %vm3311, %v3309, %v3264
        %v3315 = vsel %vm3311, %v3310, %v3266
        %vm3316 = vcmask 457728
        %v3317 = vsel %vm3316, %v3312, %v3276
        %v3318 = vsel %vm3316, %v3313, %v3278
        %v3319 = vsel %vm3316, %v3314, %v3280
        %v3320 = vsel %vm3316, %v3315, %v3282
        %v3325 = vcombine.high %v3317, %v3317
        %v3327 = vunpack.c.l.s4 1966171168
        %v3328 = vunpack.c.0.s8 %v3327
        %v3329 = vlaneseq
        %v3330 = vshrl.u32 %v3329, 7
        %v3331 = vsub.s32 %v3328, %v3330
        %v3332 = vrot.slane %v3317, %v3331
        %v3334 = vunpack.c.l.s4 1966171168
        %v3335 = vunpack.c.0.s8 %v3334
        %v3336 = vlaneseq
        %v3337 = vshrl.u32 %v3336, 7
        %v3338 = vsub.s32 %v3335, %v3337
        %v3339 = vrot.slane %v3325, %v3338
        %v3340 = vcombine.high %v3332, %v3332
        %v3341 = vcombine.high %v3339, %v3339
        %v3343 = vunpack.c.l.s4 1966171168
        %v3344 = vunpack.c.0.s8 %v3343
        %v3345 = vlaneseq
        %v3346 = vshrl.u32 %v3345, 7
        %v3347 = vsub.s32 %v3344, %v3346
        %v3348 = vrot.slane %v3332, %v3347
        %v3350 = vunpack.c.l.s4 1966171168
        %v3351 = vunpack.c.0.s8 %v3350
        %v3352 = vlaneseq
        %v3353 = vshrl.u32 %v3352, 7
        %v3354 = vsub.s32 %v3351, %v3353
        %v3355 = vrot.slane %v3339, %v3354
        %v3357 = vunpack.c.l.s4 1966171168
        %v3358 = vunpack.c.0.s8 %v3357
        %v3359 = vlaneseq
        %v3360 = vshrl.u32 %v3359, 7
        %v3361 = vsub.s32 %v3358, %v3360
        %v3362 = vrot.slane %v3340, %v3361
        %v3364 = vunpack.c.l.s4 1966171168
        %v3365 = vunpack.c.0.s8 %v3364
        %v3366 = vlaneseq
        %v3367 = vshrl.u32 %v3366, 7
        %v3368 = vsub.s32 %v3365, %v3367
        %v3369 = vrot.slane %v3341, %v3368
        %v3370 = vcombine.high %v3348, %v3348
        %v3371 = vcombine.high %v3355, %v3355
        %v3372 = vcombine.high %v3362, %v3362
        %v3373 = vcombine.high %v3369, %v3369
        %v3375 = vunpack.c.l.s4 1966171168
        %v3376 = vunpack.c.0.s8 %v3375
        %v3377 = vlaneseq
        %v3378 = vshrl.u32 %v3377, 7
        %v3379 = vsub.s32 %v3376, %v3378
        %v3380 = vrot.slane %v3318, %v3379
        %v3382 = vunpack.c.l.s4 1966171168
        %v3383 = vunpack.c.0.s8 %v3382
        %v3384 = vlaneseq
        %v3385 = vshrl.u32 %v3384, 7
        %v3386 = vsub.s32 %v3383, %v3385
        %v3387 = vrot.slane %v3380, %v3386
        %v3388 = vcombine.high %v3319, %v3319
        %v3390 = vunpack.c.l.s4 1966171168
        %v3391 = vunpack.c.0.s8 %v3390
        %v3392 = vlaneseq
        %v3393 = vshrl.u32 %v3392, 7
        %v3394 = vsub.s32 %v3391, %v3393
        %v3395 = vrot.slane %v3319, %v3394
        %v3397 = vunpack.c.l.s4 1966171168
        %v3398 = vunpack.c.0.s8 %v3397
        %v3399 = vlaneseq
        %v3400 = vshrl.u32 %v3399, 7
        %v3401 = vsub.s32 %v3398, %v3400
        %v3402 = vrot.slane %v3388, %v3401
        %v3403 = vcombine.high %v3395, %v3395
        %v3404 = vcombine.high %v3402, %v3402
        %v3406 = vunpack.c.l.s4 1966171168
        %v3407 = vunpack.c.0.s8 %v3406
        %v3408 = vlaneseq
        %v3409 = vshrl.u32 %v3408, 7
        %v3410 = vsub.s32 %v3407, %v3409
        %v3411 = vrot.slane %v3395, %v3410
        %v3413 = vunpack.c.l.s4 1966171168
        %v3414 = vunpack.c.0.s8 %v3413
        %v3415 = vlaneseq
        %v3416 = vshrl.u32 %v3415, 7
        %v3417 = vsub.s32 %v3414, %v3416
        %v3418 = vrot.slane %v3402, %v3417
        %v3420 = vunpack.c.l.s4 1966171168
        %v3421 = vunpack.c.0.s8 %v3420
        %v3422 = vlaneseq
        %v3423 = vshrl.u32 %v3422, 7
        %v3424 = vsub.s32 %v3421, %v3423
        %v3425 = vrot.slane %v3403, %v3424
        %v3427 = vunpack.c.l.s4 1966171168
        %v3428 = vunpack.c.0.s8 %v3427
        %v3429 = vlaneseq
        %v3430 = vshrl.u32 %v3429, 7
        %v3431 = vsub.s32 %v3428, %v3430
        %v3432 = vrot.slane %v3404, %v3431
        %v3433 = vcombine.high %v3411, %v3411
        %v3434 = vcombine.high %v3418, %v3418
        %v3435 = vcombine.high %v3425, %v3425
        %v3436 = vcombine.high %v3432, %v3432
        %v3438 = vunpack.c.l.s4 1966171168
        %v3439 = vunpack.c.0.s8 %v3438
        %v3440 = vlaneseq
        %v3441 = vshrl.u32 %v3440, 7
        %v3442 = vsub.s32 %v3439, %v3441
        %v3443 = vrot.slane %v3320, %v3442
        %v3445 = vunpack.c.l.s4 1966171168
        %v3446 = vunpack.c.0.s8 %v3445
        %v3447 = vlaneseq
        %v3448 = vshrl.u32 %v3447, 7
        %v3449 = vsub.s32 %v3446, %v3448
        %v3450 = vrot.slane %v3443, %v3449
        %v3451 = vcombine.low %v3348, %v3362
        %v3452 = vcombine.low %v3370, %v3372
        %v3453 = vcombine.low %v3355, %v3369
        %v3454 = vcombine.low %v3371, %v3373
        %v3456 = vunpack.c.l.s4 1966171168
        %v3457 = vunpack.c.0.s8 %v3456
        %v3458 = vlaneseq
        %v3459 = vshrl.u32 %v3458, 7
        %v3460 = vsub.s32 %v3457, %v3459
        %v3461 = vrot.slane %v3451, %v3460
        %v3463 = vunpack.c.l.s4 1966171168
        %v3464 = vunpack.c.0.s8 %v3463
        %v3465 = vlaneseq
        %v3466 = vshrl.u32 %v3465, 7
        %v3467 = vsub.s32 %v3464, %v3466
        %v3468 = vrot.slane %v3452, %v3467
        %v3470 = vunpack.c.l.s4 1966171168
        %v3471 = vunpack.c.0.s8 %v3470
        %v3472 = vlaneseq
        %v3473 = vshrl.u32 %v3472, 7
        %v3474 = vsub.s32 %v3471, %v3473
        %v3475 = vrot.slane %v3453, %v3474
        %v3477 = vunpack.c.l.s4 1966171168
        %v3478 = vunpack.c.0.s8 %v3477
        %v3479 = vlaneseq
        %v3480 = vshrl.u32 %v3479, 7
        %v3481 = vsub.s32 %v3478, %v3480
        %v3482 = vrot.slane %v3454, %v3481
        %v3483 = vcombine.low %v3461, %v3468
        %v3484 = vcombine.low %v3475, %v3482
        %v3486 = vunpack.c.l.s4 1966171168
        %v3487 = vunpack.c.0.s8 %v3486
        %v3488 = vlaneseq
        %v3489 = vshrl.u32 %v3488, 7
        %v3490 = vsub.s32 %v3487, %v3489
        %v3491 = vrot.slane %v3483, %v3490
        %v3493 = vunpack.c.l.s4 1966171168
        %v3494 = vunpack.c.0.s8 %v3493
        %v3495 = vlaneseq
        %v3496 = vshrl.u32 %v3495, 7
        %v3497 = vsub.s32 %v3494, %v3496
        %v3498 = vrot.slane %v3484, %v3497
        %v3499 = vcombine.low %v3491, %v3498
        %v3500 = vcombine.low %v3387, %v3411
        %v3501 = vcombine.low %v3425, %v3433
        %v3502 = vcombine.low %v3435, %v3418
        %v3503 = vcombine.low %v3432, %v3434
        %v3505 = vunpack.c.l.s4 1966171168
        %v3506 = vunpack.c.0.s8 %v3505
        %v3507 = vlaneseq
        %v3508 = vshrl.u32 %v3507, 7
        %v3509 = vsub.s32 %v3506, %v3508
        %v3510 = vrot.slane %v3500, %v3509
        %v3512 = vunpack.c.l.s4 1966171168
        %v3513 = vunpack.c.0.s8 %v3512
        %v3514 = vlaneseq
        %v3515 = vshrl.u32 %v3514, 7
        %v3516 = vsub.s32 %v3513, %v3515
        %v3517 = vrot.slane %v3501, %v3516
        %v3519 = vunpack.c.l.s4 1966171168
        %v3520 = vunpack.c.0.s8 %v3519
        %v3521 = vlaneseq
        %v3522 = vshrl.u32 %v3521, 7
        %v3523 = vsub.s32 %v3520, %v3522
        %v3524 = vrot.slane %v3502, %v3523
        %v3526 = vunpack.c.l.s4 1966171168
        %v3527 = vunpack.c.0.s8 %v3526
        %v3528 = vlaneseq
        %v3529 = vshrl.u32 %v3528, 7
        %v3530 = vsub.s32 %v3527, %v3529
        %v3531 = vrot.slane %v3503, %v3530
        %v3532 = vcombine.low %v3510, %v3517
        %v3533 = vcombine.low %v3524, %v3531
        %v3535 = vunpack.c.l.s4 1966171168
        %v3536 = vunpack.c.0.s8 %v3535
        %v3537 = vlaneseq
        %v3538 = vshrl.u32 %v3537, 7
        %v3539 = vsub.s32 %v3536, %v3538
        %v3540 = vrot.slane %v3532, %v3539
        %v3542 = vunpack.c.l.s4 1966171168
        %v3543 = vunpack.c.0.s8 %v3542
        %v3544 = vlaneseq
        %v3545 = vshrl.u32 %v3544, 7
        %v3546 = vsub.s32 %v3543, %v3545
        %v3547 = vrot.slane %v3533, %v3546
        %v3548 = vcombine.low %v3540, %v3547
        %v3549 = vcombine.low %v3436, %v3450
        %v3551 = vunpack.c.l.s4 1966171168
        %v3552 = vunpack.c.0.s8 %v3551
        %v3553 = vlaneseq
        %v3554 = vshrl.u32 %v3553, 7
        %v3555 = vsub.s32 %v3552, %v3554
        %v3556 = vrot.slane %v3549, %v3555
        %v3558 = vunpack.c.l.s4 1966171168
        %v3559 = vunpack.c.0.s8 %v3558
        %v3560 = vlaneseq
        %v3561 = vshrl.u32 %v3560, 7
        %v3562 = vsub.s32 %v3559, %v3561
        %v3563 = vrot.slane %v3556, %v3562
        %v3567 = vpack.c.bf16 %v3548, %v3499
        %v3568 = vpack.c.bf16 %v3563, %v3563
        %v3569 = vld [vmem:[%s449] sm:$0xf]
        %v3570 = vld [vmem:[%s449 + $0x4] sm:$0xf]
        %v3571 = vld [vmem:[%s449 + $0x8] sm:$0xf]
        %v3572 = vld [vmem:[%s449 + $0xc] sm:$0xf]
        %v3573 = vld [vmem:[%s449 + $0x10] sm:$0xf]
        %v3574 = vld [vmem:[%s449 + $0x14] sm:$0xf]
        %v3575 = vld [vmem:[%s449 + $0x18] sm:$0xf]
        %v3576 = vld [vmem:[%s449 + $0x1c] sm:$0xf]
        %v3577 = vlaneseq
        %v3578 = vshrl.u32 %v3577, 7
        %v3579 = vsub.s32 1, %v3578
        %v3580 = vrot.slane %v737, %v3579
        %v3589 = vunpack.c.l.b16 %v3569
        %v3590 = vunpack.c.l.b16 %v3570
        %v3591 = vunpack.c.l.b16 %v3571
        %v3592 = vunpack.c.l.b16 %v3572
        %v3593 = vunpack.c.l.b16 %v3573
        %v3594 = vunpack.c.l.b16 %v3574
        %v3595 = vunpack.c.l.b16 %v3575
        %v3596 = vunpack.c.l.b16 %v3576
        %v3597 = vpack.c.b16 %v3590, %v3589
        %v3598 = vpack.c.b16 %v3592, %v3591
        %v3599 = vpack.c.b16 %v3594, %v3593
        %v3600 = vpack.c.b16 %v3596, %v3595
        %v3606 = vsel %vm797, %v3567, 0
        %v3609 = vsel %vm797, %v3568, 0
        %3611 = vmatprep.subr.bf16.mxu0 0
        %3612 = vmatpush1.bf16.msra.mxu0 %v3597
        %3613 = vmatprep.subr.bf16.mxu0 0
        %3614 = vmatpush1.bf16.msra.mxu0 %v3598
        %3615 = vmatprep.subr.bf16.mxu0 0
        %3616 = vmatpush1.bf16.msra.mxu0 %v3599
        %3617 = vmatprep.subr.bf16.mxu0 0
        %3618 = vmatpush1.bf16.msra.mxu0 %v3600
        %3619 = vmatprep.subr.bf16.mxu0 0
        %3620 = vmatpush1.bf16.msra.mxu0 0
        %3621 = vmatprep.subr.bf16.mxu0 0
        %3622 = vmatpush1.bf16.msra.mxu0 0
        %3623 = vmatprep.subr.bf16.mxu0 0
        %3624 = vmatpush1.bf16.msra.mxu0 0
        %3625 = vmatprep.subr.bf16.mxu0 0
        %3626 = vmatpush1.bf16.msra.mxu0 0
        %3627 = vmatprep.subr.bf16.mxu0 0
        %3628 = vmatpush1.bf16.msra.mxu0 0
        %3629 = vmatprep.subr.bf16.mxu0 0
        %3630 = vmatpush1.bf16.msra.mxu0 0
        %3631 = vmatprep.subr.bf16.mxu0 0
        %3632 = vmatpush1.bf16.msra.mxu0 0
        %3633 = vmatprep.subr.bf16.mxu0 0
        %3634 = vmatpush1.bf16.msra.mxu0 0
        %3635 = vmatprep.subr.bf16.mxu0 0
        %3636 = vmatpush1.bf16.msra.mxu0 0
        %3637 = vmatprep.subr.bf16.mxu0 0
        %3638 = vmatpush1.bf16.msra.mxu0 0
        %3639 = vmatprep.subr.bf16.mxu0 0
        %3640 = vmatpush1.bf16.msra.mxu0 0
        %3641 = vmatprep.subr.bf16.mxu0 0
        %3642 = vmatpush1.bf16.msra.mxu0 0
        %3643 = vmatprep.mubr.bf16.mxu0 0
        %3644 = vmatmul.mubr.bf16.gmra.mrb[0].mxu0 %v3606
        %v3645 = vpop.f32.mrb[0].mxu0
        %v3646 = vadd.f32 %v3580, %v3645
        %v3647 = vpop.f32.mrb[0].mxu0
        %v3648 = vpop.f32.mrb[0].mxu0
        %v3649 = vadd.f32 %v3580, %v3648
        %v3650 = vpop.f32.mrb[0].mxu0
        %3651 = vmatprep.mubr.bf16.mxu0 0
        %3652 = vmatmul.mubr.bf16.gmra.mrb[0].mxu0 %v3609
        %v3653 = vpop.f32.mrb[0].mxu0
        %v3654 = vadd.f32 %v3580, %v3653
        %v3655 = vpop.f32.mrb[0].mxu0
        %v3656 = vpop.f32.mrb[0].mxu0
        %v3657 = vpop.f32.mrb[0].mxu0
        %3658 = vdwg.mxu0
        %v3659 = vadd.f32 %v734, %v3646
        %v3660 = vadd.f32 %v735, %v3649
        %v3661 = vadd.f32 %v736, %v3654
        %v3662 = vsel %vm797, %v3659, 0.0
        %3663 = vadd.xlane.f32.xlu0 %v3662
        %v3664 = vpop.xlane.xlu0 %3663
        %v3665 = vsel %vm797, %v3660, 0.0
        %3666 = vadd.xlane.f32.xlu0 %v3665
        %v3667 = vpop.xlane.xlu0 %3666
        %vm3668 = vcmask 517120
        %v3669 = vsel %vm3668, %v3661, 0.0
        %3670 = vadd.xlane.f32.xlu0 %v3669
        %v3671 = vpop.xlane.xlu0 %3670
        %v3672 = vrcp.pop 64.0
        %v3673 = vmul.f32 %v3664, %v3672
        %v3674 = vmul.f32 %v3667, %v3672
        %v3675 = vmul.f32 %v3671, %v3672
        %v3676 = vsub.f32 %v3659, %v3673
        %v3677 = vsub.f32 %v3660, %v3674
        %v3678 = vsub.f32 %v3661, %v3675
        %v3679 = vmul.f32 %v3676, %v3676
        %v3680 = vmul.f32 %v3677, %v3677
        %v3681 = vmul.f32 %v3678, %v3678
        %v3682 = vsel %vm797, %v3679, 0.0
        %3683 = vadd.xlane.f32.xlu0 %v3682
        %v3684 = vpop.xlane.xlu0 %3683
        %v3685 = vsel %vm797, %v3680, 0.0
        %3686 = vadd.xlane.f32.xlu0 %v3685
        %v3687 = vpop.xlane.xlu0 %3686
        %v3688 = vsel %vm3668, %v3681, 0.0
        %3689 = vadd.xlane.f32.xlu0 %v3688
        %v3690 = vpop.xlane.xlu0 %3689
        %v3691 = vmul.f32 %v3684, %v3672
        %v3692 = vmul.f32 %v3687, %v3672
        %v3693 = vmul.f32 %v3690, %v3672
        %v3694 = vadd.f32 %v3691, 1e-05
        %v3695 = vadd.f32 %v3692, 1e-05
        %v3696 = vadd.f32 %v3693, 1e-05
        %v3697 = vrsqrt.pop %v3694
        %v3698 = vrsqrt.pop %v3695
        %v3699 = vrsqrt.pop %v3696
        %v3700 = vmul.f32 %v3676, %v3697
        %v3701 = vmul.f32 %v3677, %v3698
        %v3702 = vmul.f32 %v3678, %v3699
        %v3703 = vlaneseq
        %v3704 = vshrl.u32 %v3703, 7
        %v3705 = vsub.s32 2, %v3704
        %v3706 = vrot.slane %v737, %v3705
        %v3707 = vmul.f32 %v3700, %v3706
        %v3708 = vmul.f32 %v3701, %v3706
        %v3709 = vmul.f32 %v3702, %v3706
        %v3710 = vlaneseq
        %v3711 = vshrl.u32 %v3710, 7
        %v3712 = vsub.s32 3, %v3711
        %v3713 = vrot.slane %v737, %v3712
        %v3714 = vadd.f32 %v3707, %v3713
        %v3715 = vadd.f32 %v3708, %v3713
        %v3716 = vadd.f32 %v3709, %v3713
        %v3717 = vpack.c.bf16 %v3715, %v3714
        %v3718 = vpack.c.bf16 %v3716, %v3716
        %v3719 = vld [vmem:[%s389] sm:$0xf]
        %v3720 = vld [vmem:[%s389 + $0x4] sm:$0xf]
        %v3721 = vld [vmem:[%s389 + $0x8] sm:$0xf]
        %v3722 = vld [vmem:[%s389 + $0xc] sm:$0xf]
        %v3723 = vld [vmem:[%s389 + $0x10] sm:$0xf]
        %v3724 = vld [vmem:[%s389 + $0x14] sm:$0xf]
        %v3725 = vld [vmem:[%s389 + $0x18] sm:$0xf]
        %v3726 = vld [vmem:[%s389 + $0x1c] sm:$0xf]
        %v3727 = vlaneseq
        %v3728 = vshrl.u32 %v3727, 7
        %v3729 = vsub.s32 4, %v3728
        %v3730 = vrot.slane %v737, %v3729
        %v3739 = vunpack.c.l.b16 %v3719
        %v3740 = vunpack.c.l.b16 %v3720
        %v3741 = vunpack.c.l.b16 %v3721
        %v3742 = vunpack.c.l.b16 %v3722
        %v3743 = vunpack.c.l.b16 %v3723
        %v3744 = vunpack.c.l.b16 %v3724
        %v3745 = vunpack.c.l.b16 %v3725
        %v3746 = vunpack.c.l.b16 %v3726
        %v3747 = vpack.c.b16 %v3740, %v3739
        %v3748 = vpack.c.b16 %v3742, %v3741
        %v3749 = vpack.c.b16 %v3744, %v3743
        %v3750 = vpack.c.b16 %v3746, %v3745
        %v3756 = vsel %vm797, %v3717, 0
        %v3759 = vsel %vm797, %v3718, 0
        %3761 = vmatprep.subr.bf16.mxu0 0
        %3762 = vmatpush1.bf16.msra.mxu0 %v3747
        %3763 = vmatprep.subr.bf16.mxu0 0
        %3764 = vmatpush1.bf16.msra.mxu0 %v3748
        %3765 = vmatprep.subr.bf16.mxu0 0
        %3766 = vmatpush1.bf16.msra.mxu0 %v3749
        %3767 = vmatprep.subr.bf16.mxu0 0
        %3768 = vmatpush1.bf16.msra.mxu0 %v3750
        %3769 = vmatprep.subr.bf16.mxu0 0
        %3770 = vmatpush1.bf16.msra.mxu0 0
        %3771 = vmatprep.subr.bf16.mxu0 0
        %3772 = vmatpush1.bf16.msra.mxu0 0
        %3773 = vmatprep.subr.bf16.mxu0 0
        %3774 = vmatpush1.bf16.msra.mxu0 0
        %3775 = vmatprep.subr.bf16.mxu0 0
        %3776 = vmatpush1.bf16.msra.mxu0 0
        %3777 = vmatprep.subr.bf16.mxu0 0
        %3778 = vmatpush1.bf16.msra.mxu0 0
        %3779 = vmatprep.subr.bf16.mxu0 0
        %3780 = vmatpush1.bf16.msra.mxu0 0
        %3781 = vmatprep.subr.bf16.mxu0 0
        %3782 = vmatpush1.bf16.msra.mxu0 0
        %3783 = vmatprep.subr.bf16.mxu0 0
        %3784 = vmatpush1.bf16.msra.mxu0 0
        %3785 = vmatprep.subr.bf16.mxu0 0
        %3786 = vmatpush1.bf16.msra.mxu0 0
        %3787 = vmatprep.subr.bf16.mxu0 0
        %3788 = vmatpush1.bf16.msra.mxu0 0
        %3789 = vmatprep.subr.bf16.mxu0 0
        %3790 = vmatpush1.bf16.msra.mxu0 0
        %3791 = vmatprep.subr.bf16.mxu0 0
        %3792 = vmatpush1.bf16.msra.mxu0 0
        %3793 = vmatprep.mubr.bf16.mxu0 0
        %3794 = vmatmul.mubr.bf16.gmra.mrb[0].mxu0 %v3756
        %v3795 = vpop.f32.mrb[0].mxu0
        %v3796 = vadd.f32 %v3730, %v3795
        %v3797 = vpop.f32.mrb[0].mxu0
        %v3798 = vpop.f32.mrb[0].mxu0
        %v3799 = vadd.f32 %v3730, %v3798
        %v3800 = vpop.f32.mrb[0].mxu0
        %3801 = vmatprep.mubr.bf16.mxu0 0
        %3802 = vmatmul.mubr.bf16.gmra.mrb[0].mxu0 %v3759
        %v3803 = vpop.f32.mrb[0].mxu0
        %v3804 = vadd.f32 %v3730, %v3803
        %v3805 = vpop.f32.mrb[0].mxu0
        %v3806 = vpop.f32.mrb[0].mxu0
        %v3807 = vpop.f32.mrb[0].mxu0
        %3808 = vdwg.mxu0
        %v3809 = vmax.f32 %v3796, 0.0
        %v3810 = vmax.f32 %v3799, 0.0
        %v3811 = vmax.f32 %v3804, 0.0
        %v3812 = vpack.c.bf16 %v3810, %v3809
        %v3813 = vpack.c.bf16 %v3811, %v3811
        %v3814 = vld [vmem:[%s454] sm:$0xf]
        %v3815 = vld [vmem:[%s454 + $0x4] sm:$0xf]
        %v3816 = vld [vmem:[%s454 + $0x8] sm:$0xf]
        %v3817 = vld [vmem:[%s454 + $0xc] sm:$0xf]
        %v3818 = vld [vmem:[%s454 + $0x10] sm:$0xf]
        %v3819 = vld [vmem:[%s454 + $0x14] sm:$0xf]
        %v3820 = vld [vmem:[%s454 + $0x18] sm:$0xf]
        %v3821 = vld [vmem:[%s454 + $0x1c] sm:$0xf]
        %v3822 = vld [vmem:[%s454 + $0x20] sm:$0xf]
        %v3823 = vld [vmem:[%s454 + $0x24] sm:$0xf]
        %v3824 = vld [vmem:[%s454 + $0x28] sm:$0xf]
        %v3825 = vld [vmem:[%s454 + $0x2c] sm:$0xf]
        %v3826 = vld [vmem:[%s454 + $0x30] sm:$0xf]
        %v3827 = vld [vmem:[%s454 + $0x34] sm:$0xf]
        %v3828 = vld [vmem:[%s454 + $0x38] sm:$0xf]
        %v3829 = vld [vmem:[%s454 + $0x3c] sm:$0xf]
        %v3830 = vlaneseq
        %v3831 = vshrl.u32 %v3830, 7
        %v3832 = vsub.s32 5, %v3831
        %v3833 = vrot.slane %v737, %v3832
        %v3850 = vunpack.c.l.b16 %v3814
        %v3851 = vunpack.c.l.b16 %v3815
        %v3852 = vunpack.c.l.b16 %v3816
        %v3853 = vunpack.c.l.b16 %v3817
        %v3854 = vunpack.c.l.b16 %v3818
        %v3855 = vunpack.c.l.b16 %v3819
        %v3856 = vunpack.c.l.b16 %v3820
        %v3857 = vunpack.c.l.b16 %v3821
        %v3858 = vunpack.c.l.b16 %v3822
        %v3859 = vunpack.c.l.b16 %v3823
        %v3860 = vunpack.c.l.b16 %v3824
        %v3861 = vunpack.c.l.b16 %v3825
        %v3862 = vunpack.c.l.b16 %v3826
        %v3863 = vunpack.c.l.b16 %v3827
        %v3864 = vunpack.c.l.b16 %v3828
        %v3865 = vunpack.c.l.b16 %v3829
        %v3866 = vpack.c.b16 %v3851, %v3850
        %v3867 = vpack.c.b16 %v3853, %v3852
        %v3868 = vpack.c.b16 %v3855, %v3854
        %v3869 = vpack.c.b16 %v3857, %v3856
        %v3870 = vpack.c.b16 %v3859, %v3858
        %v3871 = vpack.c.b16 %v3861, %v3860
        %v3872 = vpack.c.b16 %v3863, %v3862
        %v3873 = vpack.c.b16 %v3865, %v3864
        %3882 = vmatprep.subr.bf16.mxu0 0
        %3883 = vmatpush1.bf16.msra.mxu0 %v3866
        %3884 = vmatprep.subr.bf16.mxu0 0
        %3885 = vmatpush1.bf16.msra.mxu0 %v3867
        %3886 = vmatprep.subr.bf16.mxu0 0
        %3887 = vmatpush1.bf16.msra.mxu0 %v3868
        %3888 = vmatprep.subr.bf16.mxu0 0
        %3889 = vmatpush1.bf16.msra.mxu0 %v3869
        %3890 = vmatprep.subr.bf16.mxu0 0
        %3891 = vmatpush1.bf16.msra.mxu0 %v3870
        %3892 = vmatprep.subr.bf16.mxu0 0
        %3893 = vmatpush1.bf16.msra.mxu0 %v3871
        %3894 = vmatprep.subr.bf16.mxu0 0
        %3895 = vmatpush1.bf16.msra.mxu0 %v3872
        %3896 = vmatprep.subr.bf16.mxu0 0
        %3897 = vmatpush1.bf16.msra.mxu0 %v3873
        %3898 = vmatprep.subr.bf16.mxu0 0
        %3899 = vmatpush1.bf16.msra.mxu0 0
        %3900 = vmatprep.subr.bf16.mxu0 0
        %3901 = vmatpush1.bf16.msra.mxu0 0
        %3902 = vmatprep.subr.bf16.mxu0 0
        %3903 = vmatpush1.bf16.msra.mxu0 0
        %3904 = vmatprep.subr.bf16.mxu0 0
        %3905 = vmatpush1.bf16.msra.mxu0 0
        %3906 = vmatprep.subr.bf16.mxu0 0
        %3907 = vmatpush1.bf16.msra.mxu0 0
        %3908 = vmatprep.subr.bf16.mxu0 0
        %3909 = vmatpush1.bf16.msra.mxu0 0
        %3910 = vmatprep.subr.bf16.mxu0 0
        %3911 = vmatpush1.bf16.msra.mxu0 0
        %3912 = vmatprep.subr.bf16.mxu0 0
        %3913 = vmatpush1.bf16.msra.mxu0 0
        %3914 = vmatprep.mubr.bf16.mxu0 0
        %3915 = vmatmul.mubr.bf16.gmra.mrb[0].mxu0 %v3812
        %v3916 = vpop.f32.mrb[0].mxu0
        %v3917 = vadd.f32 %v3833, %v3916
        %v3918 = vpop.f32.mrb[0].mxu0
        %v3919 = vpop.f32.mrb[0].mxu0
        %v3920 = vadd.f32 %v3833, %v3919
        %v3921 = vpop.f32.mrb[0].mxu0
        %3922 = vmatprep.mubr.bf16.mxu0 0
        %3923 = vmatmul.mubr.bf16.gmra.mrb[0].mxu0 %v3813
        %v3924 = vpop.f32.mrb[0].mxu0
        %v3925 = vadd.f32 %v3833, %v3924
        %v3926 = vpop.f32.mrb[0].mxu0
        %v3927 = vpop.f32.mrb[0].mxu0
        %v3928 = vpop.f32.mrb[0].mxu0
        %3929 = vdwg.mxu0
        %v3930 = vadd.f32 %v3714, %v3917
        %v3931 = vadd.f32 %v3715, %v3920
        %v3932 = vadd.f32 %v3716, %v3925
        %v3933 = vsel %vm797, %v3930, 0.0
        %3934 = vadd.xlane.f32.xlu0 %v3933
        %v3935 = vpop.xlane.xlu0 %3934
        %v3936 = vsel %vm797, %v3931, 0.0
        %3937 = vadd.xlane.f32.xlu0 %v3936
        %v3938 = vpop.xlane.xlu0 %3937
        %v3939 = vsel %vm3668, %v3932, 0.0
        %3940 = vadd.xlane.f32.xlu0 %v3939
        %v3941 = vpop.xlane.xlu0 %3940
        %v3942 = vmul.f32 %v3935, %v3672
        %v3943 = vmul.f32 %v3938, %v3672
        %v3944 = vmul.f32 %v3941, %v3672
        %v3945 = vsub.f32 %v3930, %v3942
        %v3946 = vsub.f32 %v3931, %v3943
        %v3947 = vsub.f32 %v3932, %v3944
        %v3948 = vmul.f32 %v3945, %v3945
        %v3949 = vmul.f32 %v3946, %v3946
        %v3950 = vmul.f32 %v3947, %v3947
        %v3951 = vsel %vm797, %v3948, 0.0
        %3952 = vadd.xlane.f32.xlu0 %v3951
        %v3953 = vpop.xlane.xlu0 %3952
        %v3954 = vsel %vm797, %v3949, 0.0
        %3955 = vadd.xlane.f32.xlu0 %v3954
        %v3956 = vpop.xlane.xlu0 %3955
        %v3957 = vsel %vm3668, %v3950, 0.0
        %3958 = vadd.xlane.f32.xlu0 %v3957
        %v3959 = vpop.xlane.xlu0 %3958
        %v3960 = vmul.f32 %v3953, %v3672
        %v3961 = vmul.f32 %v3956, %v3672
        %v3962 = vmul.f32 %v3959, %v3672
        %v3963 = vadd.f32 %v3960, 1e-05
        %v3964 = vadd.f32 %v3961, 1e-05
        %v3965 = vadd.f32 %v3962, 1e-05
        %v3966 = vrsqrt.pop %v3963
        %v3967 = vrsqrt.pop %v3964
        %v3968 = vrsqrt.pop %v3965
        %v3969 = vmul.f32 %v3945, %v3966
        %v3970 = vmul.f32 %v3946, %v3967
        %v3971 = vmul.f32 %v3947, %v3968
        %v3972 = vlaneseq
        %v3973 = vshrl.u32 %v3972, 7
        %v3974 = vsub.s32 6, %v3973
        %v3975 = vrot.slane %v737, %v3974
        %v3976 = vmul.f32 %v3969, %v3975
        %v3977 = vmul.f32 %v3970, %v3975
        %v3978 = vmul.f32 %v3971, %v3975
        %v3979 = vlaneseq
        %v3980 = vshrl.u32 %v3979, 7
        %v3981 = vsub.s32 7, %v3980
        %v3982 = vrot.slane %v737, %v3981
        %v3983 = vadd.f32 %v3976, %v3982
        %v3984 = vadd.f32 %v3977, %v3982
        %v3985 = vadd.f32 %v3978, %v3982
        %3986 = vst.msk [vmem:[#allocation2] sm:$0xff] %vm797, %v3983
        %3987 = vst.msk [vmem:[#allocation2 + $0x8] sm:$0xff] %vm797, %v3984
        %3988 = vst.msk [vmem:[#allocation2 + $0x10] sm:$0x3] %vm3668, %v3985
        %p3989 = scmp.eq.s32.totalorder %s30, 1
        // Predicated region
        $region69: #{tpu_custom_call.1} parent=55 // pred_check
          %p3990 = pneg %p3989
        $region70: #{tpu_custom_call.1} parent=55 // pred_check_branch
          %3992 = sbr.rel (%p3990) target = $region72
        $region71: #{tpu_custom_call.1} parent=55 // pred_region
          %v3993 = vld [vmem:[%s8] sm:$0x3]
          %v3997 = vunpack.c.l.s4 1966171168
          %v3998 = vunpack.c.0.s8 %v3997
          %v3999 = vlaneseq
          %v4000 = vshrl.u32 %v3999, 7
          %v4001 = vsub.s32 %v3998, %v4000
          %v4002 = vrot.slane %v3983, %v4001
          %v4004 = vunpack.c.l.s4 1966171168
          %v4005 = vunpack.c.0.s8 %v4004
          %v4006 = vlaneseq
          %v4007 = vshrl.u32 %v4006, 7
          %v4008 = vsub.s32 %v4005, %v4007
          %v4009 = vrot.slane %v4002, %v4008
          %v4011 = vunpack.c.l.s4 1966171168
          %v4012 = vunpack.c.0.s8 %v4011
          %v4013 = vlaneseq
          %v4014 = vshrl.u32 %v4013, 7
          %v4015 = vsub.s32 %v4012, %v4014
          %v4016 = vrot.slane %v3984, %v4015
          %v4017 = vcombine.high %v4016, %v4016
          %v4019 = vunpack.c.l.s4 1966171168
          %v4020 = vunpack.c.0.s8 %v4019
          %v4021 = vlaneseq
          %v4022 = vshrl.u32 %v4021, 7
          %v4023 = vsub.s32 %v4020, %v4022
          %v4024 = vrot.slane %v4017, %v4023
          %v4027 = vcombine.low %v4009, %v4024
          %v4029 = vunpack.c.l.s4 1966171168
          %v4030 = vunpack.c.0.s8 %v4029
          %v4031 = vlaneseq
          %v4032 = vshrl.u32 %v4031, 7
          %v4033 = vsub.s32 %v4030, %v4032
          %v4034 = vrot.slane %v4027, %v4033
          %v4036 = vunpack.c.l.s4 1966171168
          %v4037 = vunpack.c.0.s8 %v4036
          %v4038 = vlaneseq
          %v4039 = vshrl.u32 %v4038, 7
          %v4040 = vsub.s32 %v4037, %v4039
          %v4041 = vrot.slane %v4034, %v4040
          %v4043 = vsel %vm3668, %v4041, 0.0
          %4044 = vadd.xlane.f32.xlu0 %v4043
          %v4045 = vpop.xlane.xlu0 %4044
          %v4046 = vmul.f32 %v4045, %v3672
          %v4048 = vlaneseq
          %v4049 = vshrl.u32 %v4048, 7
          %v4050 = vsub.s32 0, %v4049
          %v4051 = vrot.slane %v4046, %v4050
          %v4052 = vlaneseq
          %v4053 = vshrl.u32 %v4052, 7
          %v4054 = vsub.s32 1, %v4053
          %v4055 = vrot.slane %v4046, %v4054
          %v4058 = vsub.f32 %v4009, %v4051
          %v4059 = vsub.f32 %v4024, %v4055
          %v4060 = vmul.f32 %v4058, %v4058
          %v4061 = vmul.f32 %v4059, %v4059
          %v4064 = vcombine.low %v4060, %v4061
          %v4066 = vunpack.c.l.s4 1966171168
          %v4067 = vunpack.c.0.s8 %v4066
          %v4068 = vlaneseq
          %v4069 = vshrl.u32 %v4068, 7
          %v4070 = vsub.s32 %v4067, %v4069
          %v4071 = vrot.slane %v4064, %v4070
          %v4073 = vunpack.c.l.s4 1966171168
          %v4074 = vunpack.c.0.s8 %v4073
          %v4075 = vlaneseq
          %v4076 = vshrl.u32 %v4075, 7
          %v4077 = vsub.s32 %v4074, %v4076
          %v4078 = vrot.slane %v4071, %v4077
          %v4080 = vsel %vm3668, %v4078, 0.0
          %4081 = vadd.xlane.f32.xlu0 %v4080
          %v4082 = vpop.xlane.xlu0 %4081
          %v4083 = vmul.f32 %v4082, %v3672
          %v4084 = vadd.f32 %v4083, 1e-05
          %v4085 = vrsqrt.pop %v4084
          %v4087 = vlaneseq
          %v4088 = vshrl.u32 %v4087, 7
          %v4089 = vsub.s32 0, %v4088
          %v4090 = vrot.slane %v4085, %v4089
          %v4091 = vlaneseq
          %v4092 = vshrl.u32 %v4091, 7
          %v4093 = vsub.s32 1, %v4092
          %v4094 = vrot.slane %v4085, %v4093
          %v4097 = vmul.f32 %v4058, %v4090
          %v4098 = vmul.f32 %v4059, %v4094
          %v4099 = vlaneseq
          %v4100 = vshrl.u32 %v4099, 7
          %v4101 = vsub.s32 0, %v4100
          %v4102 = vrot.slane %v3993, %v4101
          %v4105 = vunpack.c.l.s4 1966171168
          %v4106 = vunpack.c.0.s8 %v4105
          %v4107 = vlaneseq
          %v4108 = vshrl.u32 %v4107, 7
          %v4109 = vsub.s32 %v4106, %v4108
          %v4110 = vrot.slane %v4102, %v4109
          %v4111 = vcombine.high %v4110, %v4110
          %v4113 = vunpack.c.l.s4 1966171168
          %v4114 = vunpack.c.0.s8 %v4113
          %v4115 = vlaneseq
          %v4116 = vshrl.u32 %v4115, 7
          %v4117 = vsub.s32 %v4114, %v4116
          %v4118 = vrot.slane %v4110, %v4117
          %v4120 = vunpack.c.l.s4 1966171168
          %v4121 = vunpack.c.0.s8 %v4120
          %v4122 = vlaneseq
          %v4123 = vshrl.u32 %v4122, 7
          %v4124 = vsub.s32 %v4121, %v4123
          %v4125 = vrot.slane %v4111, %v4124
          %v4128 = vmul.f32 %v4097, %v4118
          %v4129 = vmul.f32 %v4098, %v4125
          %v4130 = vlaneseq
          %v4131 = vshrl.u32 %v4130, 7
          %v4132 = vsub.s32 1, %v4131
          %v4133 = vrot.slane %v3993, %v4132
          %v4136 = vunpack.c.l.s4 1966171168
          %v4137 = vunpack.c.0.s8 %v4136
          %v4138 = vlaneseq
          %v4139 = vshrl.u32 %v4138, 7
          %v4140 = vsub.s32 %v4137, %v4139
          %v4141 = vrot.slane %v4133, %v4140
          %v4142 = vcombine.high %v4141, %v4141
          %v4144 = vunpack.c.l.s4 1966171168
          %v4145 = vunpack.c.0.s8 %v4144
          %v4146 = vlaneseq
          %v4147 = vshrl.u32 %v4146, 7
          %v4148 = vsub.s32 %v4145, %v4147
          %v4149 = vrot.slane %v4141, %v4148
          %v4151 = vunpack.c.l.s4 1966171168
          %v4152 = vunpack.c.0.s8 %v4151
          %v4153 = vlaneseq
          %v4154 = vshrl.u32 %v4153, 7
          %v4155 = vsub.s32 %v4152, %v4154
          %v4156 = vrot.slane %v4142, %v4155
          %v4159 = vadd.f32 %v4128, %v4149
          %v4160 = vadd.f32 %v4129, %v4156
          %v4163 = vcombine.low %v4159, %v4160
          %v4165 = vunpack.c.l.s4 1966171168
          %v4166 = vunpack.c.0.s8 %v4165
          %v4167 = vlaneseq
          %v4168 = vshrl.u32 %v4167, 7
          %v4169 = vsub.s32 %v4166, %v4168
          %v4170 = vrot.slane %v4163, %v4169
          %v4172 = vunpack.c.l.s4 1966171168
          %v4173 = vunpack.c.0.s8 %v4172
          %v4174 = vlaneseq
          %v4175 = vshrl.u32 %v4174, 7
          %v4176 = vsub.s32 %v4173, %v4175
          %v4177 = vrot.slane %v4170, %v4176
          %v4179 = vsel %vm797, %v4177, 0.0
          %4180 = vst [vmem:[#allocation8] sm:$0x3] %v4179
        $region72: #{tpu_custom_call.1} parent=55 // pred_fallthru
          _
        // Predicated region
        $region73: #{tpu_custom_call.1} parent=55 // pred_check
          %p4181 = pneg %p274
        $region74: #{tpu_custom_call.1} parent=55 // pred_check_branch
          %4183 = sbr.rel (%p4181) target = $region76
        $region75: #{tpu_custom_call.1} parent=55 // pred_region
          %s4185 = ssub.s32 32, 32
          %4186 = vsyncadd [#allocation5], %s4185
          %s4187 = smul.addr %s29, 32
          %s4188 = scalar_lea.hbm %s9, %s4187
          %s4190 = sshll.u32 [#allocation8], 4
          %s4191 = int_to_ptr.vmem [resolvable:$true] %s4190
          %4193 = dma.vmem_to_hbm [thread:$0]  %s4191, 32, %s4188, [#allocation5]
        $region76: #{tpu_custom_call.1} parent=55 // pred_fallthru
          _
        // Predicated region
        $region77: #{tpu_custom_call.1} parent=55 // pred_check
          %p4194 = pneg %p274
        $region78: #{tpu_custom_call.1} parent=55 // pred_check_branch
          %4196 = sbr.rel (%p4194) target = $region80
        $region79: #{tpu_custom_call.1} parent=55 // pred_region
          %4197 = dma.done [#allocation5], 32
        $region80: #{tpu_custom_call.1} parent=55 // pred_fallthru
          _
      $region56: #{tpu_custom_call.1} parent=5 // pred_fallthru
        _
      %p4198 = scmp.le.s32.totalorder 2, %s20
      // Predicated region
      $region81: #{tpu_custom_call.1} parent=5 // pred_check
        %p4199 = pneg %p4198
      $region82: #{tpu_custom_call.1} parent=5 // pred_check_branch
        %4201 = sbr.rel (%p4199) target = $region84
      $region83: #{tpu_custom_call.1} parent=5 // pred_region
        %s4202 = ssub.s32 %s20, 2
      $region84: #{tpu_custom_call.1} parent=5 // pred_fallthru
        _
    $region6: #{tpu_custom_call.1} parent=1 // loop_footer
      %s24 = sadd.s32 1, %s20
    $region7: #{tpu_custom_call.1} parent=1 // loop_footer_branch
      %19 = sbr.rel target = $region3
    $region8: #{tpu_custom_call.1} parent=1 // loop_exit
      _
    %4203 = vsyncpa [#allocation4], 1
    %s4204 = scalar_lea.sflag [#allocation4], 1
    %4205 = vsyncpa %s4204, 1
    %4206 = vsyncpa [#allocation7], 1
    %s4207 = scalar_lea.sflag [#allocation7], 1
    %4208 = vsyncpa %s4207, 1
    %4209 = vsyncpa [#allocation5], 1
    %s4210 = scalar_lea.sflag [#allocation5], 1
    %4211 = vsyncpa %s4210, 1

</llo_original>
